<compile_context>
chip_gen: v7x
topology: tpu7x:2x2x1
jax: 0.10.0
libtpu: 0.0.40
codegen_flags: <defaults>
</compile_context>

<pallas_src>
import math

import jax
import jax.numpy as jnp
from jax import lax
from jax.experimental import pallas as pl
from jax.experimental.pallas import tpu as pltpu

# ----- small synthetic BERT config (no pretrained checkpoint; weights are random) -----
VOCAB = 100
TYPE_VOCAB = 2
MAX_POS = 16
HIDDEN = 32          # conf.EMBEDDING_SIZE
NUM_HEADS = 4
HEAD_DIM = HIDDEN // NUM_HEADS
FFN = 4 * HIDDEN
NUM_LAYERS = 2
LN_EPS = 1e-12
ATT_SCALE = 1.0 / math.sqrt(HEAD_DIM)


# ----------------------------- in-kernel helpers -------------------------------------
def _layernorm(x, g, b, eps=LN_EPS):
    mu = jnp.mean(x, axis=-1, keepdims=True)
    var = jnp.mean(jnp.square(x - mu), axis=-1, keepdims=True)
    return (x - mu) * lax.rsqrt(var + eps) * g + b


def _gelu(x):
    # tanh-approx GELU (EUP-friendly); BERT's erf-GELU is numerically very close.
    c = math.sqrt(2.0 / math.pi)
    return 0.5 * x * (1.0 + jnp.tanh(c * (x + 0.044715 * x * x * x)))


# ----------------------------- fused whole-model kernel ------------------------------
def _bert_fused_kernel(
    x_ref, bias_ref, embln_ref,
    wqkv_ref, bqkv_ref, wo_ref, bo_ref,
    w1_ref, b1_ref, w2_ref, b2_ref, ln_ref,
    wp_ref, bp_ref, wc_ref, bc_ref,
    prob_ref, pooled_ref,
):
    """One grid step = one batch element; all encoder layers run inside this body."""
    # --- embedding LayerNorm seeds the residual stream (bf16 input, f32 math) ---
    x = x_ref[0].astype(jnp.float32)                       # (S, H)
    S = x.shape[0]
    embln = embln_ref[...]                                 # (2, H): [gamma; beta]
    h = _layernorm(x, embln[0:1, :], embln[1:2, :])

    bias = bias_ref[0]                                     # (1, S) additive mask; broadcasts to (N, S, S)

    # --- encoder layers: statically unrolled, all weights VMEM-resident across the loop ---
    for l in range(NUM_LAYERS):
        h_b16 = h.astype(jnp.bfloat16)
        hb = jnp.broadcast_to(h_b16[None, :, :], (NUM_HEADS, S, HIDDEN))      # (N, S, H)

        # fused per-head QKV projection: ONE batched bf16 matmul, f32 accumulation
        qkv = jnp.einsum("nsh,nhe->nse", hb, wqkv_ref[l],
                         preferred_element_type=jnp.float32) + bqkv_ref[l]    # (N, S, 3*Dh)
        q = qkv[:, :, :HEAD_DIM].astype(jnp.bfloat16)
        k = qkv[:, :, HEAD_DIM:2 * HEAD_DIM].astype(jnp.bfloat16)
        v = qkv[:, :, 2 * HEAD_DIM:].astype(jnp.bfloat16)

        # one batched score matmul + one softmax over ALL heads (single max/exp/sum/recip)
        s = jnp.einsum("nqd,nkd->nqk", q, k,
                       preferred_element_type=jnp.float32) * ATT_SCALE + bias  # (N, S, S)
        m = jnp.max(s, axis=-1, keepdims=True)
        p = jnp.exp(s - m)
        p = p * pl.reciprocal(jnp.sum(p, axis=-1, keepdims=True), approx=True)
        ctx3 = jnp.einsum("nqk,nkd->nqd", p.astype(jnp.bfloat16), v,
                          preferred_element_type=jnp.float32)                  # (N, S, Dh)
        ctx = jnp.concatenate([ctx3[n] for n in range(NUM_HEADS)], axis=-1)    # (S, H)

        # attention output projection + LN1
        attn = jnp.dot(ctx.astype(jnp.bfloat16), wo_ref[l],
                       preferred_element_type=jnp.float32) + bo_ref[l]
        ln = ln_ref[l]                                     # (4, H): ln1_g, ln1_b, ln2_g, ln2_b
        h1 = _layernorm(attn + h, ln[0:1, :], ln[1:2, :])

        # FFN (w1 + gelu + w2) + LN2
        ff = _gelu(jnp.dot(h1.astype(jnp.bfloat16), w1_ref[l],
                           preferred_element_type=jnp.float32) + b1_ref[l])
        ffo = jnp.dot(ff.astype(jnp.bfloat16), w2_ref[l],
                      preferred_element_type=jnp.float32) + b2_ref[l]
        h = _layernorm(ffo + h1, ln[2:3, :], ln[3:4, :])

    # --- [CLS] pooler(tanh) + dropout(identity @ eval) + Linear(H,1) + sigmoid ---
    cls = h[0:1, :]                                        # (1, H) [CLS] row
    pooled = jnp.tanh(jnp.dot(cls, wp_ref[...],
                              preferred_element_type=jnp.float32) + bp_ref[...])   # (1, H)
    # classifier logit as a VPU multiply + lane-reduce (no 1-wide MXU push)
    logit = jnp.sum(pooled * wc_ref[...], axis=-1, keepdims=True) + bc_ref[...]    # (1, 1)
    prob = 1.0 / (1.0 + jnp.exp(-logit))                   # sigmoid

    pooled_ref[0] = pooled
    prob_ref[0] = jnp.broadcast_to(prob, (1, HIDDEN))      # lane-dense store; wrapper reads lane 0


# ----------------------------- parameters (deterministic) ----------------------------
def init_params(key):
    def nrm(k, shape, scale=0.02, dtype=jnp.float32):
        return (scale * jax.random.normal(k, shape, jnp.float32)).astype(dtype)

    k = iter(jax.random.split(key, 12))
    ones_h = jnp.ones((HIDDEN,), jnp.float32)
    zeros_h = jnp.zeros((HIDDEN,), jnp.float32)
    params = {
        "word_emb": nrm(next(k), (VOCAB, HIDDEN)),
        "pos_emb": nrm(next(k), (MAX_POS, HIDDEN)),
        "type_emb": nrm(next(k), (TYPE_VOCAB, HIDDEN)),
        "emb_ln": jnp.stack([ones_h, zeros_h]),                           # (2, H) [g; b]
        # per-head fused QKV weight: head n's columns are [Wq_n | Wk_n | Wv_n] (bf16)
        "wqkv": nrm(next(k), (NUM_LAYERS, NUM_HEADS, HIDDEN, 3 * HEAD_DIM),
                    dtype=jnp.bfloat16),
        "bqkv": jnp.zeros((NUM_LAYERS, NUM_HEADS, 1, 3 * HEAD_DIM), jnp.float32),
        "wo": nrm(next(k), (NUM_LAYERS, HIDDEN, HIDDEN), dtype=jnp.bfloat16),
        "bo": jnp.zeros((NUM_LAYERS, 1, HIDDEN), jnp.float32),
        "w1": nrm(next(k), (NUM_LAYERS, HIDDEN, FFN), dtype=jnp.bfloat16),
        "b1": jnp.zeros((NUM_LAYERS, 1, FFN), jnp.float32),
        "w2": nrm(next(k), (NUM_LAYERS, FFN, HIDDEN), dtype=jnp.bfloat16),
        "b2": jnp.zeros((NUM_LAYERS, 1, HIDDEN), jnp.float32),
        "ln": jnp.tile(jnp.stack([ones_h, zeros_h, ones_h, zeros_h])[None],
                       (NUM_LAYERS, 1, 1)),                               # (L, 4, H)
        "pooler_w": nrm(next(k), (HIDDEN, HIDDEN)),
        "pooler_b": jnp.zeros((1, HIDDEN), jnp.float32),
        "cls_w": nrm(next(k), (1, HIDDEN)),                               # nn.Linear(H,1) weight as a lane row
        "cls_b": jnp.zeros((1, 1), jnp.float32),
    }
    return params


# ----------------------------- forward pass ------------------------------------------
def bert_binary_classifier_forward(params, tokens, masks=None):
    """Returns (probability_output (B,1), pooled_output (B,HIDDEN)) like the nn.Module."""
    B, S = tokens.shape
    if masks is None:
        masks = jnp.ones((B, S), jnp.int32)

    # BERT embeddings: gathers are glue; the embedding LayerNorm runs inside the kernel.
    # Passed to the kernel in bf16 (halves input DMA); LN math stays f32 in-kernel.
    emb = (params["word_emb"][tokens]
           + params["pos_emb"][:S][None, :, :]
           + params["type_emb"][0][None, None, :]).astype(jnp.bfloat16)   # (B, S, H)
    # additive attention bias per batch (broadcast over heads/queries inside the kernel)
    bias = ((1.0 - masks.astype(jnp.float32)) * -1e9).reshape(B, 1, S)    # (B, 1, S)

    H, F, L, N, D = HIDDEN, FFN, NUM_LAYERS, NUM_HEADS, HEAD_DIM
    per_batch = lambda b: (b, 0, 0)
    whole2 = lambda b: (0, 0)
    whole3 = lambda b: (0, 0, 0)
    whole4 = lambda b: (0, 0, 0, 0)

    prob3, pooled3 = pl.pallas_call(
        _bert_fused_kernel,
        out_shape=(jax.ShapeDtypeStruct((B, 1, H), jnp.float32),
                   jax.ShapeDtypeStruct((B, 1, H), jnp.float32)),
        grid=(B,),
        in_specs=[
            pl.BlockSpec((1, S, H), per_batch),          # summed embeddings (bf16)
            pl.BlockSpec((1, 1, S), per_batch),          # attention mask bias
            pl.BlockSpec((2, H), whole2),                # embedding LN [gamma; beta]
            pl.BlockSpec((L, N, H, 3 * D), whole4),      # per-head fused QKV weight (bf16), resident
            pl.BlockSpec((L, N, 1, 3 * D), whole4),      # per-head fused QKV bias
            pl.BlockSpec((L, H, H), whole3),             # attn output weight (bf16)
            pl.BlockSpec((L, 1, H), whole3),             # attn output bias
            pl.BlockSpec((L, H, F), whole3),             # FFN w1 (bf16)
            pl.BlockSpec((L, 1, F), whole3),             # FFN b1
            pl.BlockSpec((L, F, H), whole3),             # FFN w2 (bf16)
            pl.BlockSpec((L, 1, H), whole3),             # FFN b2
            pl.BlockSpec((L, 4, H), whole3),             # ln1_g, ln1_b, ln2_g, ln2_b
            pl.BlockSpec((H, H), whole2),                # pooler weight
            pl.BlockSpec((1, H), whole2),                # pooler bias
            pl.BlockSpec((1, H), whole2),                # classifier weight row
            pl.BlockSpec((1, 1), whole2),                # classifier bias
        ],
        out_specs=(pl.BlockSpec((1, 1, H), per_batch),   # probability (broadcast across lanes)
                   pl.BlockSpec((1, 1, H), per_batch)),  # pooled output
        compiler_params=pltpu.CompilerParams(
            dimension_semantics=("parallel",)),          # v7x: each TC takes half the batch
    )(emb, bias, params["emb_ln"],
      params["wqkv"], params["bqkv"], params["wo"], params["bo"],
      params["w1"], params["b1"], params["w2"], params["b2"], params["ln"],
      params["pooler_w"], params["pooler_b"], params["cls_w"], params["cls_b"])

    # TODO(synk): training-mode dropout (conf.DROPOUT) not implemented; inference = identity.
    prob = prob3[:, 0, 0:1]       # (B, 1)  — same value was broadcast across all H lanes
    pooled = pooled3[:, 0, :]     # (B, H)
    return prob, pooled


# ----------------------------- driver -------------------------------------------------
if __name__ == "__main__":
    key = jax.random.PRNGKey(0)
    pkey, tkey = jax.random.split(key)
    params = init_params(pkey)

    B, S = 2, 8
    tokens = jax.random.randint(tkey, (B, S), 0, VOCAB, dtype=jnp.int32)
    masks = jnp.ones((B, S), jnp.int32).at[1, 6:].set(0)   # pad out last 2 tokens of row 1

    fwd = jax.jit(bert_binary_classifier_forward)
    prob, pooled = fwd(params, tokens, masks)
    jax.block_until_ready((prob, pooled))

    assert prob.shape == (B, 1) and pooled.shape == (B, HIDDEN)
    assert bool(jnp.all(jnp.isfinite(prob))) and bool(jnp.all(jnp.isfinite(pooled)))
    assert bool(jnp.all((prob >= 0.0) & (prob <= 1.0)))
    print("KERNEL_OK")
</pallas_src>

<mosaic_0001>
module attributes {stable_mosaic.version = 11 : i64} {
  func.func @_bert_fused_kernel(%arg0: i32, %arg1: memref<1x8x32xbf16, #tpu.memory_space<vmem>>, %arg2: memref<1x1x8xf32, #tpu.memory_space<vmem>>, %arg3: memref<2x32xf32, #tpu.memory_space<vmem>>, %arg4: memref<2x4x32x24xbf16, #tpu.memory_space<vmem>>, %arg5: memref<2x4x1x24xf32, #tpu.memory_space<vmem>>, %arg6: memref<2x32x32xbf16, #tpu.memory_space<vmem>>, %arg7: memref<2x1x32xf32, #tpu.memory_space<vmem>>, %arg8: memref<2x32x128xbf16, #tpu.memory_space<vmem>>, %arg9: memref<2x1x128xf32, #tpu.memory_space<vmem>>, %arg10: memref<2x128x32xbf16, #tpu.memory_space<vmem>>, %arg11: memref<2x1x32xf32, #tpu.memory_space<vmem>>, %arg12: memref<2x4x32xf32, #tpu.memory_space<vmem>>, %arg13: memref<32x32xf32, #tpu.memory_space<vmem>>, %arg14: memref<1x32xf32, #tpu.memory_space<vmem>>, %arg15: memref<1x32xf32, #tpu.memory_space<vmem>>, %arg16: memref<1x1xf32, #tpu.memory_space<vmem>>, %arg17: memref<1x1x32xf32, #tpu.memory_space<vmem>>, %arg18: memref<1x1x32xf32, #tpu.memory_space<vmem>>) attributes {dimension_semantics = [#tpu.dimension_semantics<parallel>], iteration_bounds = array<i64: 2>, scalar_prefetch = 0 : i64, scratch_operands = 0 : i64, tpu.core_type = #tpu.core_type<tc>, window_params = [{transform_indices = @transform_0, window_bounds = array<i64: 1, 8, 32>}, {transform_indices = @transform_1, window_bounds = array<i64: 1, 1, 8>}, {pipeline_mode = #tpu.pipeline_mode<synchronous>, transform_indices = @transform_2, window_bounds = array<i64: 2, 32>}, {pipeline_mode = #tpu.pipeline_mode<synchronous>, transform_indices = @transform_3, window_bounds = array<i64: 2, 4, 32, 24>}, {pipeline_mode = #tpu.pipeline_mode<synchronous>, transform_indices = @transform_4, window_bounds = array<i64: 2, 4, 1, 24>}, {pipeline_mode = #tpu.pipeline_mode<synchronous>, transform_indices = @transform_5, window_bounds = array<i64: 2, 32, 32>}, {pipeline_mode = #tpu.pipeline_mode<synchronous>, transform_indices = @transform_6, window_bounds = array<i64: 2, 1, 32>}, {pipeline_mode = #tpu.pipeline_mode<synchronous>, transform_indices = @transform_7, window_bounds = array<i64: 2, 32, 128>}, {pipeline_mode = #tpu.pipeline_mode<synchronous>, transform_indices = @transform_8, window_bounds = array<i64: 2, 1, 128>}, {pipeline_mode = #tpu.pipeline_mode<synchronous>, transform_indices = @transform_9, window_bounds = array<i64: 2, 128, 32>}, {pipeline_mode = #tpu.pipeline_mode<synchronous>, transform_indices = @transform_10, window_bounds = array<i64: 2, 1, 32>}, {pipeline_mode = #tpu.pipeline_mode<synchronous>, transform_indices = @transform_11, window_bounds = array<i64: 2, 4, 32>}, {pipeline_mode = #tpu.pipeline_mode<synchronous>, transform_indices = @transform_12, window_bounds = array<i64: 32, 32>}, {pipeline_mode = #tpu.pipeline_mode<synchronous>, transform_indices = @transform_13, window_bounds = array<i64: 1, 32>}, {pipeline_mode = #tpu.pipeline_mode<synchronous>, transform_indices = @transform_14, window_bounds = array<i64: 1, 32>}, {pipeline_mode = #tpu.pipeline_mode<synchronous>, transform_indices = @transform_15, window_bounds = array<i64: 1, 1>}, {transform_indices = @transform_16, window_bounds = array<i64: 1, 1, 32>}, {transform_indices = @transform_17, window_bounds = array<i64: 1, 1, 32>}]} {
    %c0 = arith.constant 0 : index
    %c0_0 = arith.constant 0 : index
    %c0_1 = arith.constant 0 : index
    %0 = vector.load %arg1[%c0, %c0_0, %c0_1] : memref<1x8x32xbf16, #tpu.memory_space<vmem>>, vector<1x8x32xbf16>
    %1 = vector.shape_cast %0 : vector<1x8x32xbf16> to vector<8x32xbf16>
    %2 = arith.extf %1 : vector<8x32xbf16> to vector<8x32xf32>
    %c0_2 = arith.constant 0 : index
    %c0_3 = arith.constant 0 : index
    %3 = vector.load %arg3[%c0_2, %c0_3] : memref<2x32xf32, #tpu.memory_space<vmem>>, vector<2x32xf32>
    %4 = vector.extract_strided_slice %3 {offsets = [0, 0], sizes = [1, 32], strides = [1, 1]} : vector<2x32xf32> to vector<1x32xf32>
    %5 = vector.extract_strided_slice %3 {offsets = [1, 0], sizes = [1, 32], strides = [1, 1]} : vector<2x32xf32> to vector<1x32xf32>
    %cst = arith.constant dense<0.000000e+00> : vector<8xf32>
    %6 = vector.multi_reduction <add>, %2, %cst [1] : vector<8x32xf32> to vector<8xf32>
    %7 = vector.shape_cast %6 : vector<8xf32> to vector<8x1xf32>
    %cst_4 = arith.constant 3.200000e+01 : f32
    %8 = vector.broadcast %cst_4 : f32 to vector<8x1xf32>
    %9 = arith.divf %7, %8 : vector<8x1xf32>
    %10 = vector.broadcast %9 : vector<8x1xf32> to vector<8x32xf32>
    %11 = arith.subf %2, %10 : vector<8x32xf32>
    %12 = arith.mulf %11, %11 : vector<8x32xf32>
    %cst_5 = arith.constant dense<0.000000e+00> : vector<8xf32>
    %13 = vector.multi_reduction <add>, %12, %cst_5 [1] : vector<8x32xf32> to vector<8xf32>
    %14 = vector.shape_cast %13 : vector<8xf32> to vector<8x1xf32>
    %cst_6 = arith.constant 3.200000e+01 : f32
    %15 = vector.broadcast %cst_6 : f32 to vector<8x1xf32>
    %16 = arith.divf %14, %15 : vector<8x1xf32>
    %17 = vector.broadcast %9 : vector<8x1xf32> to vector<8x32xf32>
    %18 = arith.subf %2, %17 : vector<8x32xf32>
    %cst_7 = arith.constant 9.99999996E-13 : f32
    %19 = vector.broadcast %cst_7 : f32 to vector<8x1xf32>
    %20 = arith.addf %16, %19 : vector<8x1xf32>
    %21 = math.rsqrt %20 : vector<8x1xf32>
    %22 = vector.broadcast %21 : vector<8x1xf32> to vector<8x32xf32>
    %23 = arith.mulf %18, %22 : vector<8x32xf32>
    %24 = vector.broadcast %4 : vector<1x32xf32> to vector<8x32xf32>
    %25 = arith.mulf %23, %24 : vector<8x32xf32>
    %26 = vector.broadcast %5 : vector<1x32xf32> to vector<8x32xf32>
    %27 = arith.addf %25, %26 : vector<8x32xf32>
    %c0_8 = arith.constant 0 : index
    %c0_9 = arith.constant 0 : index
    %c0_10 = arith.constant 0 : index
    %28 = vector.load %arg2[%c0_8, %c0_9, %c0_10] : memref<1x1x8xf32, #tpu.memory_space<vmem>>, vector<1x1x8xf32>
    %29 = vector.shape_cast %28 : vector<1x1x8xf32> to vector<1x8xf32>
    %30 = arith.truncf %27 : vector<8x32xf32> to vector<8x32xbf16>
    %31 = vector.shape_cast %30 : vector<8x32xbf16> to vector<1x8x32xbf16>
    %32 = vector.shape_cast %31 : vector<1x8x32xbf16> to vector<1x8x32xbf16>
    %33 = vector.broadcast %32 : vector<1x8x32xbf16> to vector<4x8x32xbf16>
    %c0_11 = arith.constant 0 : index
    %c0_12 = arith.constant 0 : index
    %c0_13 = arith.constant 0 : index
    %c0_14 = arith.constant 0 : index
    %34 = vector.load %arg4[%c0_11, %c0_12, %c0_13, %c0_14] : memref<2x4x32x24xbf16, #tpu.memory_space<vmem>>, vector<1x4x32x24xbf16>
    %35 = vector.shape_cast %34 : vector<1x4x32x24xbf16> to vector<4x32x24xbf16>
    "tpu.trace_start"() <{level = 10 : i32, message = "nsh,nhe->nse"}> : () -> ()
    %cst_15 = arith.constant dense<0.000000e+00> : vector<4x8x24xf32>
    %36 = tpu.matmul %33, %35, %cst_15 {dimension_numbers = #tpu.dot_dimension_numbers<[2], [1], [1], [2], [0, 0, 0, 1, 1, 2], [0], [0]>} : vector<4x8x32xbf16>, vector<4x32x24xbf16>, vector<4x8x24xf32> -> vector<4x8x24xf32>
    "tpu.trace_stop"() : () -> ()
    %c0_16 = arith.constant 0 : index
    %c0_17 = arith.constant 0 : index
    %c0_18 = arith.constant 0 : index
    %c0_19 = arith.constant 0 : index
    %37 = vector.load %arg5[%c0_16, %c0_17, %c0_18, %c0_19] : memref<2x4x1x24xf32, #tpu.memory_space<vmem>>, vector<1x4x1x24xf32>
    %38 = vector.shape_cast %37 : vector<1x4x1x24xf32> to vector<4x1x24xf32>
    %39 = vector.broadcast %38 : vector<4x1x24xf32> to vector<4x8x24xf32>
    %40 = arith.addf %36, %39 : vector<4x8x24xf32>
    %41 = vector.extract_strided_slice %40 {offsets = [0, 0, 0], sizes = [4, 8, 8], strides = [1, 1, 1]} : vector<4x8x24xf32> to vector<4x8x8xf32>
    %42 = arith.truncf %41 : vector<4x8x8xf32> to vector<4x8x8xbf16>
    %43 = vector.extract_strided_slice %40 {offsets = [0, 0, 8], sizes = [4, 8, 8], strides = [1, 1, 1]} : vector<4x8x24xf32> to vector<4x8x8xf32>
    %44 = arith.truncf %43 : vector<4x8x8xf32> to vector<4x8x8xbf16>
    %45 = vector.extract_strided_slice %40 {offsets = [0, 0, 16], sizes = [4, 8, 8], strides = [1, 1, 1]} : vector<4x8x24xf32> to vector<4x8x8xf32>
    %46 = arith.truncf %45 : vector<4x8x8xf32> to vector<4x8x8xbf16>
    "tpu.trace_start"() <{level = 10 : i32, message = "nqd,nkd->nqk"}> : () -> ()
    %cst_20 = arith.constant dense<0.000000e+00> : vector<4x8x8xf32>
    %47 = tpu.matmul %42, %44, %cst_20 {dimension_numbers = #tpu.dot_dimension_numbers<[2], [2], [1], [1], [0, 0, 0, 1, 1, 1], [0], [0]>} : vector<4x8x8xbf16>, vector<4x8x8xbf16>, vector<4x8x8xf32> -> vector<4x8x8xf32>
    "tpu.trace_stop"() : () -> ()
    %cst_21 = arith.constant 0.353553385 : f32
    %48 = vector.broadcast %cst_21 : f32 to vector<4x8x8xf32>
    %49 = arith.mulf %47, %48 : vector<4x8x8xf32>
    %50 = vector.shape_cast %29 : vector<1x8xf32> to vector<1x1x8xf32>
    %51 = vector.broadcast %50 : vector<1x1x8xf32> to vector<4x8x8xf32>
    %52 = arith.addf %49, %51 : vector<4x8x8xf32>
    %cst_22 = arith.constant dense<0xFF800000> : vector<4x8xf32>
    %53 = vector.multi_reduction <maximumf>, %52, %cst_22 [2] : vector<4x8x8xf32> to vector<4x8xf32>
    %54 = vector.shape_cast %53 : vector<4x8xf32> to vector<4x8x1xf32>
    %55 = vector.broadcast %54 : vector<4x8x1xf32> to vector<4x8x8xf32>
    %56 = arith.subf %52, %55 : vector<4x8x8xf32>
    %57 = math.exp %56 : vector<4x8x8xf32>
    %cst_23 = arith.constant dense<0.000000e+00> : vector<4x8xf32>
    %58 = vector.multi_reduction <add>, %57, %cst_23 [2] : vector<4x8x8xf32> to vector<4x8xf32>
    %59 = vector.shape_cast %58 : vector<4x8xf32> to vector<4x8x1xf32>
    %60 = tpu.reciprocal %59 {approx = true} : vector<4x8x1xf32> -> vector<4x8x1xf32>
    %61 = vector.broadcast %60 : vector<4x8x1xf32> to vector<4x8x8xf32>
    %62 = arith.mulf %57, %61 : vector<4x8x8xf32>
    %63 = arith.truncf %62 : vector<4x8x8xf32> to vector<4x8x8xbf16>
    "tpu.trace_start"() <{level = 10 : i32, message = "nqk,nkd->nqd"}> : () -> ()
    %cst_24 = arith.constant dense<0.000000e+00> : vector<4x8x8xf32>
    %64 = tpu.matmul %63, %46, %cst_24 {dimension_numbers = #tpu.dot_dimension_numbers<[2], [1], [1], [2], [0, 0, 0, 1, 1, 2], [0], [0]>} : vector<4x8x8xbf16>, vector<4x8x8xbf16>, vector<4x8x8xf32> -> vector<4x8x8xf32>
    "tpu.trace_stop"() : () -> ()
    %65 = vector.extract_strided_slice %64 {offsets = [0, 0, 0], sizes = [1, 8, 8], strides = [1, 1, 1]} : vector<4x8x8xf32> to vector<1x8x8xf32>
    %66 = vector.shape_cast %65 : vector<1x8x8xf32> to vector<8x8xf32>
    %67 = vector.extract_strided_slice %64 {offsets = [1, 0, 0], sizes = [1, 8, 8], strides = [1, 1, 1]} : vector<4x8x8xf32> to vector<1x8x8xf32>
    %68 = vector.shape_cast %67 : vector<1x8x8xf32> to vector<8x8xf32>
    %69 = vector.extract_strided_slice %64 {offsets = [2, 0, 0], sizes = [1, 8, 8], strides = [1, 1, 1]} : vector<4x8x8xf32> to vector<1x8x8xf32>
    %70 = vector.shape_cast %69 : vector<1x8x8xf32> to vector<8x8xf32>
    %71 = vector.extract_strided_slice %64 {offsets = [3, 0, 0], sizes = [1, 8, 8], strides = [1, 1, 1]} : vector<4x8x8xf32> to vector<1x8x8xf32>
    %72 = vector.shape_cast %71 : vector<1x8x8xf32> to vector<8x8xf32>
    %73 = tpu.concatenate %66, %68, %70, %72 in 1 : vector<8x8xf32>, vector<8x8xf32>, vector<8x8xf32>, vector<8x8xf32> -> vector<8x32xf32>
    %74 = arith.truncf %73 : vector<8x32xf32> to vector<8x32xbf16>
    %c0_25 = arith.constant 0 : index
    %c0_26 = arith.constant 0 : index
    %c0_27 = arith.constant 0 : index
    %75 = vector.load %arg6[%c0_25, %c0_26, %c0_27] : memref<2x32x32xbf16, #tpu.memory_space<vmem>>, vector<1x32x32xbf16>
    %76 = vector.shape_cast %75 : vector<1x32x32xbf16> to vector<32x32xbf16>
    %cst_28 = arith.constant dense<0.000000e+00> : vector<8x32xf32>
    %77 = tpu.matmul %74, %76, %cst_28 {dimension_numbers = #tpu.dot_dimension_numbers<[1], [0], [0], [1], [0, 0, 1, 1], [], []>} : vector<8x32xbf16>, vector<32x32xbf16>, vector<8x32xf32> -> vector<8x32xf32>
    %c0_29 = arith.constant 0 : index
    %c0_30 = arith.constant 0 : index
    %c0_31 = arith.constant 0 : index
    %78 = vector.load %arg7[%c0_29, %c0_30, %c0_31] : memref<2x1x32xf32, #tpu.memory_space<vmem>>, vector<1x1x32xf32>
    %79 = vector.shape_cast %78 : vector<1x1x32xf32> to vector<1x32xf32>
    %80 = vector.broadcast %79 : vector<1x32xf32> to vector<8x32xf32>
    %81 = arith.addf %77, %80 : vector<8x32xf32>
    %c0_32 = arith.constant 0 : index
    %c0_33 = arith.constant 0 : index
    %c0_34 = arith.constant 0 : index
    %82 = vector.load %arg12[%c0_32, %c0_33, %c0_34] : memref<2x4x32xf32, #tpu.memory_space<vmem>>, vector<1x4x32xf32>
    %83 = vector.shape_cast %82 : vector<1x4x32xf32> to vector<4x32xf32>
    %84 = arith.addf %81, %27 : vector<8x32xf32>
    %85 = vector.extract_strided_slice %83 {offsets = [0, 0], sizes = [1, 32], strides = [1, 1]} : vector<4x32xf32> to vector<1x32xf32>
    %86 = vector.extract_strided_slice %83 {offsets = [1, 0], sizes = [1, 32], strides = [1, 1]} : vector<4x32xf32> to vector<1x32xf32>
    %cst_35 = arith.constant dense<0.000000e+00> : vector<8xf32>
    %87 = vector.multi_reduction <add>, %84, %cst_35 [1] : vector<8x32xf32> to vector<8xf32>
    %88 = vector.shape_cast %87 : vector<8xf32> to vector<8x1xf32>
    %cst_36 = arith.constant 3.200000e+01 : f32
    %89 = vector.broadcast %cst_36 : f32 to vector<8x1xf32>
    %90 = arith.divf %88, %89 : vector<8x1xf32>
    %91 = vector.broadcast %90 : vector<8x1xf32> to vector<8x32xf32>
    %92 = arith.subf %84, %91 : vector<8x32xf32>
    %93 = arith.mulf %92, %92 : vector<8x32xf32>
    %cst_37 = arith.constant dense<0.000000e+00> : vector<8xf32>
    %94 = vector.multi_reduction <add>, %93, %cst_37 [1] : vector<8x32xf32> to vector<8xf32>
    %95 = vector.shape_cast %94 : vector<8xf32> to vector<8x1xf32>
    %cst_38 = arith.constant 3.200000e+01 : f32
    %96 = vector.broadcast %cst_38 : f32 to vector<8x1xf32>
    %97 = arith.divf %95, %96 : vector<8x1xf32>
    %98 = vector.broadcast %90 : vector<8x1xf32> to vector<8x32xf32>
    %99 = arith.subf %84, %98 : vector<8x32xf32>
    %cst_39 = arith.constant 9.99999996E-13 : f32
    %100 = vector.broadcast %cst_39 : f32 to vector<8x1xf32>
    %101 = arith.addf %97, %100 : vector<8x1xf32>
    %102 = math.rsqrt %101 : vector<8x1xf32>
    %103 = vector.broadcast %102 : vector<8x1xf32> to vector<8x32xf32>
    %104 = arith.mulf %99, %103 : vector<8x32xf32>
    %105 = vector.broadcast %85 : vector<1x32xf32> to vector<8x32xf32>
    %106 = arith.mulf %104, %105 : vector<8x32xf32>
    %107 = vector.broadcast %86 : vector<1x32xf32> to vector<8x32xf32>
    %108 = arith.addf %106, %107 : vector<8x32xf32>
    %109 = arith.truncf %108 : vector<8x32xf32> to vector<8x32xbf16>
    %c0_40 = arith.constant 0 : index
    %c0_41 = arith.constant 0 : index
    %c0_42 = arith.constant 0 : index
    %110 = vector.load %arg8[%c0_40, %c0_41, %c0_42] : memref<2x32x128xbf16, #tpu.memory_space<vmem>>, vector<1x32x128xbf16>
    %111 = vector.shape_cast %110 : vector<1x32x128xbf16> to vector<32x128xbf16>
    %cst_43 = arith.constant dense<0.000000e+00> : vector<8x128xf32>
    %112 = tpu.matmul %109, %111, %cst_43 {dimension_numbers = #tpu.dot_dimension_numbers<[1], [0], [0], [1], [0, 0, 1, 1], [], []>} : vector<8x32xbf16>, vector<32x128xbf16>, vector<8x128xf32> -> vector<8x128xf32>
    %c0_44 = arith.constant 0 : index
    %c0_45 = arith.constant 0 : index
    %c0_46 = arith.constant 0 : index
    %113 = vector.load %arg9[%c0_44, %c0_45, %c0_46] : memref<2x1x128xf32, #tpu.memory_space<vmem>>, vector<1x1x128xf32>
    %114 = vector.shape_cast %113 : vector<1x1x128xf32> to vector<1x128xf32>
    %115 = vector.broadcast %114 : vector<1x128xf32> to vector<8x128xf32>
    %116 = arith.addf %112, %115 : vector<8x128xf32>
    %cst_47 = arith.constant 5.000000e-01 : f32
    %117 = vector.broadcast %cst_47 : f32 to vector<8x128xf32>
    %118 = arith.mulf %117, %116 : vector<8x128xf32>
    %cst_48 = arith.constant 4.471500e-02 : f32
    %119 = vector.broadcast %cst_48 : f32 to vector<8x128xf32>
    %120 = arith.mulf %119, %116 : vector<8x128xf32>
    %121 = arith.mulf %120, %116 : vector<8x128xf32>
    %122 = arith.mulf %121, %116 : vector<8x128xf32>
    %123 = arith.addf %116, %122 : vector<8x128xf32>
    %cst_49 = arith.constant 0.797884583 : f32
    %124 = vector.broadcast %cst_49 : f32 to vector<8x128xf32>
    %125 = arith.mulf %124, %123 : vector<8x128xf32>
    %126 = math.tanh %125 : vector<8x128xf32>
    %cst_50 = arith.constant 1.000000e+00 : f32
    %127 = vector.broadcast %cst_50 : f32 to vector<8x128xf32>
    %128 = arith.addf %127, %126 : vector<8x128xf32>
    %129 = arith.mulf %118, %128 : vector<8x128xf32>
    %130 = arith.truncf %129 : vector<8x128xf32> to vector<8x128xbf16>
    %c0_51 = arith.constant 0 : index
    %c0_52 = arith.constant 0 : index
    %c0_53 = arith.constant 0 : index
    %131 = vector.load %arg10[%c0_51, %c0_52, %c0_53] : memref<2x128x32xbf16, #tpu.memory_space<vmem>>, vector<1x128x32xbf16>
    %132 = vector.shape_cast %131 : vector<1x128x32xbf16> to vector<128x32xbf16>
    %cst_54 = arith.constant dense<0.000000e+00> : vector<8x32xf32>
    %133 = tpu.matmul %130, %132, %cst_54 {dimension_numbers = #tpu.dot_dimension_numbers<[1], [0], [0], [1], [0, 0, 1, 1], [], []>} : vector<8x128xbf16>, vector<128x32xbf16>, vector<8x32xf32> -> vector<8x32xf32>
    %c0_55 = arith.constant 0 : index
    %c0_56 = arith.constant 0 : index
    %c0_57 = arith.constant 0 : index
    %134 = vector.load %arg11[%c0_55, %c0_56, %c0_57] : memref<2x1x32xf32, #tpu.memory_space<vmem>>, vector<1x1x32xf32>
    %135 = vector.shape_cast %134 : vector<1x1x32xf32> to vector<1x32xf32>
    %136 = vector.broadcast %135 : vector<1x32xf32> to vector<8x32xf32>
    %137 = arith.addf %133, %136 : vector<8x32xf32>
    %138 = arith.addf %137, %108 : vector<8x32xf32>
    %139 = vector.extract_strided_slice %83 {offsets = [2, 0], sizes = [1, 32], strides = [1, 1]} : vector<4x32xf32> to vector<1x32xf32>
    %140 = vector.extract_strided_slice %83 {offsets = [3, 0], sizes = [1, 32], strides = [1, 1]} : vector<4x32xf32> to vector<1x32xf32>
    %cst_58 = arith.constant dense<0.000000e+00> : vector<8xf32>
    %141 = vector.multi_reduction <add>, %138, %cst_58 [1] : vector<8x32xf32> to vector<8xf32>
    %142 = vector.shape_cast %141 : vector<8xf32> to vector<8x1xf32>
    %cst_59 = arith.constant 3.200000e+01 : f32
    %143 = vector.broadcast %cst_59 : f32 to vector<8x1xf32>
    %144 = arith.divf %142, %143 : vector<8x1xf32>
    %145 = vector.broadcast %144 : vector<8x1xf32> to vector<8x32xf32>
    %146 = arith.subf %138, %145 : vector<8x32xf32>
    %147 = arith.mulf %146, %146 : vector<8x32xf32>
    %cst_60 = arith.constant dense<0.000000e+00> : vector<8xf32>
    %148 = vector.multi_reduction <add>, %147, %cst_60 [1] : vector<8x32xf32> to vector<8xf32>
    %149 = vector.shape_cast %148 : vector<8xf32> to vector<8x1xf32>
    %cst_61 = arith.constant 3.200000e+01 : f32
    %150 = vector.broadcast %cst_61 : f32 to vector<8x1xf32>
    %151 = arith.divf %149, %150 : vector<8x1xf32>
    %152 = vector.broadcast %144 : vector<8x1xf32> to vector<8x32xf32>
    %153 = arith.subf %138, %152 : vector<8x32xf32>
    %cst_62 = arith.constant 9.99999996E-13 : f32
    %154 = vector.broadcast %cst_62 : f32 to vector<8x1xf32>
    %155 = arith.addf %151, %154 : vector<8x1xf32>
    %156 = math.rsqrt %155 : vector<8x1xf32>
    %157 = vector.broadcast %156 : vector<8x1xf32> to vector<8x32xf32>
    %158 = arith.mulf %153, %157 : vector<8x32xf32>
    %159 = vector.broadcast %139 : vector<1x32xf32> to vector<8x32xf32>
    %160 = arith.mulf %158, %159 : vector<8x32xf32>
    %161 = vector.broadcast %140 : vector<1x32xf32> to vector<8x32xf32>
    %162 = arith.addf %160, %161 : vector<8x32xf32>
    %163 = arith.truncf %162 : vector<8x32xf32> to vector<8x32xbf16>
    %164 = vector.shape_cast %163 : vector<8x32xbf16> to vector<1x8x32xbf16>
    %165 = vector.shape_cast %164 : vector<1x8x32xbf16> to vector<1x8x32xbf16>
    %166 = vector.broadcast %165 : vector<1x8x32xbf16> to vector<4x8x32xbf16>
    %c1 = arith.constant 1 : index
    %c0_63 = arith.constant 0 : index
    %c0_64 = arith.constant 0 : index
    %c0_65 = arith.constant 0 : index
    %167 = vector.load %arg4[%c1, %c0_63, %c0_64, %c0_65] : memref<2x4x32x24xbf16, #tpu.memory_space<vmem>>, vector<1x4x32x24xbf16>
    %168 = vector.shape_cast %167 : vector<1x4x32x24xbf16> to vector<4x32x24xbf16>
    "tpu.trace_start"() <{level = 10 : i32, message = "nsh,nhe->nse"}> : () -> ()
    %cst_66 = arith.constant dense<0.000000e+00> : vector<4x8x24xf32>
    %169 = tpu.matmul %166, %168, %cst_66 {dimension_numbers = #tpu.dot_dimension_numbers<[2], [1], [1], [2], [0, 0, 0, 1, 1, 2], [0], [0]>} : vector<4x8x32xbf16>, vector<4x32x24xbf16>, vector<4x8x24xf32> -> vector<4x8x24xf32>
    "tpu.trace_stop"() : () -> ()
    %c1_67 = arith.constant 1 : index
    %c0_68 = arith.constant 0 : index
    %c0_69 = arith.constant 0 : index
    %c0_70 = arith.constant 0 : index
    %170 = vector.load %arg5[%c1_67, %c0_68, %c0_69, %c0_70] : memref<2x4x1x24xf32, #tpu.memory_space<vmem>>, vector<1x4x1x24xf32>
    %171 = vector.shape_cast %170 : vector<1x4x1x24xf32> to vector<4x1x24xf32>
    %172 = vector.broadcast %171 : vector<4x1x24xf32> to vector<4x8x24xf32>
    %173 = arith.addf %169, %172 : vector<4x8x24xf32>
    %174 = vector.extract_strided_slice %173 {offsets = [0, 0, 0], sizes = [4, 8, 8], strides = [1, 1, 1]} : vector<4x8x24xf32> to vector<4x8x8xf32>
    %175 = arith.truncf %174 : vector<4x8x8xf32> to vector<4x8x8xbf16>
    %176 = vector.extract_strided_slice %173 {offsets = [0, 0, 8], sizes = [4, 8, 8], strides = [1, 1, 1]} : vector<4x8x24xf32> to vector<4x8x8xf32>
    %177 = arith.truncf %176 : vector<4x8x8xf32> to vector<4x8x8xbf16>
    %178 = vector.extract_strided_slice %173 {offsets = [0, 0, 16], sizes = [4, 8, 8], strides = [1, 1, 1]} : vector<4x8x24xf32> to vector<4x8x8xf32>
    %179 = arith.truncf %178 : vector<4x8x8xf32> to vector<4x8x8xbf16>
    "tpu.trace_start"() <{level = 10 : i32, message = "nqd,nkd->nqk"}> : () -> ()
    %cst_71 = arith.constant dense<0.000000e+00> : vector<4x8x8xf32>
    %180 = tpu.matmul %175, %177, %cst_71 {dimension_numbers = #tpu.dot_dimension_numbers<[2], [2], [1], [1], [0, 0, 0, 1, 1, 1], [0], [0]>} : vector<4x8x8xbf16>, vector<4x8x8xbf16>, vector<4x8x8xf32> -> vector<4x8x8xf32>
    "tpu.trace_stop"() : () -> ()
    %cst_72 = arith.constant 0.353553385 : f32
    %181 = vector.broadcast %cst_72 : f32 to vector<4x8x8xf32>
    %182 = arith.mulf %180, %181 : vector<4x8x8xf32>
    %183 = vector.shape_cast %29 : vector<1x8xf32> to vector<1x1x8xf32>
    %184 = vector.broadcast %183 : vector<1x1x8xf32> to vector<4x8x8xf32>
    %185 = arith.addf %182, %184 : vector<4x8x8xf32>
    %cst_73 = arith.constant dense<0xFF800000> : vector<4x8xf32>
    %186 = vector.multi_reduction <maximumf>, %185, %cst_73 [2] : vector<4x8x8xf32> to vector<4x8xf32>
    %187 = vector.shape_cast %186 : vector<4x8xf32> to vector<4x8x1xf32>
    %188 = vector.broadcast %187 : vector<4x8x1xf32> to vector<4x8x8xf32>
    %189 = arith.subf %185, %188 : vector<4x8x8xf32>
    %190 = math.exp %189 : vector<4x8x8xf32>
    %cst_74 = arith.constant dense<0.000000e+00> : vector<4x8xf32>
    %191 = vector.multi_reduction <add>, %190, %cst_74 [2] : vector<4x8x8xf32> to vector<4x8xf32>
    %192 = vector.shape_cast %191 : vector<4x8xf32> to vector<4x8x1xf32>
    %193 = tpu.reciprocal %192 {approx = true} : vector<4x8x1xf32> -> vector<4x8x1xf32>
    %194 = vector.broadcast %193 : vector<4x8x1xf32> to vector<4x8x8xf32>
    %195 = arith.mulf %190, %194 : vector<4x8x8xf32>
    %196 = arith.truncf %195 : vector<4x8x8xf32> to vector<4x8x8xbf16>
    "tpu.trace_start"() <{level = 10 : i32, message = "nqk,nkd->nqd"}> : () -> ()
    %cst_75 = arith.constant dense<0.000000e+00> : vector<4x8x8xf32>
    %197 = tpu.matmul %196, %179, %cst_75 {dimension_numbers = #tpu.dot_dimension_numbers<[2], [1], [1], [2], [0, 0, 0, 1, 1, 2], [0], [0]>} : vector<4x8x8xbf16>, vector<4x8x8xbf16>, vector<4x8x8xf32> -> vector<4x8x8xf32>
    "tpu.trace_stop"() : () -> ()
    %198 = vector.extract_strided_slice %197 {offsets = [0, 0, 0], sizes = [1, 8, 8], strides = [1, 1, 1]} : vector<4x8x8xf32> to vector<1x8x8xf32>
    %199 = vector.shape_cast %198 : vector<1x8x8xf32> to vector<8x8xf32>
    %200 = vector.extract_strided_slice %197 {offsets = [1, 0, 0], sizes = [1, 8, 8], strides = [1, 1, 1]} : vector<4x8x8xf32> to vector<1x8x8xf32>
    %201 = vector.shape_cast %200 : vector<1x8x8xf32> to vector<8x8xf32>
    %202 = vector.extract_strided_slice %197 {offsets = [2, 0, 0], sizes = [1, 8, 8], strides = [1, 1, 1]} : vector<4x8x8xf32> to vector<1x8x8xf32>
    %203 = vector.shape_cast %202 : vector<1x8x8xf32> to vector<8x8xf32>
    %204 = vector.extract_strided_slice %197 {offsets = [3, 0, 0], sizes = [1, 8, 8], strides = [1, 1, 1]} : vector<4x8x8xf32> to vector<1x8x8xf32>
    %205 = vector.shape_cast %204 : vector<1x8x8xf32> to vector<8x8xf32>
    %206 = tpu.concatenate %199, %201, %203, %205 in 1 : vector<8x8xf32>, vector<8x8xf32>, vector<8x8xf32>, vector<8x8xf32> -> vector<8x32xf32>
    %207 = arith.truncf %206 : vector<8x32xf32> to vector<8x32xbf16>
    %c1_76 = arith.constant 1 : index
    %c0_77 = arith.constant 0 : index
    %c0_78 = arith.constant 0 : index
    %208 = vector.load %arg6[%c1_76, %c0_77, %c0_78] : memref<2x32x32xbf16, #tpu.memory_space<vmem>>, vector<1x32x32xbf16>
    %209 = vector.shape_cast %208 : vector<1x32x32xbf16> to vector<32x32xbf16>
    %cst_79 = arith.constant dense<0.000000e+00> : vector<8x32xf32>
    %210 = tpu.matmul %207, %209, %cst_79 {dimension_numbers = #tpu.dot_dimension_numbers<[1], [0], [0], [1], [0, 0, 1, 1], [], []>} : vector<8x32xbf16>, vector<32x32xbf16>, vector<8x32xf32> -> vector<8x32xf32>
    %c1_80 = arith.constant 1 : index
    %c0_81 = arith.constant 0 : index
    %c0_82 = arith.constant 0 : index
    %211 = vector.load %arg7[%c1_80, %c0_81, %c0_82] : memref<2x1x32xf32, #tpu.memory_space<vmem>>, vector<1x1x32xf32>
    %212 = vector.shape_cast %211 : vector<1x1x32xf32> to vector<1x32xf32>
    %213 = vector.broadcast %212 : vector<1x32xf32> to vector<8x32xf32>
    %214 = arith.addf %210, %213 : vector<8x32xf32>
    %c1_83 = arith.constant 1 : index
    %c0_84 = arith.constant 0 : index
    %c0_85 = arith.constant 0 : index
    %215 = vector.load %arg12[%c1_83, %c0_84, %c0_85] : memref<2x4x32xf32, #tpu.memory_space<vmem>>, vector<1x4x32xf32>
    %216 = vector.shape_cast %215 : vector<1x4x32xf32> to vector<4x32xf32>
    %217 = arith.addf %214, %162 : vector<8x32xf32>
    %218 = vector.extract_strided_slice %216 {offsets = [0, 0], sizes = [1, 32], strides = [1, 1]} : vector<4x32xf32> to vector<1x32xf32>
    %219 = vector.extract_strided_slice %216 {offsets = [1, 0], sizes = [1, 32], strides = [1, 1]} : vector<4x32xf32> to vector<1x32xf32>
    %cst_86 = arith.constant dense<0.000000e+00> : vector<8xf32>
    %220 = vector.multi_reduction <add>, %217, %cst_86 [1] : vector<8x32xf32> to vector<8xf32>
    %221 = vector.shape_cast %220 : vector<8xf32> to vector<8x1xf32>
    %cst_87 = arith.constant 3.200000e+01 : f32
    %222 = vector.broadcast %cst_87 : f32 to vector<8x1xf32>
    %223 = arith.divf %221, %222 : vector<8x1xf32>
    %224 = vector.broadcast %223 : vector<8x1xf32> to vector<8x32xf32>
    %225 = arith.subf %217, %224 : vector<8x32xf32>
    %226 = arith.mulf %225, %225 : vector<8x32xf32>
    %cst_88 = arith.constant dense<0.000000e+00> : vector<8xf32>
    %227 = vector.multi_reduction <add>, %226, %cst_88 [1] : vector<8x32xf32> to vector<8xf32>
    %228 = vector.shape_cast %227 : vector<8xf32> to vector<8x1xf32>
    %cst_89 = arith.constant 3.200000e+01 : f32
    %229 = vector.broadcast %cst_89 : f32 to vector<8x1xf32>
    %230 = arith.divf %228, %229 : vector<8x1xf32>
    %231 = vector.broadcast %223 : vector<8x1xf32> to vector<8x32xf32>
    %232 = arith.subf %217, %231 : vector<8x32xf32>
    %cst_90 = arith.constant 9.99999996E-13 : f32
    %233 = vector.broadcast %cst_90 : f32 to vector<8x1xf32>
    %234 = arith.addf %230, %233 : vector<8x1xf32>
    %235 = math.rsqrt %234 : vector<8x1xf32>
    %236 = vector.broadcast %235 : vector<8x1xf32> to vector<8x32xf32>
    %237 = arith.mulf %232, %236 : vector<8x32xf32>
    %238 = vector.broadcast %218 : vector<1x32xf32> to vector<8x32xf32>
    %239 = arith.mulf %237, %238 : vector<8x32xf32>
    %240 = vector.broadcast %219 : vector<1x32xf32> to vector<8x32xf32>
    %241 = arith.addf %239, %240 : vector<8x32xf32>
    %242 = arith.truncf %241 : vector<8x32xf32> to vector<8x32xbf16>
    %c1_91 = arith.constant 1 : index
    %c0_92 = arith.constant 0 : index
    %c0_93 = arith.constant 0 : index
    %243 = vector.load %arg8[%c1_91, %c0_92, %c0_93] : memref<2x32x128xbf16, #tpu.memory_space<vmem>>, vector<1x32x128xbf16>
    %244 = vector.shape_cast %243 : vector<1x32x128xbf16> to vector<32x128xbf16>
    %cst_94 = arith.constant dense<0.000000e+00> : vector<8x128xf32>
    %245 = tpu.matmul %242, %244, %cst_94 {dimension_numbers = #tpu.dot_dimension_numbers<[1], [0], [0], [1], [0, 0, 1, 1], [], []>} : vector<8x32xbf16>, vector<32x128xbf16>, vector<8x128xf32> -> vector<8x128xf32>
    %c1_95 = arith.constant 1 : index
    %c0_96 = arith.constant 0 : index
    %c0_97 = arith.constant 0 : index
    %246 = vector.load %arg9[%c1_95, %c0_96, %c0_97] : memref<2x1x128xf32, #tpu.memory_space<vmem>>, vector<1x1x128xf32>
    %247 = vector.shape_cast %246 : vector<1x1x128xf32> to vector<1x128xf32>
    %248 = vector.broadcast %247 : vector<1x128xf32> to vector<8x128xf32>
    %249 = arith.addf %245, %248 : vector<8x128xf32>
    %cst_98 = arith.constant 5.000000e-01 : f32
    %250 = vector.broadcast %cst_98 : f32 to vector<8x128xf32>
    %251 = arith.mulf %250, %249 : vector<8x128xf32>
    %cst_99 = arith.constant 4.471500e-02 : f32
    %252 = vector.broadcast %cst_99 : f32 to vector<8x128xf32>
    %253 = arith.mulf %252, %249 : vector<8x128xf32>
    %254 = arith.mulf %253, %249 : vector<8x128xf32>
    %255 = arith.mulf %254, %249 : vector<8x128xf32>
    %256 = arith.addf %249, %255 : vector<8x128xf32>
    %cst_100 = arith.constant 0.797884583 : f32
    %257 = vector.broadcast %cst_100 : f32 to vector<8x128xf32>
    %258 = arith.mulf %257, %256 : vector<8x128xf32>
    %259 = math.tanh %258 : vector<8x128xf32>
    %cst_101 = arith.constant 1.000000e+00 : f32
    %260 = vector.broadcast %cst_101 : f32 to vector<8x128xf32>
    %261 = arith.addf %260, %259 : vector<8x128xf32>
    %262 = arith.mulf %251, %261 : vector<8x128xf32>
    %263 = arith.truncf %262 : vector<8x128xf32> to vector<8x128xbf16>
    %c1_102 = arith.constant 1 : index
    %c0_103 = arith.constant 0 : index
    %c0_104 = arith.constant 0 : index
    %264 = vector.load %arg10[%c1_102, %c0_103, %c0_104] : memref<2x128x32xbf16, #tpu.memory_space<vmem>>, vector<1x128x32xbf16>
    %265 = vector.shape_cast %264 : vector<1x128x32xbf16> to vector<128x32xbf16>
    %cst_105 = arith.constant dense<0.000000e+00> : vector<8x32xf32>
    %266 = tpu.matmul %263, %265, %cst_105 {dimension_numbers = #tpu.dot_dimension_numbers<[1], [0], [0], [1], [0, 0, 1, 1], [], []>} : vector<8x128xbf16>, vector<128x32xbf16>, vector<8x32xf32> -> vector<8x32xf32>
    %c1_106 = arith.constant 1 : index
    %c0_107 = arith.constant 0 : index
    %c0_108 = arith.constant 0 : index
    %267 = vector.load %arg11[%c1_106, %c0_107, %c0_108] : memref<2x1x32xf32, #tpu.memory_space<vmem>>, vector<1x1x32xf32>
    %268 = vector.shape_cast %267 : vector<1x1x32xf32> to vector<1x32xf32>
    %269 = vector.broadcast %268 : vector<1x32xf32> to vector<8x32xf32>
    %270 = arith.addf %266, %269 : vector<8x32xf32>
    %271 = arith.addf %270, %241 : vector<8x32xf32>
    %272 = vector.extract_strided_slice %216 {offsets = [2, 0], sizes = [1, 32], strides = [1, 1]} : vector<4x32xf32> to vector<1x32xf32>
    %273 = vector.extract_strided_slice %216 {offsets = [3, 0], sizes = [1, 32], strides = [1, 1]} : vector<4x32xf32> to vector<1x32xf32>
    %cst_109 = arith.constant dense<0.000000e+00> : vector<8xf32>
    %274 = vector.multi_reduction <add>, %271, %cst_109 [1] : vector<8x32xf32> to vector<8xf32>
    %275 = vector.shape_cast %274 : vector<8xf32> to vector<8x1xf32>
    %cst_110 = arith.constant 3.200000e+01 : f32
    %276 = vector.broadcast %cst_110 : f32 to vector<8x1xf32>
    %277 = arith.divf %275, %276 : vector<8x1xf32>
    %278 = vector.broadcast %277 : vector<8x1xf32> to vector<8x32xf32>
    %279 = arith.subf %271, %278 : vector<8x32xf32>
    %280 = arith.mulf %279, %279 : vector<8x32xf32>
    %cst_111 = arith.constant dense<0.000000e+00> : vector<8xf32>
    %281 = vector.multi_reduction <add>, %280, %cst_111 [1] : vector<8x32xf32> to vector<8xf32>
    %282 = vector.shape_cast %281 : vector<8xf32> to vector<8x1xf32>
    %cst_112 = arith.constant 3.200000e+01 : f32
    %283 = vector.broadcast %cst_112 : f32 to vector<8x1xf32>
    %284 = arith.divf %282, %283 : vector<8x1xf32>
    %285 = vector.broadcast %277 : vector<8x1xf32> to vector<8x32xf32>
    %286 = arith.subf %271, %285 : vector<8x32xf32>
    %cst_113 = arith.constant 9.99999996E-13 : f32
    %287 = vector.broadcast %cst_113 : f32 to vector<8x1xf32>
    %288 = arith.addf %284, %287 : vector<8x1xf32>
    %289 = math.rsqrt %288 : vector<8x1xf32>
    %290 = vector.broadcast %289 : vector<8x1xf32> to vector<8x32xf32>
    %291 = arith.mulf %286, %290 : vector<8x32xf32>
    %292 = vector.broadcast %272 : vector<1x32xf32> to vector<8x32xf32>
    %293 = arith.mulf %291, %292 : vector<8x32xf32>
    %294 = vector.broadcast %273 : vector<1x32xf32> to vector<8x32xf32>
    %295 = arith.addf %293, %294 : vector<8x32xf32>
    %296 = vector.extract_strided_slice %295 {offsets = [0, 0], sizes = [1, 32], strides = [1, 1]} : vector<8x32xf32> to vector<1x32xf32>
    %c0_114 = arith.constant 0 : index
    %c0_115 = arith.constant 0 : index
    %297 = vector.load %arg13[%c0_114, %c0_115] : memref<32x32xf32, #tpu.memory_space<vmem>>, vector<32x32xf32>
    %cst_116 = arith.constant dense<0.000000e+00> : vector<1x32xf32>
    %298 = tpu.matmul %296, %297, %cst_116 {dimension_numbers = #tpu.dot_dimension_numbers<[1], [0], [0], [1], [0, 0, 1, 1], [], []>} : vector<1x32xf32>, vector<32x32xf32>, vector<1x32xf32> -> vector<1x32xf32>
    %c0_117 = arith.constant 0 : index
    %c0_118 = arith.constant 0 : index
    %299 = vector.load %arg14[%c0_117, %c0_118] : memref<1x32xf32, #tpu.memory_space<vmem>>, vector<1x32xf32>
    %300 = arith.addf %298, %299 : vector<1x32xf32>
    %301 = math.tanh %300 : vector<1x32xf32>
    %c0_119 = arith.constant 0 : index
    %c0_120 = arith.constant 0 : index
    %302 = vector.load %arg15[%c0_119, %c0_120] : memref<1x32xf32, #tpu.memory_space<vmem>>, vector<1x32xf32>
    %303 = arith.mulf %301, %302 : vector<1x32xf32>
    %cst_121 = arith.constant dense<0.000000e+00> : vector<1xf32>
    %304 = vector.multi_reduction <add>, %303, %cst_121 [1] : vector<1x32xf32> to vector<1xf32>
    %305 = vector.shape_cast %304 : vector<1xf32> to vector<1x1xf32>
    %c0_122 = arith.constant 0 : index
    %c0_123 = arith.constant 0 : index
    %306 = vector.load %arg16[%c0_122, %c0_123] : memref<1x1xf32, #tpu.memory_space<vmem>>, vector<1x1xf32>
    %307 = arith.addf %305, %306 : vector<1x1xf32>
    %cst_124 = arith.constant 0.000000e+00 : f32
    %308 = vector.broadcast %cst_124 : f32 to vector<1x1xf32>
    %309 = arith.subf %308, %307 : vector<1x1xf32>
    %310 = math.exp %309 : vector<1x1xf32>
    %cst_125 = arith.constant 1.000000e+00 : f32
    %311 = vector.broadcast %cst_125 : f32 to vector<1x1xf32>
    %312 = arith.addf %311, %310 : vector<1x1xf32>
    %cst_126 = arith.constant 1.000000e+00 : f32
    %313 = vector.broadcast %cst_126 : f32 to vector<1x1xf32>
    %314 = arith.divf %313, %312 : vector<1x1xf32>
    %c0_127 = arith.constant 0 : index
    %c0_128 = arith.constant 0 : index
    %c0_129 = arith.constant 0 : index
    %315 = vector.load %arg18[%c0_127, %c0_128, %c0_129] : memref<1x1x32xf32, #tpu.memory_space<vmem>>, vector<1x1x32xf32>
    %316 = vector.shape_cast %315 : vector<1x1x32xf32> to vector<1x32xf32>
    %317 = vector.shape_cast %301 : vector<1x32xf32> to vector<1x1x32xf32>
    tpu.vector_store %arg18[%c0_127, %c0_128, %c0_129], %317 {strides = array<i32>} : memref<1x1x32xf32, #tpu.memory_space<vmem>>, vector<1x1x32xf32>,
    %318 = vector.shape_cast %314 : vector<1x1xf32> to vector<1x1xf32>
    %319 = vector.broadcast %318 : vector<1x1xf32> to vector<1x32xf32>
    %c0_130 = arith.constant 0 : index
    %c0_131 = arith.constant 0 : index
    %c0_132 = arith.constant 0 : index
    %320 = vector.load %arg17[%c0_130, %c0_131, %c0_132] : memref<1x1x32xf32, #tpu.memory_space<vmem>>, vector<1x1x32xf32>
    %321 = vector.shape_cast %320 : vector<1x1x32xf32> to vector<1x32xf32>
    %322 = vector.shape_cast %319 : vector<1x32xf32> to vector<1x1x32xf32>
    tpu.vector_store %arg17[%c0_130, %c0_131, %c0_132], %322 {strides = array<i32>} : memref<1x1x32xf32, #tpu.memory_space<vmem>>, vector<1x1x32xf32>,
    return
  }
  func.func @transform_0(%arg0: i32) -> (i32, i32, i32) {
    %c0_i32 = arith.constant 0 : i32
    %c0_i32_0 = arith.constant 0 : i32
    %c0_i32_1 = arith.constant 0 : i32
    return %arg0, %c0_i32, %c0_i32_0 : i32, i32, i32
  }
  func.func @transform_1(%arg0: i32) -> (i32, i32, i32) {
    %c0_i32 = arith.constant 0 : i32
    %c0_i32_0 = arith.constant 0 : i32
    %c0_i32_1 = arith.constant 0 : i32
    return %arg0, %c0_i32, %c0_i32_0 : i32, i32, i32
  }
  func.func @transform_2(%arg0: i32) -> (i32, i32) {
    %c0_i32 = arith.constant 0 : i32
    %c0_i32_0 = arith.constant 0 : i32
    %c0_i32_1 = arith.constant 0 : i32
    return %c0_i32, %c0_i32_0 : i32, i32
  }
  func.func @transform_3(%arg0: i32) -> (i32, i32, i32, i32) {
    %c0_i32 = arith.constant 0 : i32
    %c0_i32_0 = arith.constant 0 : i32
    %c0_i32_1 = arith.constant 0 : i32
    %c0_i32_2 = arith.constant 0 : i32
    %c0_i32_3 = arith.constant 0 : i32
    return %c0_i32, %c0_i32_0, %c0_i32_1, %c0_i32_2 : i32, i32, i32, i32
  }
  func.func @transform_4(%arg0: i32) -> (i32, i32, i32, i32) {
    %c0_i32 = arith.constant 0 : i32
    %c0_i32_0 = arith.constant 0 : i32
    %c0_i32_1 = arith.constant 0 : i32
    %c0_i32_2 = arith.constant 0 : i32
    %c0_i32_3 = arith.constant 0 : i32
    return %c0_i32, %c0_i32_0, %c0_i32_1, %c0_i32_2 : i32, i32, i32, i32
  }
  func.func @transform_5(%arg0: i32) -> (i32, i32, i32) {
    %c0_i32 = arith.constant 0 : i32
    %c0_i32_0 = arith.constant 0 : i32
    %c0_i32_1 = arith.constant 0 : i32
    %c0_i32_2 = arith.constant 0 : i32
    return %c0_i32, %c0_i32_0, %c0_i32_1 : i32, i32, i32
  }
  func.func @transform_6(%arg0: i32) -> (i32, i32, i32) {
    %c0_i32 = arith.constant 0 : i32
    %c0_i32_0 = arith.constant 0 : i32
    %c0_i32_1 = arith.constant 0 : i32
    %c0_i32_2 = arith.constant 0 : i32
    return %c0_i32, %c0_i32_0, %c0_i32_1 : i32, i32, i32
  }
  func.func @transform_7(%arg0: i32) -> (i32, i32, i32) {
    %c0_i32 = arith.constant 0 : i32
    %c0_i32_0 = arith.constant 0 : i32
    %c0_i32_1 = arith.constant 0 : i32
    %c0_i32_2 = arith.constant 0 : i32
    return %c0_i32, %c0_i32_0, %c0_i32_1 : i32, i32, i32
  }
  func.func @transform_8(%arg0: i32) -> (i32, i32, i32) {
    %c0_i32 = arith.constant 0 : i32
    %c0_i32_0 = arith.constant 0 : i32
    %c0_i32_1 = arith.constant 0 : i32
    %c0_i32_2 = arith.constant 0 : i32
    return %c0_i32, %c0_i32_0, %c0_i32_1 : i32, i32, i32
  }
  func.func @transform_9(%arg0: i32) -> (i32, i32, i32) {
    %c0_i32 = arith.constant 0 : i32
    %c0_i32_0 = arith.constant 0 : i32
    %c0_i32_1 = arith.constant 0 : i32
    %c0_i32_2 = arith.constant 0 : i32
    return %c0_i32, %c0_i32_0, %c0_i32_1 : i32, i32, i32
  }
  func.func @transform_10(%arg0: i32) -> (i32, i32, i32) {
    %c0_i32 = arith.constant 0 : i32
    %c0_i32_0 = arith.constant 0 : i32
    %c0_i32_1 = arith.constant 0 : i32
    %c0_i32_2 = arith.constant 0 : i32
    return %c0_i32, %c0_i32_0, %c0_i32_1 : i32, i32, i32
  }
  func.func @transform_11(%arg0: i32) -> (i32, i32, i32) {
    %c0_i32 = arith.constant 0 : i32
    %c0_i32_0 = arith.constant 0 : i32
    %c0_i32_1 = arith.constant 0 : i32
    %c0_i32_2 = arith.constant 0 : i32
    return %c0_i32, %c0_i32_0, %c0_i32_1 : i32, i32, i32
  }
  func.func @transform_12(%arg0: i32) -> (i32, i32) {
    %c0_i32 = arith.constant 0 : i32
    %c0_i32_0 = arith.constant 0 : i32
    %c0_i32_1 = arith.constant 0 : i32
    return %c0_i32, %c0_i32_0 : i32, i32
  }
  func.func @transform_13(%arg0: i32) -> (i32, i32) {
    %c0_i32 = arith.constant 0 : i32
    %c0_i32_0 = arith.constant 0 : i32
    %c0_i32_1 = arith.constant 0 : i32
    return %c0_i32, %c0_i32_0 : i32, i32
  }
  func.func @transform_14(%arg0: i32) -> (i32, i32) {
    %c0_i32 = arith.constant 0 : i32
    %c0_i32_0 = arith.constant 0 : i32
    %c0_i32_1 = arith.constant 0 : i32
    return %c0_i32, %c0_i32_0 : i32, i32
  }
  func.func @transform_15(%arg0: i32) -> (i32, i32) {
    %c0_i32 = arith.constant 0 : i32
    %c0_i32_0 = arith.constant 0 : i32
    %c0_i32_1 = arith.constant 0 : i32
    return %c0_i32, %c0_i32_0 : i32, i32
  }
  func.func @transform_16(%arg0: i32) -> (i32, i32, i32) {
    %c0_i32 = arith.constant 0 : i32
    %c0_i32_0 = arith.constant 0 : i32
    %c0_i32_1 = arith.constant 0 : i32
    return %arg0, %c0_i32, %c0_i32_0 : i32, i32, i32
  }
  func.func @transform_17(%arg0: i32) -> (i32, i32, i32) {
    %c0_i32 = arith.constant 0 : i32
    %c0_i32_0 = arith.constant 0 : i32
    %c0_i32_1 = arith.constant 0 : i32
    return %arg0, %c0_i32, %c0_i32_0 : i32, i32, i32
  }
}

</mosaic_0001>

<llo_original>
// kernel: bert_binary_classifier_forward.1
$region0: #{bert_binary_classifier_forward.1}
  #allocation0 [shape = 'u32[]', space=smem, size = 0x4, offset = 0x4, fixed_abs, tag = 'smem constant byte address 0x4 - core index']
  #allocation1 [shape = 'u32[144,128]{1,0:T(1,128)}', space=vmem, size = 0x12000, scoped, tag = 'internal scratch']
  #allocation2 [shape = 'f32[1,1]{1,0:T(1,128)S(1)}', space=vmem, size = 0x200, scoped, tag = 'scoped memory for bert_binary_classifier_forward.1']
  %s0 = inlined_call_operand.vmem [shape: bf16[2,8,32], index: 0, kind: input, shape index: {}]
  %s1 = inlined_call_operand.vmem [shape: f32[2,1,8], index: 1, kind: input, shape index: {}]
  %s2 = inlined_call_operand.vmem [shape: f32[2,32], index: 2, kind: input, shape index: {}]
  %s3 = inlined_call_operand.vmem [shape: bf16[2,4,32,24], index: 3, kind: input, shape index: {}]
  %s4 = inlined_call_operand.vmem [shape: f32[2,4,1,24], index: 4, kind: input, shape index: {}]
  %s5 = inlined_call_operand.vmem [shape: bf16[2,32,32], index: 5, kind: input, shape index: {}]
  %s6 = inlined_call_operand.vmem [shape: f32[2,1,32], index: 6, kind: input, shape index: {}]
  %s7 = inlined_call_operand.vmem [shape: bf16[2,32,128], index: 7, kind: input, shape index: {}]
  %s8 = inlined_call_operand.vmem [shape: f32[2,1,128], index: 8, kind: input, shape index: {}]
  %s9 = inlined_call_operand.vmem [shape: bf16[2,128,32], index: 9, kind: input, shape index: {}]
  %s10 = inlined_call_operand.vmem [shape: f32[2,1,32], index: 10, kind: input, shape index: {}]
  %s11 = inlined_call_operand.vmem [shape: f32[2,4,32], index: 11, kind: input, shape index: {}]
  %s12 = inlined_call_operand.vmem [shape: f32[32,32], index: 12, kind: input, shape index: {}]
  %s13 = inlined_call_operand.vmem [shape: f32[1,32], index: 13, kind: input, shape index: {}]
  %s14 = inlined_call_operand.vmem [shape: f32[1,32], index: 14, kind: input, shape index: {}]
  %s15 = inlined_call_operand.<no memory space> [shape: f32[1,1], index: 15, kind: input, shape index: {}]
  %s16 = inlined_call_operand.vmem [shape: f32[2,1,32], index: 16, kind: output, shape index: {0}]
  %s17 = inlined_call_operand.hbm [shape: f32[2,1,32], index: 17, kind: output, shape index: {1}]
  %18 = xla_tuple %s16, %s17
  %s19 = sld [smem:[#allocation0]]
  $region105: #{bert_binary_classifier_forward.1} parent=0
    _
  %s21 = ssub.s32 1, %s19
  %s22 = scalar_select 0, %s21, %s19
  %v23 = vstv %s15
  %24 = vst [vmem:[#allocation2] sm:$0x1] %v23
  $region1: #{bert_binary_classifier_forward.1} parent=0
    #allocation3 [shape = 'u8[1024]{0}', space=vmem, size = 0x400, scoped, tag = 'output window, operand 1']
    #allocation4 [shape = 's32[2]{0}', space=sflag, size = 0x8, scoped, tag = 'scoped memory for bert_binary_classifier_forward.1']
    %25 = vsyncpa [#allocation4], 0
    %s26 = scalar_lea.sflag [#allocation4], 1
    %27 = vsyncpa %s26, 0
    loop: start=0, step=1, limit=4
    $region2: #{bert_binary_classifier_forward.1} parent=1 // loop_pre_header
      _
    $region3: #{bert_binary_classifier_forward.1} parent=1 // loop_header
      %s29 = sphi 0, %s33
      %p30 = scmp.ge.s32.totalorder %s29, 4
      %s39 = sphi 0, %s41
      %s42 = sphi 0, %s39
      %s43 = sphi 0, %s42
      %s59 = sphi 0, %s43
      %s65 = sphi 0, %s67
      %s68 = sphi 0, %s65
      %s69 = sphi 0, %s68
      %s85 = sphi 0, %s69
      %s89 = sphi 0, %s89
      %s91 = sphi 0, %s89
      %s92 = sphi 0, %s91
      %s106 = sphi 0, %s92
      %s110 = sphi 0, %s110
      %s112 = sphi 0, %s110
      %s113 = sphi 0, %s112
      %s127 = sphi 0, %s113
      %s131 = sphi 0, %s131
      %s133 = sphi 0, %s131
      %s134 = sphi 0, %s133
      %s148 = sphi 0, %s134
      %s152 = sphi 0, %s152
      %s154 = sphi 0, %s152
      %s155 = sphi 0, %s154
      %s169 = sphi 0, %s155
      %s173 = sphi 0, %s173
      %s175 = sphi 0, %s173
      %s176 = sphi 0, %s175
      %s190 = sphi 0, %s176
      %s194 = sphi 0, %s194
      %s196 = sphi 0, %s194
      %s197 = sphi 0, %s196
      %s211 = sphi 0, %s197
      %s215 = sphi 0, %s215
      %s217 = sphi 0, %s215
      %s218 = sphi 0, %s217
      %s232 = sphi 0, %s218
      %s236 = sphi 0, %s236
      %s238 = sphi 0, %s236
      %s239 = sphi 0, %s238
      %s253 = sphi 0, %s239
      %s257 = sphi 0, %s257
      %s259 = sphi 0, %s257
      %s260 = sphi 0, %s259
      %s274 = sphi 0, %s260
      %s278 = sphi 0, %s278
      %s280 = sphi 0, %s278
      %s281 = sphi 0, %s280
      %s295 = sphi 0, %s281
      %s299 = sphi 0, %s299
      %s301 = sphi 0, %s299
      %s302 = sphi 0, %s301
      %s316 = sphi 0, %s302
      %s320 = sphi 0, %s320
      %s322 = sphi 0, %s320
      %s323 = sphi 0, %s322
      %s337 = sphi 0, %s323
      %s341 = sphi 0, %s341
      %s343 = sphi 0, %s341
      %s344 = sphi 0, %s343
      %s358 = sphi 0, %s344
      %s362 = sphi 0, %s362
      %s364 = sphi 0, %s362
      %s365 = sphi 0, %s364
      %s379 = sphi 0, %s365
      %s385 = sphi 0, %s387
      %s388 = sphi 0, %s385
      %s389 = sphi 0, %s388
      %s405 = sphi 0, %s389
      %s411 = sphi 0, %s413
      %s414 = sphi 0, %s411
      %s415 = sphi 0, %s414
      %s431 = sphi 0, %s415
    $region4: #{bert_binary_classifier_forward.1} parent=1 // loop_header_branch
      %32 = sbr.rel (%p30) target = $region8
    $region5: #{bert_binary_classifier_forward.1} parent=1 // loop_body
      %s34 = ssub.s32 %s29, 1
      %s35 = ssub.s32 %s29, 2
      %s36 = sadd.s32 %s29, 1
      %s37 = ssub.s32 %s29, %s36
      %p38 = scmp.eq.s32.totalorder %s37, 0
      %s40 = sadd.s32 %s39, 1
      %s41 = scalar_select %p38, %s39, %s40
      %p44 = pneg %p38
      %p45 = scmp.eq.s32.totalorder %s29, 1
      %p46 = por %p44, %p45
      %p47 = scmp.ne.s32.totalorder %s39, %s42
      %p48 = scmp.eq.s32.totalorder %s29, 0
      %p49 = por %p47, %p48
      %p50 = scmp.ne.s32.totalorder %s39, %s42
      %p51 = scmp.eq.s32.totalorder %s34, 1
      %p52 = por %p50, %p51
      %p53 = scmp.ne.s32.totalorder %s42, %s43
      %p54 = scmp.eq.s32.totalorder %s34, 0
      %p55 = por %p53, %p54
      %p56 = scmp.ne.s32.totalorder %s42, %s43
      %p57 = scmp.eq.s32.totalorder %s35, 1
      %p58 = por %p56, %p57
      %p60 = scmp.ne.s32.totalorder %s43, %s59
      %p61 = scmp.eq.s32.totalorder %s35, 0
      %p62 = por %p60, %p61
      %s63 = ssub.s32 %s29, %s36
      %p64 = scmp.eq.s32.totalorder %s63, 0
      %s66 = sadd.s32 %s65, 1
      %s67 = scalar_select %p64, %s65, %s66
      %p70 = pneg %p64
      %p71 = scmp.eq.s32.totalorder %s29, 1
      %p72 = por %p70, %p71
      %p73 = scmp.ne.s32.totalorder %s65, %s68
      %p74 = scmp.eq.s32.totalorder %s29, 0
      %p75 = por %p73, %p74
      %p76 = scmp.ne.s32.totalorder %s65, %s68
      %p77 = scmp.eq.s32.totalorder %s34, 1
      %p78 = por %p76, %p77
      %p79 = scmp.ne.s32.totalorder %s68, %s69
      %p80 = scmp.eq.s32.totalorder %s34, 0
      %p81 = por %p79, %p80
      %p82 = scmp.ne.s32.totalorder %s68, %s69
      %p83 = scmp.eq.s32.totalorder %s35, 1
      %p84 = por %p82, %p83
      %p86 = scmp.ne.s32.totalorder %s69, %s85
      %p87 = scmp.eq.s32.totalorder %s35, 0
      %p88 = por %p86, %p87
      %s90 = sadd.s32 %s89, 1
      %p93 = scmp.eq.s32.totalorder %s29, 1
      %p94 = scmp.ne.s32.totalorder %s89, %s91
      %p95 = scmp.eq.s32.totalorder %s29, 0
      %p96 = por %p94, %p95
      %p97 = scmp.ne.s32.totalorder %s89, %s91
      %p98 = scmp.eq.s32.totalorder %s34, 1
      %p99 = por %p97, %p98
      %p100 = scmp.ne.s32.totalorder %s91, %s92
      %p101 = scmp.eq.s32.totalorder %s34, 0
      %p102 = por %p100, %p101
      %p103 = scmp.ne.s32.totalorder %s91, %s92
      %p104 = scmp.eq.s32.totalorder %s35, 1
      %p105 = por %p103, %p104
      %p107 = scmp.ne.s32.totalorder %s92, %s106
      %p108 = scmp.eq.s32.totalorder %s35, 0
      %p109 = por %p107, %p108
      %s111 = sadd.s32 %s110, 1
      %p114 = scmp.eq.s32.totalorder %s29, 1
      %p115 = scmp.ne.s32.totalorder %s110, %s112
      %p116 = scmp.eq.s32.totalorder %s29, 0
      %p117 = por %p115, %p116
      %p118 = scmp.ne.s32.totalorder %s110, %s112
      %p119 = scmp.eq.s32.totalorder %s34, 1
      %p120 = por %p118, %p119
      %p121 = scmp.ne.s32.totalorder %s112, %s113
      %p122 = scmp.eq.s32.totalorder %s34, 0
      %p123 = por %p121, %p122
      %p124 = scmp.ne.s32.totalorder %s112, %s113
      %p125 = scmp.eq.s32.totalorder %s35, 1
      %p126 = por %p124, %p125
      %p128 = scmp.ne.s32.totalorder %s113, %s127
      %p129 = scmp.eq.s32.totalorder %s35, 0
      %p130 = por %p128, %p129
      %s132 = sadd.s32 %s131, 1
      %p135 = scmp.eq.s32.totalorder %s29, 1
      %p136 = scmp.ne.s32.totalorder %s131, %s133
      %p137 = scmp.eq.s32.totalorder %s29, 0
      %p138 = por %p136, %p137
      %p139 = scmp.ne.s32.totalorder %s131, %s133
      %p140 = scmp.eq.s32.totalorder %s34, 1
      %p141 = por %p139, %p140
      %p142 = scmp.ne.s32.totalorder %s133, %s134
      %p143 = scmp.eq.s32.totalorder %s34, 0
      %p144 = por %p142, %p143
      %p145 = scmp.ne.s32.totalorder %s133, %s134
      %p146 = scmp.eq.s32.totalorder %s35, 1
      %p147 = por %p145, %p146
      %p149 = scmp.ne.s32.totalorder %s134, %s148
      %p150 = scmp.eq.s32.totalorder %s35, 0
      %p151 = por %p149, %p150
      %s153 = sadd.s32 %s152, 1
      %p156 = scmp.eq.s32.totalorder %s29, 1
      %p157 = scmp.ne.s32.totalorder %s152, %s154
      %p158 = scmp.eq.s32.totalorder %s29, 0
      %p159 = por %p157, %p158
      %p160 = scmp.ne.s32.totalorder %s152, %s154
      %p161 = scmp.eq.s32.totalorder %s34, 1
      %p162 = por %p160, %p161
      %p163 = scmp.ne.s32.totalorder %s154, %s155
      %p164 = scmp.eq.s32.totalorder %s34, 0
      %p165 = por %p163, %p164
      %p166 = scmp.ne.s32.totalorder %s154, %s155
      %p167 = scmp.eq.s32.totalorder %s35, 1
      %p168 = por %p166, %p167
      %p170 = scmp.ne.s32.totalorder %s155, %s169
      %p171 = scmp.eq.s32.totalorder %s35, 0
      %p172 = por %p170, %p171
      %s174 = sadd.s32 %s173, 1
      %p177 = scmp.eq.s32.totalorder %s29, 1
      %p178 = scmp.ne.s32.totalorder %s173, %s175
      %p179 = scmp.eq.s32.totalorder %s29, 0
      %p180 = por %p178, %p179
      %p181 = scmp.ne.s32.totalorder %s173, %s175
      %p182 = scmp.eq.s32.totalorder %s34, 1
      %p183 = por %p181, %p182
      %p184 = scmp.ne.s32.totalorder %s175, %s176
      %p185 = scmp.eq.s32.totalorder %s34, 0
      %p186 = por %p184, %p185
      %p187 = scmp.ne.s32.totalorder %s175, %s176
      %p188 = scmp.eq.s32.totalorder %s35, 1
      %p189 = por %p187, %p188
      %p191 = scmp.ne.s32.totalorder %s176, %s190
      %p192 = scmp.eq.s32.totalorder %s35, 0
      %p193 = por %p191, %p192
      %s195 = sadd.s32 %s194, 1
      %p198 = scmp.eq.s32.totalorder %s29, 1
      %p199 = scmp.ne.s32.totalorder %s194, %s196
      %p200 = scmp.eq.s32.totalorder %s29, 0
      %p201 = por %p199, %p200
      %p202 = scmp.ne.s32.totalorder %s194, %s196
      %p203 = scmp.eq.s32.totalorder %s34, 1
      %p204 = por %p202, %p203
      %p205 = scmp.ne.s32.totalorder %s196, %s197
      %p206 = scmp.eq.s32.totalorder %s34, 0
      %p207 = por %p205, %p206
      %p208 = scmp.ne.s32.totalorder %s196, %s197
      %p209 = scmp.eq.s32.totalorder %s35, 1
      %p210 = por %p208, %p209
      %p212 = scmp.ne.s32.totalorder %s197, %s211
      %p213 = scmp.eq.s32.totalorder %s35, 0
      %p214 = por %p212, %p213
      %s216 = sadd.s32 %s215, 1
      %p219 = scmp.eq.s32.totalorder %s29, 1
      %p220 = scmp.ne.s32.totalorder %s215, %s217
      %p221 = scmp.eq.s32.totalorder %s29, 0
      %p222 = por %p220, %p221
      %p223 = scmp.ne.s32.totalorder %s215, %s217
      %p224 = scmp.eq.s32.totalorder %s34, 1
      %p225 = por %p223, %p224
      %p226 = scmp.ne.s32.totalorder %s217, %s218
      %p227 = scmp.eq.s32.totalorder %s34, 0
      %p228 = por %p226, %p227
      %p229 = scmp.ne.s32.totalorder %s217, %s218
      %p230 = scmp.eq.s32.totalorder %s35, 1
      %p231 = por %p229, %p230
      %p233 = scmp.ne.s32.totalorder %s218, %s232
      %p234 = scmp.eq.s32.totalorder %s35, 0
      %p235 = por %p233, %p234
      %s237 = sadd.s32 %s236, 1
      %p240 = scmp.eq.s32.totalorder %s29, 1
      %p241 = scmp.ne.s32.totalorder %s236, %s238
      %p242 = scmp.eq.s32.totalorder %s29, 0
      %p243 = por %p241, %p242
      %p244 = scmp.ne.s32.totalorder %s236, %s238
      %p245 = scmp.eq.s32.totalorder %s34, 1
      %p246 = por %p244, %p245
      %p247 = scmp.ne.s32.totalorder %s238, %s239
      %p248 = scmp.eq.s32.totalorder %s34, 0
      %p249 = por %p247, %p248
      %p250 = scmp.ne.s32.totalorder %s238, %s239
      %p251 = scmp.eq.s32.totalorder %s35, 1
      %p252 = por %p250, %p251
      %p254 = scmp.ne.s32.totalorder %s239, %s253
      %p255 = scmp.eq.s32.totalorder %s35, 0
      %p256 = por %p254, %p255
      %s258 = sadd.s32 %s257, 1
      %p261 = scmp.eq.s32.totalorder %s29, 1
      %p262 = scmp.ne.s32.totalorder %s257, %s259
      %p263 = scmp.eq.s32.totalorder %s29, 0
      %p264 = por %p262, %p263
      %p265 = scmp.ne.s32.totalorder %s257, %s259
      %p266 = scmp.eq.s32.totalorder %s34, 1
      %p267 = por %p265, %p266
      %p268 = scmp.ne.s32.totalorder %s259, %s260
      %p269 = scmp.eq.s32.totalorder %s34, 0
      %p270 = por %p268, %p269
      %p271 = scmp.ne.s32.totalorder %s259, %s260
      %p272 = scmp.eq.s32.totalorder %s35, 1
      %p273 = por %p271, %p272
      %p275 = scmp.ne.s32.totalorder %s260, %s274
      %p276 = scmp.eq.s32.totalorder %s35, 0
      %p277 = por %p275, %p276
      %s279 = sadd.s32 %s278, 1
      %p282 = scmp.eq.s32.totalorder %s29, 1
      %p283 = scmp.ne.s32.totalorder %s278, %s280
      %p284 = scmp.eq.s32.totalorder %s29, 0
      %p285 = por %p283, %p284
      %p286 = scmp.ne.s32.totalorder %s278, %s280
      %p287 = scmp.eq.s32.totalorder %s34, 1
      %p288 = por %p286, %p287
      %p289 = scmp.ne.s32.totalorder %s280, %s281
      %p290 = scmp.eq.s32.totalorder %s34, 0
      %p291 = por %p289, %p290
      %p292 = scmp.ne.s32.totalorder %s280, %s281
      %p293 = scmp.eq.s32.totalorder %s35, 1
      %p294 = por %p292, %p293
      %p296 = scmp.ne.s32.totalorder %s281, %s295
      %p297 = scmp.eq.s32.totalorder %s35, 0
      %p298 = por %p296, %p297
      %s300 = sadd.s32 %s299, 1
      %p303 = scmp.eq.s32.totalorder %s29, 1
      %p304 = scmp.ne.s32.totalorder %s299, %s301
      %p305 = scmp.eq.s32.totalorder %s29, 0
      %p306 = por %p304, %p305
      %p307 = scmp.ne.s32.totalorder %s299, %s301
      %p308 = scmp.eq.s32.totalorder %s34, 1
      %p309 = por %p307, %p308
      %p310 = scmp.ne.s32.totalorder %s301, %s302
      %p311 = scmp.eq.s32.totalorder %s34, 0
      %p312 = por %p310, %p311
      %p313 = scmp.ne.s32.totalorder %s301, %s302
      %p314 = scmp.eq.s32.totalorder %s35, 1
      %p315 = por %p313, %p314
      %p317 = scmp.ne.s32.totalorder %s302, %s316
      %p318 = scmp.eq.s32.totalorder %s35, 0
      %p319 = por %p317, %p318
      %s321 = sadd.s32 %s320, 1
      %p324 = scmp.eq.s32.totalorder %s29, 1
      %p325 = scmp.ne.s32.totalorder %s320, %s322
      %p326 = scmp.eq.s32.totalorder %s29, 0
      %p327 = por %p325, %p326
      %p328 = scmp.ne.s32.totalorder %s320, %s322
      %p329 = scmp.eq.s32.totalorder %s34, 1
      %p330 = por %p328, %p329
      %p331 = scmp.ne.s32.totalorder %s322, %s323
      %p332 = scmp.eq.s32.totalorder %s34, 0
      %p333 = por %p331, %p332
      %p334 = scmp.ne.s32.totalorder %s322, %s323
      %p335 = scmp.eq.s32.totalorder %s35, 1
      %p336 = por %p334, %p335
      %p338 = scmp.ne.s32.totalorder %s323, %s337
      %p339 = scmp.eq.s32.totalorder %s35, 0
      %p340 = por %p338, %p339
      %s342 = sadd.s32 %s341, 1
      %p345 = scmp.eq.s32.totalorder %s29, 1
      %p346 = scmp.ne.s32.totalorder %s341, %s343
      %p347 = scmp.eq.s32.totalorder %s29, 0
      %p348 = por %p346, %p347
      %p349 = scmp.ne.s32.totalorder %s341, %s343
      %p350 = scmp.eq.s32.totalorder %s34, 1
      %p351 = por %p349, %p350
      %p352 = scmp.ne.s32.totalorder %s343, %s344
      %p353 = scmp.eq.s32.totalorder %s34, 0
      %p354 = por %p352, %p353
      %p355 = scmp.ne.s32.totalorder %s343, %s344
      %p356 = scmp.eq.s32.totalorder %s35, 1
      %p357 = por %p355, %p356
      %p359 = scmp.ne.s32.totalorder %s344, %s358
      %p360 = scmp.eq.s32.totalorder %s35, 0
      %p361 = por %p359, %p360
      %s363 = sadd.s32 %s362, 1
      %p366 = scmp.eq.s32.totalorder %s29, 1
      %p367 = scmp.ne.s32.totalorder %s362, %s364
      %p368 = scmp.eq.s32.totalorder %s29, 0
      %p369 = por %p367, %p368
      %p370 = scmp.ne.s32.totalorder %s362, %s364
      %p371 = scmp.eq.s32.totalorder %s34, 1
      %p372 = por %p370, %p371
      %p373 = scmp.ne.s32.totalorder %s364, %s365
      %p374 = scmp.eq.s32.totalorder %s34, 0
      %p375 = por %p373, %p374
      %p376 = scmp.ne.s32.totalorder %s364, %s365
      %p377 = scmp.eq.s32.totalorder %s35, 1
      %p378 = por %p376, %p377
      %p380 = scmp.ne.s32.totalorder %s365, %s379
      %p381 = scmp.eq.s32.totalorder %s35, 0
      %p382 = por %p380, %p381
      %s383 = ssub.s32 %s29, %s36
      %p384 = scmp.eq.s32.totalorder %s383, 0
      %s386 = sadd.s32 %s385, 1
      %s387 = scalar_select %p384, %s385, %s386
      %p390 = pneg %p384
      %p391 = scmp.eq.s32.totalorder %s29, 1
      %p392 = por %p390, %p391
      %p393 = scmp.ne.s32.totalorder %s385, %s388
      %p394 = scmp.eq.s32.totalorder %s29, 0
      %p395 = por %p393, %p394
      %p396 = scmp.ne.s32.totalorder %s385, %s388
      %p397 = scmp.eq.s32.totalorder %s34, 1
      %p398 = por %p396, %p397
      %p399 = scmp.ne.s32.totalorder %s388, %s389
      %p400 = scmp.eq.s32.totalorder %s34, 0
      %p401 = por %p399, %p400
      %p402 = scmp.ne.s32.totalorder %s388, %s389
      %p403 = scmp.eq.s32.totalorder %s35, 1
      %p404 = por %p402, %p403
      %p406 = scmp.ne.s32.totalorder %s389, %s405
      %p407 = scmp.eq.s32.totalorder %s35, 0
      %p408 = por %p406, %p407
      %s409 = ssub.s32 %s29, %s36
      %p410 = scmp.eq.s32.totalorder %s409, 0
      %s412 = sadd.s32 %s411, 1
      %s413 = scalar_select %p410, %s411, %s412
      %p416 = pneg %p410
      %p417 = scmp.eq.s32.totalorder %s29, 1
      %p418 = por %p416, %p417
      %p419 = scmp.ne.s32.totalorder %s411, %s414
      %p420 = scmp.eq.s32.totalorder %s29, 0
      %p421 = por %p419, %p420
      %p422 = scmp.ne.s32.totalorder %s411, %s414
      %p423 = scmp.eq.s32.totalorder %s34, 1
      %p424 = por %p422, %p423
      %p425 = scmp.ne.s32.totalorder %s414, %s415
      %p426 = scmp.eq.s32.totalorder %s34, 0
      %p427 = por %p425, %p426
      %p428 = scmp.ne.s32.totalorder %s414, %s415
      %p429 = scmp.eq.s32.totalorder %s35, 1
      %p430 = por %p428, %p429
      %p432 = scmp.ne.s32.totalorder %s415, %s431
      %p433 = scmp.eq.s32.totalorder %s35, 0
      %p434 = por %p432, %p433
      %p435 = scmp.le.s32.totalorder 1, %s29
      %p436 = scmp.lt.s32.totalorder %s29, 3
      %p437 = pnand %p435, %p436
      %p438 = pneg %p437
      // Predicated region
      $region9: #{bert_binary_classifier_forward.1} parent=5 // pred_check
        _
      $region10: #{bert_binary_classifier_forward.1} parent=5 // pred_check_branch
        %440 = sbr.rel (%p437) target = $region12
      $region11: #{bert_binary_classifier_forward.1} parent=5 // pred_region
        %s441 = ssub.s32 %s29, 1
        // Predicated region
        $region13: #{bert_binary_classifier_forward.1} parent=11 // pred_check
          %p442 = pneg %p102
        $region14: #{bert_binary_classifier_forward.1} parent=11 // pred_check_branch
          %444 = sbr.rel (%p442) target = $region16
        $region15: #{bert_binary_classifier_forward.1} parent=11 // pred_region
          _
        $region16: #{bert_binary_classifier_forward.1} parent=11 // pred_fallthru
          _
        // Predicated region
        $region17: #{bert_binary_classifier_forward.1} parent=11 // pred_check
          %p445 = pneg %p123
        $region18: #{bert_binary_classifier_forward.1} parent=11 // pred_check_branch
          %447 = sbr.rel (%p445) target = $region20
        $region19: #{bert_binary_classifier_forward.1} parent=11 // pred_region
          _
        $region20: #{bert_binary_classifier_forward.1} parent=11 // pred_fallthru
          _
        // Predicated region
        $region21: #{bert_binary_classifier_forward.1} parent=11 // pred_check
          %p448 = pneg %p144
        $region22: #{bert_binary_classifier_forward.1} parent=11 // pred_check_branch
          %450 = sbr.rel (%p448) target = $region24
        $region23: #{bert_binary_classifier_forward.1} parent=11 // pred_region
          _
        $region24: #{bert_binary_classifier_forward.1} parent=11 // pred_fallthru
          _
        // Predicated region
        $region25: #{bert_binary_classifier_forward.1} parent=11 // pred_check
          %p451 = pneg %p165
        $region26: #{bert_binary_classifier_forward.1} parent=11 // pred_check_branch
          %453 = sbr.rel (%p451) target = $region28
        $region27: #{bert_binary_classifier_forward.1} parent=11 // pred_region
          _
        $region28: #{bert_binary_classifier_forward.1} parent=11 // pred_fallthru
          _
        // Predicated region
        $region29: #{bert_binary_classifier_forward.1} parent=11 // pred_check
          %p454 = pneg %p186
        $region30: #{bert_binary_classifier_forward.1} parent=11 // pred_check_branch
          %456 = sbr.rel (%p454) target = $region32
        $region31: #{bert_binary_classifier_forward.1} parent=11 // pred_region
          _
        $region32: #{bert_binary_classifier_forward.1} parent=11 // pred_fallthru
          _
        // Predicated region
        $region33: #{bert_binary_classifier_forward.1} parent=11 // pred_check
          %p457 = pneg %p207
        $region34: #{bert_binary_classifier_forward.1} parent=11 // pred_check_branch
          %459 = sbr.rel (%p457) target = $region36
        $region35: #{bert_binary_classifier_forward.1} parent=11 // pred_region
          _
        $region36: #{bert_binary_classifier_forward.1} parent=11 // pred_fallthru
          _
        // Predicated region
        $region37: #{bert_binary_classifier_forward.1} parent=11 // pred_check
          %p460 = pneg %p228
        $region38: #{bert_binary_classifier_forward.1} parent=11 // pred_check_branch
          %462 = sbr.rel (%p460) target = $region40
        $region39: #{bert_binary_classifier_forward.1} parent=11 // pred_region
          _
        $region40: #{bert_binary_classifier_forward.1} parent=11 // pred_fallthru
          _
        // Predicated region
        $region41: #{bert_binary_classifier_forward.1} parent=11 // pred_check
          %p463 = pneg %p249
        $region42: #{bert_binary_classifier_forward.1} parent=11 // pred_check_branch
          %465 = sbr.rel (%p463) target = $region44
        $region43: #{bert_binary_classifier_forward.1} parent=11 // pred_region
          _
        $region44: #{bert_binary_classifier_forward.1} parent=11 // pred_fallthru
          _
        // Predicated region
        $region45: #{bert_binary_classifier_forward.1} parent=11 // pred_check
          %p466 = pneg %p270
        $region46: #{bert_binary_classifier_forward.1} parent=11 // pred_check_branch
          %468 = sbr.rel (%p466) target = $region48
        $region47: #{bert_binary_classifier_forward.1} parent=11 // pred_region
          _
        $region48: #{bert_binary_classifier_forward.1} parent=11 // pred_fallthru
          _
        // Predicated region
        $region49: #{bert_binary_classifier_forward.1} parent=11 // pred_check
          %p469 = pneg %p291
        $region50: #{bert_binary_classifier_forward.1} parent=11 // pred_check_branch
          %471 = sbr.rel (%p469) target = $region52
        $region51: #{bert_binary_classifier_forward.1} parent=11 // pred_region
          _
        $region52: #{bert_binary_classifier_forward.1} parent=11 // pred_fallthru
          _
        // Predicated region
        $region53: #{bert_binary_classifier_forward.1} parent=11 // pred_check
          %p472 = pneg %p312
        $region54: #{bert_binary_classifier_forward.1} parent=11 // pred_check_branch
          %474 = sbr.rel (%p472) target = $region56
        $region55: #{bert_binary_classifier_forward.1} parent=11 // pred_region
          _
        $region56: #{bert_binary_classifier_forward.1} parent=11 // pred_fallthru
          _
        // Predicated region
        $region57: #{bert_binary_classifier_forward.1} parent=11 // pred_check
          %p475 = pneg %p333
        $region58: #{bert_binary_classifier_forward.1} parent=11 // pred_check_branch
          %477 = sbr.rel (%p475) target = $region60
        $region59: #{bert_binary_classifier_forward.1} parent=11 // pred_region
          _
        $region60: #{bert_binary_classifier_forward.1} parent=11 // pred_fallthru
          _
        // Predicated region
        $region61: #{bert_binary_classifier_forward.1} parent=11 // pred_check
          %p478 = pneg %p354
        $region62: #{bert_binary_classifier_forward.1} parent=11 // pred_check_branch
          %480 = sbr.rel (%p478) target = $region64
        $region63: #{bert_binary_classifier_forward.1} parent=11 // pred_region
          _
        $region64: #{bert_binary_classifier_forward.1} parent=11 // pred_fallthru
          _
        // Predicated region
        $region65: #{bert_binary_classifier_forward.1} parent=11 // pred_check
          %p481 = pneg %p375
        $region66: #{bert_binary_classifier_forward.1} parent=11 // pred_check_branch
          %483 = sbr.rel (%p481) target = $region68
        $region67: #{bert_binary_classifier_forward.1} parent=11 // pred_region
          _
        $region68: #{bert_binary_classifier_forward.1} parent=11 // pred_fallthru
          _
      $region12: #{bert_binary_classifier_forward.1} parent=5 // pred_fallthru
        _
      %p484 = scmp.lt.s32.totalorder %s29, 2
      // Predicated region
      $region69: #{bert_binary_classifier_forward.1} parent=5 // pred_check
        %p485 = pneg %p484
      $region70: #{bert_binary_classifier_forward.1} parent=5 // pred_check_branch
        %487 = sbr.rel (%p485) target = $region72
      $region71: #{bert_binary_classifier_forward.1} parent=5 // pred_region
        // Predicated region
        $region73: #{bert_binary_classifier_forward.1} parent=71 // pred_check
          %p488 = pneg %p49
        $region74: #{bert_binary_classifier_forward.1} parent=71 // pred_check_branch
          %490 = sbr.rel (%p488) target = $region76
        $region75: #{bert_binary_classifier_forward.1} parent=71 // pred_region
          %p491 = scmp.lt.s32.totalorder %s29, 1
          %s492 = scalar_select %p491, %s29, 1
          %s493 = smul.addr %s492, 4
          %s494 = scalar_lea.vmem %s0, %s493
        $region76: #{bert_binary_classifier_forward.1} parent=71 // pred_fallthru
          _
        // Predicated region
        $region77: #{bert_binary_classifier_forward.1} parent=71 // pred_check
          %p495 = pneg %p75
        $region78: #{bert_binary_classifier_forward.1} parent=71 // pred_check_branch
          %497 = sbr.rel (%p495) target = $region80
        $region79: #{bert_binary_classifier_forward.1} parent=71 // pred_region
          %p498 = scmp.lt.s32.totalorder %s29, 1
          %s499 = scalar_select %p498, %s29, 1
          %s500 = scalar_lea.vmem %s1, %s499
        $region80: #{bert_binary_classifier_forward.1} parent=71 // pred_fallthru
          _
      $region72: #{bert_binary_classifier_forward.1} parent=5 // pred_fallthru
        _
      %p501 = scmp.le.s32.totalorder 1, %s29
      %p502 = scmp.lt.s32.totalorder %s29, 3
      %p503 = pnand %p501, %p502
      %p504 = pneg %p503
      // Predicated region
      $region81: #{bert_binary_classifier_forward.1} parent=5 // pred_check
        _
      $region82: #{bert_binary_classifier_forward.1} parent=5 // pred_check_branch
        %506 = sbr.rel (%p503) target = $region84
      $region83: #{bert_binary_classifier_forward.1} parent=5 // pred_region
        %s507 = ssub.s32 %s29, 1
        %p508 = scmp.lt.s32.totalorder %s34, 1
        %s509 = scalar_select %p508, %s34, 1
        %s510 = smul.addr %s509, 4
        %s511 = scalar_lea.vmem %s0, %s510
        %p512 = pneg %p55
        %p513 = pneg %p52
        %p514 = scmp.lt.s32.totalorder %s34, 1
        %s515 = scalar_select %p514, %s34, 1
        %s516 = scalar_lea.vmem %s1, %s515
        %p517 = pneg %p81
        %p518 = pneg %p78
        %p519 = pneg %p102
        %p520 = pneg %p99
        %p521 = pneg %p123
        %p522 = pneg %p120
        %p523 = pneg %p144
        %p524 = pneg %p141
        %p525 = pneg %p165
        %p526 = pneg %p162
        %p527 = pneg %p186
        %p528 = pneg %p183
        %p529 = pneg %p207
        %p530 = pneg %p204
        %p531 = pneg %p228
        %p532 = pneg %p225
        %p533 = pneg %p249
        %p534 = pneg %p246
        %p535 = pneg %p270
        %p536 = pneg %p267
        %p537 = pneg %p291
        %p538 = pneg %p288
        %p539 = pneg %p312
        %p540 = pneg %p309
        %p541 = pneg %p333
        %p542 = pneg %p330
        %p543 = pneg %p354
        %p544 = pneg %p351
        %p545 = pneg %p375
        %p546 = pneg %p372
        %p547 = pneg %p401
        %p548 = pneg %p398
        %p549 = scmp.lt.s32.totalorder %s34, 1
        %s550 = scalar_select %p549, %s34, 1
        %s551 = scalar_lea.vmem %s16, %s550
        %p552 = pneg %p427
        %p553 = pneg %p424
        %s554 = sand.u32 %s414, 1
        %s555 = scalar_lea.sflag [#allocation4], %s554
        %s556 = sand.u32 %s414, 1
        %s557 = scalar_lea.vmem [#allocation3], %s556
        %p558 = scmp.lt.s32.totalorder %s34, 1
        %s559 = scalar_select %p558, %s34, 1
        %s560 = smul.addr %s559, 4
        %s561 = scalar_lea.vmem %s0, %s560
        %p562 = scmp.lt.s32.totalorder %s34, 1
        %s563 = scalar_select %p562, %s34, 1
        %s564 = scalar_lea.vmem %s1, %s563
        %p565 = scmp.lt.s32.totalorder %s34, 1
        %s566 = scalar_select %p565, %s34, 1
        %s567 = scalar_lea.vmem %s16, %s566
        %v569 = vld [vmem:[%s561] sm:$0xf]
        %v570 = vunpack.c.l.bf16 %v569
        %v571 = vld [vmem:[%s2] sm:$0x3]
        %vm572 = vcmask 261120
        %v573 = vsel %vm572, %v570, 0.0
        %574 = vadd.xlane.f32.xlu0 %v573
        %v575 = vpop.xlane.xlu0 %574
        %v576 = vrcp.pop 32.0
        %v577 = vmul.f32 %v575, %v576
        %v578 = vsub.f32 %v570, %v577
        %v579 = vmul.f32 %v578, %v578
        %v580 = vsel %vm572, %v579, 0.0
        %581 = vadd.xlane.f32.xlu0 %v580
        %v582 = vpop.xlane.xlu0 %581
        %v583 = vmul.f32 %v582, %v576
        %v584 = vadd.f32 %v583, 1e-12
        %v585 = vrsqrt.pop %v584
        %v586 = vmul.f32 %v578, %v585
        %v587 = vlaneseq
        %v588 = vshrl.u32 %v587, 7
        %v589 = vsub.s32 0, %v588
        %v590 = vrot.slane %v571, %v589
        %v591 = vmul.f32 %v586, %v590
        %v592 = vlaneseq
        %v593 = vshrl.u32 %v592, 7
        %v594 = vsub.s32 1, %v593
        %v595 = vrot.slane %v571, %v594
        %v596 = vadd.f32 %v591, %v595
        %v597 = vld [vmem:[%s564] sm:$0x1]
        %v598 = vpack.c.bf16 %v596, %v596
        %v599 = vld [vmem:[%s3] sm:$0xf]
        %v600 = vld [vmem:[%s3 + $0x4] sm:$0xf]
        %v601 = vld [vmem:[%s3 + $0x8] sm:$0xf]
        %v602 = vld [vmem:[%s3 + $0xc] sm:$0xf]
        %v603 = vld [vmem:[%s3 + $0x10] sm:$0xf]
        %v604 = vld [vmem:[%s3 + $0x14] sm:$0xf]
        %v605 = vld [vmem:[%s3 + $0x18] sm:$0xf]
        %v606 = vld [vmem:[%s3 + $0x1c] sm:$0xf]
        %v607 = vld [vmem:[%s3 + $0x20] sm:$0xf]
        %v608 = vld [vmem:[%s3 + $0x24] sm:$0xf]
        %v609 = vld [vmem:[%s3 + $0x28] sm:$0xf]
        %v610 = vld [vmem:[%s3 + $0x2c] sm:$0xf]
        %v611 = vld [vmem:[%s3 + $0x30] sm:$0xf]
        %v612 = vld [vmem:[%s3 + $0x34] sm:$0xf]
        %v613 = vld [vmem:[%s3 + $0x38] sm:$0xf]
        %v614 = vld [vmem:[%s3 + $0x3c] sm:$0xf]
        %v615 = vld [vmem:[%s4] sm:$0x1]
        %v616 = vld [vmem:[%s4 + $0x1] sm:$0x1]
        %v617 = vld [vmem:[%s4 + $0x2] sm:$0x1]
        %v618 = vld [vmem:[%s4 + $0x3] sm:$0x1]
        %v623 = vlaneseq
        %v624 = vshrl.u32 %v623, 7
        %v625 = vsub.s32 0, %v624
        %v626 = vrot.slane %v615, %v625
        %v627 = vlaneseq
        %v628 = vshrl.u32 %v627, 7
        %v629 = vsub.s32 0, %v628
        %v630 = vrot.slane %v616, %v629
        %v631 = vlaneseq
        %v632 = vshrl.u32 %v631, 7
        %v633 = vsub.s32 0, %v632
        %v634 = vrot.slane %v617, %v633
        %v635 = vlaneseq
        %v636 = vshrl.u32 %v635, 7
        %v637 = vsub.s32 0, %v636
        %v638 = vrot.slane %v618, %v637
        %v647 = vunpack.c.l.b16 %v599
        %v648 = vunpack.c.l.b16 %v600
        %v649 = vunpack.c.l.b16 %v601
        %v650 = vunpack.c.l.b16 %v602
        %v651 = vpack.c.b16 %v648, %v647
        %v652 = vpack.c.b16 %v650, %v649
        %v656 = vsel %vm572, %v598, 0
        %658 = vmatprep.subr.bf16.mxu0 0
        %659 = vmatpush1.bf16.msra.mxu0 %v651
        %660 = vmatprep.subr.bf16.mxu0 0
        %661 = vmatpush1.bf16.msra.mxu0 %v652
        %662 = vmatprep.subr.bf16.mxu0 0
        %663 = vmatpush1.bf16.msra.mxu0 0
        %664 = vmatprep.subr.bf16.mxu0 0
        %665 = vmatpush1.bf16.msra.mxu0 0
        %666 = vmatprep.subr.bf16.mxu0 0
        %667 = vmatpush1.bf16.msra.mxu0 0
        %668 = vmatprep.subr.bf16.mxu0 0
        %669 = vmatpush1.bf16.msra.mxu0 0
        %670 = vmatprep.subr.bf16.mxu0 0
        %671 = vmatpush1.bf16.msra.mxu0 0
        %672 = vmatprep.subr.bf16.mxu0 0
        %673 = vmatpush1.bf16.msra.mxu0 0
        %674 = vmatprep.subr.bf16.mxu0 0
        %675 = vmatpush1.bf16.msra.mxu0 0
        %676 = vmatprep.subr.bf16.mxu0 0
        %677 = vmatpush1.bf16.msra.mxu0 0
        %678 = vmatprep.subr.bf16.mxu0 0
        %679 = vmatpush1.bf16.msra.mxu0 0
        %680 = vmatprep.subr.bf16.mxu0 0
        %681 = vmatpush1.bf16.msra.mxu0 0
        %682 = vmatprep.subr.bf16.mxu0 0
        %683 = vmatpush1.bf16.msra.mxu0 0
        %684 = vmatprep.subr.bf16.mxu0 0
        %685 = vmatpush1.bf16.msra.mxu0 0
        %686 = vmatprep.subr.bf16.mxu0 0
        %687 = vmatpush1.bf16.msra.mxu0 0
        %688 = vmatprep.subr.bf16.mxu0 0
        %689 = vmatpush1.bf16.msra.mxu0 0
        %690 = vmatprep.mubr.bf16.mxu0 0
        %691 = vmatmul.mubr.bf16.gmra.mrb[0].mxu0 %v656
        %v692 = vpop.f32.mrb[0].mxu0
        %v693 = vadd.f32 %v626, %v692
        %v694 = vpop.f32.mrb[0].mxu0
        %v695 = vpop.f32.mrb[0].mxu0
        %v696 = vpop.f32.mrb[0].mxu0
        %697 = vdwg.mxu0
        %v702 = vunpack.c.l.b16 %v603
        %v703 = vunpack.c.l.b16 %v604
        %v704 = vunpack.c.l.b16 %v605
        %v705 = vunpack.c.l.b16 %v606
        %v706 = vpack.c.b16 %v703, %v702
        %v707 = vpack.c.b16 %v705, %v704
        %710 = vmatprep.subr.bf16.mxu0 0
        %711 = vmatpush1.bf16.msra.mxu0 %v706
        %712 = vmatprep.subr.bf16.mxu0 0
        %713 = vmatpush1.bf16.msra.mxu0 %v707
        %714 = vmatprep.subr.bf16.mxu0 0
        %715 = vmatpush1.bf16.msra.mxu0 0
        %716 = vmatprep.subr.bf16.mxu0 0
        %717 = vmatpush1.bf16.msra.mxu0 0
        %718 = vmatprep.subr.bf16.mxu0 0
        %719 = vmatpush1.bf16.msra.mxu0 0
        %720 = vmatprep.subr.bf16.mxu0 0
        %721 = vmatpush1.bf16.msra.mxu0 0
        %722 = vmatprep.subr.bf16.mxu0 0
        %723 = vmatpush1.bf16.msra.mxu0 0
        %724 = vmatprep.subr.bf16.mxu0 0
        %725 = vmatpush1.bf16.msra.mxu0 0
        %726 = vmatprep.subr.bf16.mxu0 0
        %727 = vmatpush1.bf16.msra.mxu0 0
        %728 = vmatprep.subr.bf16.mxu0 0
        %729 = vmatpush1.bf16.msra.mxu0 0
        %730 = vmatprep.subr.bf16.mxu0 0
        %731 = vmatpush1.bf16.msra.mxu0 0
        %732 = vmatprep.subr.bf16.mxu0 0
        %733 = vmatpush1.bf16.msra.mxu0 0
        %734 = vmatprep.subr.bf16.mxu0 0
        %735 = vmatpush1.bf16.msra.mxu0 0
        %736 = vmatprep.subr.bf16.mxu0 0
        %737 = vmatpush1.bf16.msra.mxu0 0
        %738 = vmatprep.subr.bf16.mxu0 0
        %739 = vmatpush1.bf16.msra.mxu0 0
        %740 = vmatprep.subr.bf16.mxu0 0
        %741 = vmatpush1.bf16.msra.mxu0 0
        %742 = vmatprep.mubr.bf16.mxu0 0
        %743 = vmatmul.mubr.bf16.gmra.mrb[0].mxu0 %v656
        %v744 = vpop.f32.mrb[0].mxu0
        %v745 = vadd.f32 %v630, %v744
        %v746 = vpop.f32.mrb[0].mxu0
        %v747 = vpop.f32.mrb[0].mxu0
        %v748 = vpop.f32.mrb[0].mxu0
        %749 = vdwg.mxu0
        %v754 = vunpack.c.l.b16 %v607
        %v755 = vunpack.c.l.b16 %v608
        %v756 = vunpack.c.l.b16 %v609
        %v757 = vunpack.c.l.b16 %v610
        %v758 = vpack.c.b16 %v755, %v754
        %v759 = vpack.c.b16 %v757, %v756
        %762 = vmatprep.subr.bf16.mxu0 0
        %763 = vmatpush1.bf16.msra.mxu0 %v758
        %764 = vmatprep.subr.bf16.mxu0 0
        %765 = vmatpush1.bf16.msra.mxu0 %v759
        %766 = vmatprep.subr.bf16.mxu0 0
        %767 = vmatpush1.bf16.msra.mxu0 0
        %768 = vmatprep.subr.bf16.mxu0 0
        %769 = vmatpush1.bf16.msra.mxu0 0
        %770 = vmatprep.subr.bf16.mxu0 0
        %771 = vmatpush1.bf16.msra.mxu0 0
        %772 = vmatprep.subr.bf16.mxu0 0
        %773 = vmatpush1.bf16.msra.mxu0 0
        %774 = vmatprep.subr.bf16.mxu0 0
        %775 = vmatpush1.bf16.msra.mxu0 0
        %776 = vmatprep.subr.bf16.mxu0 0
        %777 = vmatpush1.bf16.msra.mxu0 0
        %778 = vmatprep.subr.bf16.mxu0 0
        %779 = vmatpush1.bf16.msra.mxu0 0
        %780 = vmatprep.subr.bf16.mxu0 0
        %781 = vmatpush1.bf16.msra.mxu0 0
        %782 = vmatprep.subr.bf16.mxu0 0
        %783 = vmatpush1.bf16.msra.mxu0 0
        %784 = vmatprep.subr.bf16.mxu0 0
        %785 = vmatpush1.bf16.msra.mxu0 0
        %786 = vmatprep.subr.bf16.mxu0 0
        %787 = vmatpush1.bf16.msra.mxu0 0
        %788 = vmatprep.subr.bf16.mxu0 0
        %789 = vmatpush1.bf16.msra.mxu0 0
        %790 = vmatprep.subr.bf16.mxu0 0
        %791 = vmatpush1.bf16.msra.mxu0 0
        %792 = vmatprep.subr.bf16.mxu0 0
        %793 = vmatpush1.bf16.msra.mxu0 0
        %794 = vmatprep.mubr.bf16.mxu0 0
        %795 = vmatmul.mubr.bf16.gmra.mrb[0].mxu0 %v656
        %v796 = vpop.f32.mrb[0].mxu0
        %v797 = vadd.f32 %v634, %v796
        %v798 = vpop.f32.mrb[0].mxu0
        %v799 = vpop.f32.mrb[0].mxu0
        %v800 = vpop.f32.mrb[0].mxu0
        %801 = vdwg.mxu0
        %v806 = vunpack.c.l.b16 %v611
        %v807 = vunpack.c.l.b16 %v612
        %v808 = vunpack.c.l.b16 %v613
        %v809 = vunpack.c.l.b16 %v614
        %v810 = vpack.c.b16 %v807, %v806
        %v811 = vpack.c.b16 %v809, %v808
        %814 = vmatprep.subr.bf16.mxu0 0
        %815 = vmatpush1.bf16.msra.mxu0 %v810
        %816 = vmatprep.subr.bf16.mxu0 0
        %817 = vmatpush1.bf16.msra.mxu0 %v811
        %818 = vmatprep.subr.bf16.mxu0 0
        %819 = vmatpush1.bf16.msra.mxu0 0
        %820 = vmatprep.subr.bf16.mxu0 0
        %821 = vmatpush1.bf16.msra.mxu0 0
        %822 = vmatprep.subr.bf16.mxu0 0
        %823 = vmatpush1.bf16.msra.mxu0 0
        %824 = vmatprep.subr.bf16.mxu0 0
        %825 = vmatpush1.bf16.msra.mxu0 0
        %826 = vmatprep.subr.bf16.mxu0 0
        %827 = vmatpush1.bf16.msra.mxu0 0
        %828 = vmatprep.subr.bf16.mxu0 0
        %829 = vmatpush1.bf16.msra.mxu0 0
        %830 = vmatprep.subr.bf16.mxu0 0
        %831 = vmatpush1.bf16.msra.mxu0 0
        %832 = vmatprep.subr.bf16.mxu0 0
        %833 = vmatpush1.bf16.msra.mxu0 0
        %834 = vmatprep.subr.bf16.mxu0 0
        %835 = vmatpush1.bf16.msra.mxu0 0
        %836 = vmatprep.subr.bf16.mxu0 0
        %837 = vmatpush1.bf16.msra.mxu0 0
        %838 = vmatprep.subr.bf16.mxu0 0
        %839 = vmatpush1.bf16.msra.mxu0 0
        %840 = vmatprep.subr.bf16.mxu0 0
        %841 = vmatpush1.bf16.msra.mxu0 0
        %842 = vmatprep.subr.bf16.mxu0 0
        %843 = vmatpush1.bf16.msra.mxu0 0
        %844 = vmatprep.subr.bf16.mxu0 0
        %845 = vmatpush1.bf16.msra.mxu0 0
        %846 = vmatprep.mubr.bf16.mxu0 0
        %847 = vmatmul.mubr.bf16.gmra.mrb[0].mxu0 %v656
        %v848 = vpop.f32.mrb[0].mxu0
        %v849 = vadd.f32 %v638, %v848
        %v850 = vpop.f32.mrb[0].mxu0
        %v851 = vpop.f32.mrb[0].mxu0
        %v852 = vpop.f32.mrb[0].mxu0
        %853 = vdwg.mxu0
        %v854 = vpack.c.bf16 %v693, %v693
        %v855 = vpack.c.bf16 %v745, %v745
        %v856 = vpack.c.bf16 %v797, %v797
        %v857 = vpack.c.bf16 %v849, %v849
        %859 = vrot.lane.b32.xlu0 %v854, 120
        %v860 = vpop.permute.xlu0 %859
        %vm861 = vcmask 64512
        %v863 = vsel %vm861, %v854, 0
        %v866 = vsel %vm861, %v860, 0
        %868 = vmatprep.subr.bf16.mxu0 0
        %869 = vmatpush1.bf16.xpose.msra.mxu0 %v866
        %870 = vmatprep.subr.bf16.mxu0 0
        %871 = vmatpush1.bf16.xpose.msra.mxu0 0
        %872 = vmatprep.subr.bf16.mxu0 0
        %873 = vmatpush1.bf16.xpose.msra.mxu0 0
        %874 = vmatprep.subr.bf16.mxu0 0
        %875 = vmatpush1.bf16.xpose.msra.mxu0 0
        %876 = vmatprep.subr.bf16.mxu0 0
        %877 = vmatpush1.bf16.xpose.msra.mxu0 0
        %878 = vmatprep.subr.bf16.mxu0 0
        %879 = vmatpush1.bf16.xpose.msra.mxu0 0
        %880 = vmatprep.subr.bf16.mxu0 0
        %881 = vmatpush1.bf16.xpose.msra.mxu0 0
        %882 = vmatprep.subr.bf16.mxu0 0
        %883 = vmatpush1.bf16.xpose.msra.mxu0 0
        %884 = vmatprep.subr.bf16.mxu0 0
        %885 = vmatpush1.bf16.xpose.msra.mxu0 0
        %886 = vmatprep.subr.bf16.mxu0 0
        %887 = vmatpush1.bf16.xpose.msra.mxu0 0
        %888 = vmatprep.subr.bf16.mxu0 0
        %889 = vmatpush1.bf16.xpose.msra.mxu0 0
        %890 = vmatprep.subr.bf16.mxu0 0
        %891 = vmatpush1.bf16.xpose.msra.mxu0 0
        %892 = vmatprep.subr.bf16.mxu0 0
        %893 = vmatpush1.bf16.xpose.msra.mxu0 0
        %894 = vmatprep.subr.bf16.mxu0 0
        %895 = vmatpush1.bf16.xpose.msra.mxu0 0
        %896 = vmatprep.subr.bf16.mxu0 0
        %897 = vmatpush1.bf16.xpose.msra.mxu0 0
        %898 = vmatprep.subr.bf16.mxu0 0
        %899 = vmatpush1.bf16.xpose.msra.mxu0 0
        %900 = vmatprep.mubr.bf16.mxu0 0
        %901 = vmatmul.mubr.bf16.gmra.mrb[0].mxu0 %v863
        %v902 = vpop.f32.mrb[0].mxu0
        %v903 = vadd.f32 0.0, %v902
        %v904 = vpop.f32.mrb[0].mxu0
        %v905 = vpop.f32.mrb[0].mxu0
        %v906 = vpop.f32.mrb[0].mxu0
        %907 = vdwg.mxu0
        %909 = vrot.lane.b32.xlu0 %v855, 120
        %v910 = vpop.permute.xlu0 %909
        %v912 = vsel %vm861, %v855, 0
        %v915 = vsel %vm861, %v910, 0
        %917 = vmatprep.subr.bf16.mxu0 0
        %918 = vmatpush1.bf16.xpose.msra.mxu0 %v915
        %919 = vmatprep.subr.bf16.mxu0 0
        %920 = vmatpush1.bf16.xpose.msra.mxu0 0
        %921 = vmatprep.subr.bf16.mxu0 0
        %922 = vmatpush1.bf16.xpose.msra.mxu0 0
        %923 = vmatprep.subr.bf16.mxu0 0
        %924 = vmatpush1.bf16.xpose.msra.mxu0 0
        %925 = vmatprep.subr.bf16.mxu0 0
        %926 = vmatpush1.bf16.xpose.msra.mxu0 0
        %927 = vmatprep.subr.bf16.mxu0 0
        %928 = vmatpush1.bf16.xpose.msra.mxu0 0
        %929 = vmatprep.subr.bf16.mxu0 0
        %930 = vmatpush1.bf16.xpose.msra.mxu0 0
        %931 = vmatprep.subr.bf16.mxu0 0
        %932 = vmatpush1.bf16.xpose.msra.mxu0 0
        %933 = vmatprep.subr.bf16.mxu0 0
        %934 = vmatpush1.bf16.xpose.msra.mxu0 0
        %935 = vmatprep.subr.bf16.mxu0 0
        %936 = vmatpush1.bf16.xpose.msra.mxu0 0
        %937 = vmatprep.subr.bf16.mxu0 0
        %938 = vmatpush1.bf16.xpose.msra.mxu0 0
        %939 = vmatprep.subr.bf16.mxu0 0
        %940 = vmatpush1.bf16.xpose.msra.mxu0 0
        %941 = vmatprep.subr.bf16.mxu0 0
        %942 = vmatpush1.bf16.xpose.msra.mxu0 0
        %943 = vmatprep.subr.bf16.mxu0 0
        %944 = vmatpush1.bf16.xpose.msra.mxu0 0
        %945 = vmatprep.subr.bf16.mxu0 0
        %946 = vmatpush1.bf16.xpose.msra.mxu0 0
        %947 = vmatprep.subr.bf16.mxu0 0
        %948 = vmatpush1.bf16.xpose.msra.mxu0 0
        %949 = vmatprep.mubr.bf16.mxu0 0
        %950 = vmatmul.mubr.bf16.gmra.mrb[0].mxu0 %v912
        %v951 = vpop.f32.mrb[0].mxu0
        %v952 = vadd.f32 0.0, %v951
        %v953 = vpop.f32.mrb[0].mxu0
        %v954 = vpop.f32.mrb[0].mxu0
        %v955 = vpop.f32.mrb[0].mxu0
        %956 = vdwg.mxu0
        %958 = vrot.lane.b32.xlu0 %v856, 120
        %v959 = vpop.permute.xlu0 %958
        %v961 = vsel %vm861, %v856, 0
        %v964 = vsel %vm861, %v959, 0
        %966 = vmatprep.subr.bf16.mxu0 0
        %967 = vmatpush1.bf16.xpose.msra.mxu0 %v964
        %968 = vmatprep.subr.bf16.mxu0 0
        %969 = vmatpush1.bf16.xpose.msra.mxu0 0
        %970 = vmatprep.subr.bf16.mxu0 0
        %971 = vmatpush1.bf16.xpose.msra.mxu0 0
        %972 = vmatprep.subr.bf16.mxu0 0
        %973 = vmatpush1.bf16.xpose.msra.mxu0 0
        %974 = vmatprep.subr.bf16.mxu0 0
        %975 = vmatpush1.bf16.xpose.msra.mxu0 0
        %976 = vmatprep.subr.bf16.mxu0 0
        %977 = vmatpush1.bf16.xpose.msra.mxu0 0
        %978 = vmatprep.subr.bf16.mxu0 0
        %979 = vmatpush1.bf16.xpose.msra.mxu0 0
        %980 = vmatprep.subr.bf16.mxu0 0
        %981 = vmatpush1.bf16.xpose.msra.mxu0 0
        %982 = vmatprep.subr.bf16.mxu0 0
        %983 = vmatpush1.bf16.xpose.msra.mxu0 0
        %984 = vmatprep.subr.bf16.mxu0 0
        %985 = vmatpush1.bf16.xpose.msra.mxu0 0
        %986 = vmatprep.subr.bf16.mxu0 0
        %987 = vmatpush1.bf16.xpose.msra.mxu0 0
        %988 = vmatprep.subr.bf16.mxu0 0
        %989 = vmatpush1.bf16.xpose.msra.mxu0 0
        %990 = vmatprep.subr.bf16.mxu0 0
        %991 = vmatpush1.bf16.xpose.msra.mxu0 0
        %992 = vmatprep.subr.bf16.mxu0 0
        %993 = vmatpush1.bf16.xpose.msra.mxu0 0
        %994 = vmatprep.subr.bf16.mxu0 0
        %995 = vmatpush1.bf16.xpose.msra.mxu0 0
        %996 = vmatprep.subr.bf16.mxu0 0
        %997 = vmatpush1.bf16.xpose.msra.mxu0 0
        %998 = vmatprep.mubr.bf16.mxu0 0
        %999 = vmatmul.mubr.bf16.gmra.mrb[0].mxu0 %v961
        %v1000 = vpop.f32.mrb[0].mxu0
        %v1001 = vadd.f32 0.0, %v1000
        %v1002 = vpop.f32.mrb[0].mxu0
        %v1003 = vpop.f32.mrb[0].mxu0
        %v1004 = vpop.f32.mrb[0].mxu0
        %1005 = vdwg.mxu0
        %1007 = vrot.lane.b32.xlu0 %v857, 120
        %v1008 = vpop.permute.xlu0 %1007
        %v1010 = vsel %vm861, %v857, 0
        %v1013 = vsel %vm861, %v1008, 0
        %1015 = vmatprep.subr.bf16.mxu0 0
        %1016 = vmatpush1.bf16.xpose.msra.mxu0 %v1013
        %1017 = vmatprep.subr.bf16.mxu0 0
        %1018 = vmatpush1.bf16.xpose.msra.mxu0 0
        %1019 = vmatprep.subr.bf16.mxu0 0
        %1020 = vmatpush1.bf16.xpose.msra.mxu0 0
        %1021 = vmatprep.subr.bf16.mxu0 0
        %1022 = vmatpush1.bf16.xpose.msra.mxu0 0
        %1023 = vmatprep.subr.bf16.mxu0 0
        %1024 = vmatpush1.bf16.xpose.msra.mxu0 0
        %1025 = vmatprep.subr.bf16.mxu0 0
        %1026 = vmatpush1.bf16.xpose.msra.mxu0 0
        %1027 = vmatprep.subr.bf16.mxu0 0
        %1028 = vmatpush1.bf16.xpose.msra.mxu0 0
        %1029 = vmatprep.subr.bf16.mxu0 0
        %1030 = vmatpush1.bf16.xpose.msra.mxu0 0
        %1031 = vmatprep.subr.bf16.mxu0 0
        %1032 = vmatpush1.bf16.xpose.msra.mxu0 0
        %1033 = vmatprep.subr.bf16.mxu0 0
        %1034 = vmatpush1.bf16.xpose.msra.mxu0 0
        %1035 = vmatprep.subr.bf16.mxu0 0
        %1036 = vmatpush1.bf16.xpose.msra.mxu0 0
        %1037 = vmatprep.subr.bf16.mxu0 0
        %1038 = vmatpush1.bf16.xpose.msra.mxu0 0
        %1039 = vmatprep.subr.bf16.mxu0 0
        %1040 = vmatpush1.bf16.xpose.msra.mxu0 0
        %1041 = vmatprep.subr.bf16.mxu0 0
        %1042 = vmatpush1.bf16.xpose.msra.mxu0 0
        %1043 = vmatprep.subr.bf16.mxu0 0
        %1044 = vmatpush1.bf16.xpose.msra.mxu0 0
        %1045 = vmatprep.subr.bf16.mxu0 0
        %1046 = vmatpush1.bf16.xpose.msra.mxu0 0
        %1047 = vmatprep.mubr.bf16.mxu0 0
        %1048 = vmatmul.mubr.bf16.gmra.mrb[0].mxu0 %v1010
        %v1049 = vpop.f32.mrb[0].mxu0
        %v1050 = vadd.f32 0.0, %v1049
        %v1051 = vpop.f32.mrb[0].mxu0
        %v1052 = vpop.f32.mrb[0].mxu0
        %v1053 = vpop.f32.mrb[0].mxu0
        %1054 = vdwg.mxu0
        %v1055 = vmul.f32 %v903, 0.35355338
        %v1056 = vmul.f32 %v952, 0.35355338
        %v1057 = vmul.f32 %v1001, 0.35355338
        %v1058 = vmul.f32 %v1050, 0.35355338
        %v1060 = vlaneseq
        %v1061 = vshrl.u32 %v1060, 7
        %v1062 = vsub.s32 0, %v1061
        %v1063 = vrot.slane %v597, %v1062
        %v1065 = vadd.f32 %v1055, %v1063
        %v1066 = vadd.f32 %v1056, %v1063
        %v1067 = vadd.f32 %v1057, %v1063
        %v1068 = vadd.f32 %v1058, %v1063
        %v1069 = vsel %vm861, %v1065, -inf
        %1070 = vmax.xlane.f32.xlu0 %v1069
        %v1071 = vpop.xlane.xlu0 %1070
        %v1072 = vsel %vm861, %v1066, -inf
        %1073 = vmax.xlane.f32.xlu0 %v1072
        %v1074 = vpop.xlane.xlu0 %1073
        %v1075 = vsel %vm861, %v1067, -inf
        %1076 = vmax.xlane.f32.xlu0 %v1075
        %v1077 = vpop.xlane.xlu0 %1076
        %v1078 = vsel %vm861, %v1068, -inf
        %1079 = vmax.xlane.f32.xlu0 %v1078
        %v1080 = vpop.xlane.xlu0 %1079
        %v1081 = vsub.f32 %v1065, %v1071
        %v1082 = vsub.f32 %v1066, %v1074
        %v1083 = vsub.f32 %v1067, %v1077
        %v1084 = vsub.f32 %v1068, %v1080
        %v1085 = vmul.f32 %v1081, 1.442695
        %v1086 = vpow.pop %v1085
        %v1087 = vmul.f32 %v1082, 1.442695
        %v1088 = vpow.pop %v1087
        %v1089 = vmul.f32 %v1083, 1.442695
        %v1090 = vpow.pop %v1089
        %v1091 = vmul.f32 %v1084, 1.442695
        %v1092 = vpow.pop %v1091
        %v1093 = vsel %vm861, %v1086, 0.0
        %1094 = vadd.xlane.f32.xlu0 %v1093
        %v1095 = vpop.xlane.xlu0 %1094
        %v1096 = vsel %vm861, %v1088, 0.0
        %1097 = vadd.xlane.f32.xlu0 %v1096
        %v1098 = vpop.xlane.xlu0 %1097
        %v1099 = vsel %vm861, %v1090, 0.0
        %1100 = vadd.xlane.f32.xlu0 %v1099
        %v1101 = vpop.xlane.xlu0 %1100
        %v1102 = vsel %vm861, %v1092, 0.0
        %1103 = vadd.xlane.f32.xlu0 %v1102
        %v1104 = vpop.xlane.xlu0 %1103
        %v1105 = vrcp.pop %v1095
        %v1106 = vrcp.pop %v1098
        %v1107 = vrcp.pop %v1101
        %v1108 = vrcp.pop %v1104
        %v1109 = vmul.f32 %v1086, %v1105
        %v1110 = vmul.f32 %v1088, %v1106
        %v1111 = vmul.f32 %v1090, %v1107
        %v1112 = vmul.f32 %v1092, %v1108
        %v1113 = vpack.c.bf16 %v1109, %v1109
        %v1114 = vpack.c.bf16 %v1110, %v1110
        %v1115 = vpack.c.bf16 %v1111, %v1111
        %v1116 = vpack.c.bf16 %v1112, %v1112
        %1117 = vrot.lane.b32.xlu0 %v854, 112
        %v1118 = vpop.permute.xlu0 %1117
        %v1120 = vsel %vm861, %v1113, 0
        %vm1122 = vcmask 1043456
        %v1124 = vsel %vm1122, %v1118, 0
        %1126 = vmatprep.subr.bf16.mxu0 0
        %1127 = vmatpush1.bf16.msra.mxu0 %v1124
        %1128 = vmatprep.subr.bf16.mxu0 0
        %1129 = vmatpush1.bf16.msra.mxu0 0
        %1130 = vmatprep.subr.bf16.mxu0 0
        %1131 = vmatpush1.bf16.msra.mxu0 0
        %1132 = vmatprep.subr.bf16.mxu0 0
        %1133 = vmatpush1.bf16.msra.mxu0 0
        %1134 = vmatprep.subr.bf16.mxu0 0
        %1135 = vmatpush1.bf16.msra.mxu0 0
        %1136 = vmatprep.subr.bf16.mxu0 0
        %1137 = vmatpush1.bf16.msra.mxu0 0
        %1138 = vmatprep.subr.bf16.mxu0 0
        %1139 = vmatpush1.bf16.msra.mxu0 0
        %1140 = vmatprep.subr.bf16.mxu0 0
        %1141 = vmatpush1.bf16.msra.mxu0 0
        %1142 = vmatprep.subr.bf16.mxu0 0
        %1143 = vmatpush1.bf16.msra.mxu0 0
        %1144 = vmatprep.subr.bf16.mxu0 0
        %1145 = vmatpush1.bf16.msra.mxu0 0
        %1146 = vmatprep.subr.bf16.mxu0 0
        %1147 = vmatpush1.bf16.msra.mxu0 0
        %1148 = vmatprep.subr.bf16.mxu0 0
        %1149 = vmatpush1.bf16.msra.mxu0 0
        %1150 = vmatprep.subr.bf16.mxu0 0
        %1151 = vmatpush1.bf16.msra.mxu0 0
        %1152 = vmatprep.subr.bf16.mxu0 0
        %1153 = vmatpush1.bf16.msra.mxu0 0
        %1154 = vmatprep.subr.bf16.mxu0 0
        %1155 = vmatpush1.bf16.msra.mxu0 0
        %1156 = vmatprep.subr.bf16.mxu0 0
        %1157 = vmatpush1.bf16.msra.mxu0 0
        %1158 = vmatprep.mubr.bf16.mxu0 0
        %1159 = vmatmul.mubr.bf16.gmra.mrb[0].mxu0 %v1120
        %v1160 = vpop.f32.mrb[0].mxu0
        %v1161 = vadd.f32 0.0, %v1160
        %v1162 = vpop.f32.mrb[0].mxu0
        %v1163 = vpop.f32.mrb[0].mxu0
        %v1164 = vpop.f32.mrb[0].mxu0
        %1165 = vdwg.mxu0
        %1166 = vrot.lane.b32.xlu0 %v855, 112
        %v1167 = vpop.permute.xlu0 %1166
        %v1169 = vsel %vm861, %v1114, 0
        %v1172 = vsel %vm1122, %v1167, 0
        %1174 = vmatprep.subr.bf16.mxu0 0
        %1175 = vmatpush1.bf16.msra.mxu0 %v1172
        %1176 = vmatprep.subr.bf16.mxu0 0
        %1177 = vmatpush1.bf16.msra.mxu0 0
        %1178 = vmatprep.subr.bf16.mxu0 0
        %1179 = vmatpush1.bf16.msra.mxu0 0
        %1180 = vmatprep.subr.bf16.mxu0 0
        %1181 = vmatpush1.bf16.msra.mxu0 0
        %1182 = vmatprep.subr.bf16.mxu0 0
        %1183 = vmatpush1.bf16.msra.mxu0 0
        %1184 = vmatprep.subr.bf16.mxu0 0
        %1185 = vmatpush1.bf16.msra.mxu0 0
        %1186 = vmatprep.subr.bf16.mxu0 0
        %1187 = vmatpush1.bf16.msra.mxu0 0
        %1188 = vmatprep.subr.bf16.mxu0 0
        %1189 = vmatpush1.bf16.msra.mxu0 0
        %1190 = vmatprep.subr.bf16.mxu0 0
        %1191 = vmatpush1.bf16.msra.mxu0 0
        %1192 = vmatprep.subr.bf16.mxu0 0
        %1193 = vmatpush1.bf16.msra.mxu0 0
        %1194 = vmatprep.subr.bf16.mxu0 0
        %1195 = vmatpush1.bf16.msra.mxu0 0
        %1196 = vmatprep.subr.bf16.mxu0 0
        %1197 = vmatpush1.bf16.msra.mxu0 0
        %1198 = vmatprep.subr.bf16.mxu0 0
        %1199 = vmatpush1.bf16.msra.mxu0 0
        %1200 = vmatprep.subr.bf16.mxu0 0
        %1201 = vmatpush1.bf16.msra.mxu0 0
        %1202 = vmatprep.subr.bf16.mxu0 0
        %1203 = vmatpush1.bf16.msra.mxu0 0
        %1204 = vmatprep.subr.bf16.mxu0 0
        %1205 = vmatpush1.bf16.msra.mxu0 0
        %1206 = vmatprep.mubr.bf16.mxu0 0
        %1207 = vmatmul.mubr.bf16.gmra.mrb[0].mxu0 %v1169
        %v1208 = vpop.f32.mrb[0].mxu0
        %v1209 = vadd.f32 0.0, %v1208
        %v1210 = vpop.f32.mrb[0].mxu0
        %v1211 = vpop.f32.mrb[0].mxu0
        %v1212 = vpop.f32.mrb[0].mxu0
        %1213 = vdwg.mxu0
        %1214 = vrot.lane.b32.xlu0 %v856, 112
        %v1215 = vpop.permute.xlu0 %1214
        %v1217 = vsel %vm861, %v1115, 0
        %v1220 = vsel %vm1122, %v1215, 0
        %1222 = vmatprep.subr.bf16.mxu0 0
        %1223 = vmatpush1.bf16.msra.mxu0 %v1220
        %1224 = vmatprep.subr.bf16.mxu0 0
        %1225 = vmatpush1.bf16.msra.mxu0 0
        %1226 = vmatprep.subr.bf16.mxu0 0
        %1227 = vmatpush1.bf16.msra.mxu0 0
        %1228 = vmatprep.subr.bf16.mxu0 0
        %1229 = vmatpush1.bf16.msra.mxu0 0
        %1230 = vmatprep.subr.bf16.mxu0 0
        %1231 = vmatpush1.bf16.msra.mxu0 0
        %1232 = vmatprep.subr.bf16.mxu0 0
        %1233 = vmatpush1.bf16.msra.mxu0 0
        %1234 = vmatprep.subr.bf16.mxu0 0
        %1235 = vmatpush1.bf16.msra.mxu0 0
        %1236 = vmatprep.subr.bf16.mxu0 0
        %1237 = vmatpush1.bf16.msra.mxu0 0
        %1238 = vmatprep.subr.bf16.mxu0 0
        %1239 = vmatpush1.bf16.msra.mxu0 0
        %1240 = vmatprep.subr.bf16.mxu0 0
        %1241 = vmatpush1.bf16.msra.mxu0 0
        %1242 = vmatprep.subr.bf16.mxu0 0
        %1243 = vmatpush1.bf16.msra.mxu0 0
        %1244 = vmatprep.subr.bf16.mxu0 0
        %1245 = vmatpush1.bf16.msra.mxu0 0
        %1246 = vmatprep.subr.bf16.mxu0 0
        %1247 = vmatpush1.bf16.msra.mxu0 0
        %1248 = vmatprep.subr.bf16.mxu0 0
        %1249 = vmatpush1.bf16.msra.mxu0 0
        %1250 = vmatprep.subr.bf16.mxu0 0
        %1251 = vmatpush1.bf16.msra.mxu0 0
        %1252 = vmatprep.subr.bf16.mxu0 0
        %1253 = vmatpush1.bf16.msra.mxu0 0
        %1254 = vmatprep.mubr.bf16.mxu0 0
        %1255 = vmatmul.mubr.bf16.gmra.mrb[0].mxu0 %v1217
        %v1256 = vpop.f32.mrb[0].mxu0
        %v1257 = vadd.f32 0.0, %v1256
        %v1258 = vpop.f32.mrb[0].mxu0
        %v1259 = vpop.f32.mrb[0].mxu0
        %v1260 = vpop.f32.mrb[0].mxu0
        %1261 = vdwg.mxu0
        %1262 = vrot.lane.b32.xlu0 %v857, 112
        %v1263 = vpop.permute.xlu0 %1262
        %v1265 = vsel %vm861, %v1116, 0
        %v1268 = vsel %vm1122, %v1263, 0
        %1270 = vmatprep.subr.bf16.mxu0 0
        %1271 = vmatpush1.bf16.msra.mxu0 %v1268
        %1272 = vmatprep.subr.bf16.mxu0 0
        %1273 = vmatpush1.bf16.msra.mxu0 0
        %1274 = vmatprep.subr.bf16.mxu0 0
        %1275 = vmatpush1.bf16.msra.mxu0 0
        %1276 = vmatprep.subr.bf16.mxu0 0
        %1277 = vmatpush1.bf16.msra.mxu0 0
        %1278 = vmatprep.subr.bf16.mxu0 0
        %1279 = vmatpush1.bf16.msra.mxu0 0
        %1280 = vmatprep.subr.bf16.mxu0 0
        %1281 = vmatpush1.bf16.msra.mxu0 0
        %1282 = vmatprep.subr.bf16.mxu0 0
        %1283 = vmatpush1.bf16.msra.mxu0 0
        %1284 = vmatprep.subr.bf16.mxu0 0
        %1285 = vmatpush1.bf16.msra.mxu0 0
        %1286 = vmatprep.subr.bf16.mxu0 0
        %1287 = vmatpush1.bf16.msra.mxu0 0
        %1288 = vmatprep.subr.bf16.mxu0 0
        %1289 = vmatpush1.bf16.msra.mxu0 0
        %1290 = vmatprep.subr.bf16.mxu0 0
        %1291 = vmatpush1.bf16.msra.mxu0 0
        %1292 = vmatprep.subr.bf16.mxu0 0
        %1293 = vmatpush1.bf16.msra.mxu0 0
        %1294 = vmatprep.subr.bf16.mxu0 0
        %1295 = vmatpush1.bf16.msra.mxu0 0
        %1296 = vmatprep.subr.bf16.mxu0 0
        %1297 = vmatpush1.bf16.msra.mxu0 0
        %1298 = vmatprep.subr.bf16.mxu0 0
        %1299 = vmatpush1.bf16.msra.mxu0 0
        %1300 = vmatprep.subr.bf16.mxu0 0
        %1301 = vmatpush1.bf16.msra.mxu0 0
        %1302 = vmatprep.mubr.bf16.mxu0 0
        %1303 = vmatmul.mubr.bf16.gmra.mrb[0].mxu0 %v1265
        %v1304 = vpop.f32.mrb[0].mxu0
        %v1305 = vadd.f32 0.0, %v1304
        %v1306 = vpop.f32.mrb[0].mxu0
        %v1307 = vpop.f32.mrb[0].mxu0
        %v1308 = vpop.f32.mrb[0].mxu0
        %1309 = vdwg.mxu0
        %1311 = vrot.lane.b32.xlu0 %v1209, 8
        %v1312 = vpop.permute.xlu0 %1311
        %1315 = vrot.lane.b32.xlu0 %v1257, 16
        %v1316 = vpop.permute.xlu0 %1315
        %1319 = vrot.lane.b32.xlu0 %v1305, 24
        %v1320 = vpop.permute.xlu0 %1319
        %v1322 = vsel %vm861, %v1161, %v1312
        %vm1323 = vcmask 130048
        %v1324 = vsel %vm1323, %v1322, %v1316
        %vm1325 = vcmask 195584
        %v1326 = vsel %vm1325, %v1324, %v1320
        %v1327 = vpack.c.bf16 %v1326, %v1326
        %v1328 = vld [vmem:[%s5] sm:$0xf]
        %v1329 = vld [vmem:[%s5 + $0x4] sm:$0xf]
        %v1330 = vld [vmem:[%s5 + $0x8] sm:$0xf]
        %v1331 = vld [vmem:[%s5 + $0xc] sm:$0xf]
        %v1332 = vld [vmem:[%s6] sm:$0x1]
        %v1334 = vlaneseq
        %v1335 = vshrl.u32 %v1334, 7
        %v1336 = vsub.s32 0, %v1335
        %v1337 = vrot.slane %v1332, %v1336
        %v1343 = vunpack.c.l.b16 %v1328
        %v1344 = vunpack.c.l.b16 %v1329
        %v1345 = vunpack.c.l.b16 %v1330
        %v1346 = vunpack.c.l.b16 %v1331
        %v1347 = vpack.c.b16 %v1344, %v1343
        %v1348 = vpack.c.b16 %v1346, %v1345
        %v1352 = vsel %vm572, %v1327, 0
        %1354 = vmatprep.subr.bf16.mxu0 0
        %1355 = vmatpush1.bf16.msra.mxu0 %v1347
        %1356 = vmatprep.subr.bf16.mxu0 0
        %1357 = vmatpush1.bf16.msra.mxu0 %v1348
        %1358 = vmatprep.subr.bf16.mxu0 0
        %1359 = vmatpush1.bf16.msra.mxu0 0
        %1360 = vmatprep.subr.bf16.mxu0 0
        %1361 = vmatpush1.bf16.msra.mxu0 0
        %1362 = vmatprep.subr.bf16.mxu0 0
        %1363 = vmatpush1.bf16.msra.mxu0 0
        %1364 = vmatprep.subr.bf16.mxu0 0
        %1365 = vmatpush1.bf16.msra.mxu0 0
        %1366 = vmatprep.subr.bf16.mxu0 0
        %1367 = vmatpush1.bf16.msra.mxu0 0
        %1368 = vmatprep.subr.bf16.mxu0 0
        %1369 = vmatpush1.bf16.msra.mxu0 0
        %1370 = vmatprep.subr.bf16.mxu0 0
        %1371 = vmatpush1.bf16.msra.mxu0 0
        %1372 = vmatprep.subr.bf16.mxu0 0
        %1373 = vmatpush1.bf16.msra.mxu0 0
        %1374 = vmatprep.subr.bf16.mxu0 0
        %1375 = vmatpush1.bf16.msra.mxu0 0
        %1376 = vmatprep.subr.bf16.mxu0 0
        %1377 = vmatpush1.bf16.msra.mxu0 0
        %1378 = vmatprep.subr.bf16.mxu0 0
        %1379 = vmatpush1.bf16.msra.mxu0 0
        %1380 = vmatprep.subr.bf16.mxu0 0
        %1381 = vmatpush1.bf16.msra.mxu0 0
        %1382 = vmatprep.subr.bf16.mxu0 0
        %1383 = vmatpush1.bf16.msra.mxu0 0
        %1384 = vmatprep.subr.bf16.mxu0 0
        %1385 = vmatpush1.bf16.msra.mxu0 0
        %1386 = vmatprep.mubr.bf16.mxu0 0
        %1387 = vmatmul.mubr.bf16.gmra.mrb[0].mxu0 %v1352
        %v1388 = vpop.f32.mrb[0].mxu0
        %v1389 = vadd.f32 %v1337, %v1388
        %v1390 = vpop.f32.mrb[0].mxu0
        %v1391 = vpop.f32.mrb[0].mxu0
        %v1392 = vpop.f32.mrb[0].mxu0
        %1393 = vdwg.mxu0
        %v1394 = vld [vmem:[%s11] sm:$0xf]
        %v1395 = vadd.f32 %v1389, %v596
        %v1396 = vsel %vm572, %v1395, 0.0
        %1397 = vadd.xlane.f32.xlu0 %v1396
        %v1398 = vpop.xlane.xlu0 %1397
        %v1399 = vmul.f32 %v1398, %v576
        %v1400 = vsub.f32 %v1395, %v1399
        %v1401 = vmul.f32 %v1400, %v1400
        %v1402 = vsel %vm572, %v1401, 0.0
        %1403 = vadd.xlane.f32.xlu0 %v1402
        %v1404 = vpop.xlane.xlu0 %1403
        %v1405 = vmul.f32 %v1404, %v576
        %v1406 = vadd.f32 %v1405, 1e-12
        %v1407 = vrsqrt.pop %v1406
        %v1408 = vmul.f32 %v1400, %v1407
        %v1409 = vlaneseq
        %v1410 = vshrl.u32 %v1409, 7
        %v1411 = vsub.s32 0, %v1410
        %v1412 = vrot.slane %v1394, %v1411
        %v1413 = vmul.f32 %v1408, %v1412
        %v1414 = vlaneseq
        %v1415 = vshrl.u32 %v1414, 7
        %v1416 = vsub.s32 1, %v1415
        %v1417 = vrot.slane %v1394, %v1416
        %v1418 = vadd.f32 %v1413, %v1417
        %v1419 = vpack.c.bf16 %v1418, %v1418
        %v1420 = vld [vmem:[%s7] sm:$0xf]
        %v1421 = vld [vmem:[%s7 + $0x4] sm:$0xf]
        %v1422 = vld [vmem:[%s7 + $0x8] sm:$0xf]
        %v1423 = vld [vmem:[%s7 + $0xc] sm:$0xf]
        %v1424 = vld [vmem:[%s8] sm:$0x1]
        %v1426 = vlaneseq
        %v1427 = vshrl.u32 %v1426, 7
        %v1428 = vsub.s32 0, %v1427
        %v1429 = vrot.slane %v1424, %v1428
        %v1435 = vunpack.c.l.b16 %v1420
        %v1436 = vunpack.c.l.b16 %v1421
        %v1437 = vunpack.c.l.b16 %v1422
        %v1438 = vunpack.c.l.b16 %v1423
        %v1439 = vpack.c.b16 %v1436, %v1435
        %v1440 = vpack.c.b16 %v1438, %v1437
        %v1444 = vsel %vm572, %v1419, 0
        %1446 = vmatprep.subr.bf16.mxu0 0
        %1447 = vmatpush1.bf16.msra.mxu0 %v1439
        %1448 = vmatprep.subr.bf16.mxu0 0
        %1449 = vmatpush1.bf16.msra.mxu0 %v1440
        %1450 = vmatprep.subr.bf16.mxu0 0
        %1451 = vmatpush1.bf16.msra.mxu0 0
        %1452 = vmatprep.subr.bf16.mxu0 0
        %1453 = vmatpush1.bf16.msra.mxu0 0
        %1454 = vmatprep.subr.bf16.mxu0 0
        %1455 = vmatpush1.bf16.msra.mxu0 0
        %1456 = vmatprep.subr.bf16.mxu0 0
        %1457 = vmatpush1.bf16.msra.mxu0 0
        %1458 = vmatprep.subr.bf16.mxu0 0
        %1459 = vmatpush1.bf16.msra.mxu0 0
        %1460 = vmatprep.subr.bf16.mxu0 0
        %1461 = vmatpush1.bf16.msra.mxu0 0
        %1462 = vmatprep.subr.bf16.mxu0 0
        %1463 = vmatpush1.bf16.msra.mxu0 0
        %1464 = vmatprep.subr.bf16.mxu0 0
        %1465 = vmatpush1.bf16.msra.mxu0 0
        %1466 = vmatprep.subr.bf16.mxu0 0
        %1467 = vmatpush1.bf16.msra.mxu0 0
        %1468 = vmatprep.subr.bf16.mxu0 0
        %1469 = vmatpush1.bf16.msra.mxu0 0
        %1470 = vmatprep.subr.bf16.mxu0 0
        %1471 = vmatpush1.bf16.msra.mxu0 0
        %1472 = vmatprep.subr.bf16.mxu0 0
        %1473 = vmatpush1.bf16.msra.mxu0 0
        %1474 = vmatprep.subr.bf16.mxu0 0
        %1475 = vmatpush1.bf16.msra.mxu0 0
        %1476 = vmatprep.subr.bf16.mxu0 0
        %1477 = vmatpush1.bf16.msra.mxu0 0
        %1478 = vmatprep.mubr.bf16.mxu0 0
        %1479 = vmatmul.mubr.bf16.gmra.mrb[0].mxu0 %v1444
        %v1480 = vpop.f32.mrb[0].mxu0
        %v1481 = vadd.f32 %v1429, %v1480
        %v1482 = vpop.f32.mrb[0].mxu0
        %v1483 = vpop.f32.mrb[0].mxu0
        %v1484 = vpop.f32.mrb[0].mxu0
        %1485 = vdwg.mxu0
        %v1486 = vmul.f32 %v1481, 0.5
        %v1487 = vmul.f32 %v1481, 0.044715
        %v1488 = vmul.f32 %v1487, %v1481
        %v1489 = vmul.f32 %v1488, %v1481
        %v1490 = vadd.f32 %v1481, %v1489
        %v1491 = vmul.f32 %v1490, 0.7978846
        %v1492 = vtanh.pop %v1491
        %v1493 = vadd.f32 %v1492, 1.0
        %v1494 = vmul.f32 %v1486, %v1493
        %v1495 = vpack.c.bf16 %v1494, %v1494
        %v1496 = vld [vmem:[%s9] sm:$0xf]
        %v1497 = vld [vmem:[%s9 + $0x4] sm:$0xf]
        %v1498 = vld [vmem:[%s9 + $0x8] sm:$0xf]
        %v1499 = vld [vmem:[%s9 + $0xc] sm:$0xf]
        %v1500 = vld [vmem:[%s9 + $0x10] sm:$0xf]
        %v1501 = vld [vmem:[%s9 + $0x14] sm:$0xf]
        %v1502 = vld [vmem:[%s9 + $0x18] sm:$0xf]
        %v1503 = vld [vmem:[%s9 + $0x1c] sm:$0xf]
        %v1504 = vld [vmem:[%s9 + $0x20] sm:$0xf]
        %v1505 = vld [vmem:[%s9 + $0x24] sm:$0xf]
        %v1506 = vld [vmem:[%s9 + $0x28] sm:$0xf]
        %v1507 = vld [vmem:[%s9 + $0x2c] sm:$0xf]
        %v1508 = vld [vmem:[%s9 + $0x30] sm:$0xf]
        %v1509 = vld [vmem:[%s9 + $0x34] sm:$0xf]
        %v1510 = vld [vmem:[%s9 + $0x38] sm:$0xf]
        %v1511 = vld [vmem:[%s9 + $0x3c] sm:$0xf]
        %v1512 = vld [vmem:[%s10] sm:$0x1]
        %v1514 = vlaneseq
        %v1515 = vshrl.u32 %v1514, 7
        %v1516 = vsub.s32 0, %v1515
        %v1517 = vrot.slane %v1512, %v1516
        %v1535 = vunpack.c.l.b16 %v1496
        %v1536 = vunpack.c.l.b16 %v1497
        %v1537 = vunpack.c.l.b16 %v1498
        %v1538 = vunpack.c.l.b16 %v1499
        %v1539 = vunpack.c.l.b16 %v1500
        %v1540 = vunpack.c.l.b16 %v1501
        %v1541 = vunpack.c.l.b16 %v1502
        %v1542 = vunpack.c.l.b16 %v1503
        %v1543 = vunpack.c.l.b16 %v1504
        %v1544 = vunpack.c.l.b16 %v1505
        %v1545 = vunpack.c.l.b16 %v1506
        %v1546 = vunpack.c.l.b16 %v1507
        %v1547 = vunpack.c.l.b16 %v1508
        %v1548 = vunpack.c.l.b16 %v1509
        %v1549 = vunpack.c.l.b16 %v1510
        %v1550 = vunpack.c.l.b16 %v1511
        %v1551 = vpack.c.b16 %v1536, %v1535
        %v1552 = vpack.c.b16 %v1538, %v1537
        %v1553 = vpack.c.b16 %v1540, %v1539
        %v1554 = vpack.c.b16 %v1542, %v1541
        %v1555 = vpack.c.b16 %v1544, %v1543
        %v1556 = vpack.c.b16 %v1546, %v1545
        %v1557 = vpack.c.b16 %v1548, %v1547
        %v1558 = vpack.c.b16 %v1550, %v1549
        %1567 = vmatprep.subr.bf16.mxu0 0
        %1568 = vmatpush1.bf16.msra.mxu0 %v1551
        %1569 = vmatprep.subr.bf16.mxu0 0
        %1570 = vmatpush1.bf16.msra.mxu0 %v1552
        %1571 = vmatprep.subr.bf16.mxu0 0
        %1572 = vmatpush1.bf16.msra.mxu0 %v1553
        %1573 = vmatprep.subr.bf16.mxu0 0
        %1574 = vmatpush1.bf16.msra.mxu0 %v1554
        %1575 = vmatprep.subr.bf16.mxu0 0
        %1576 = vmatpush1.bf16.msra.mxu0 %v1555
        %1577 = vmatprep.subr.bf16.mxu0 0
        %1578 = vmatpush1.bf16.msra.mxu0 %v1556
        %1579 = vmatprep.subr.bf16.mxu0 0
        %1580 = vmatpush1.bf16.msra.mxu0 %v1557
        %1581 = vmatprep.subr.bf16.mxu0 0
        %1582 = vmatpush1.bf16.msra.mxu0 %v1558
        %1583 = vmatprep.subr.bf16.mxu0 0
        %1584 = vmatpush1.bf16.msra.mxu0 0
        %1585 = vmatprep.subr.bf16.mxu0 0
        %1586 = vmatpush1.bf16.msra.mxu0 0
        %1587 = vmatprep.subr.bf16.mxu0 0
        %1588 = vmatpush1.bf16.msra.mxu0 0
        %1589 = vmatprep.subr.bf16.mxu0 0
        %1590 = vmatpush1.bf16.msra.mxu0 0
        %1591 = vmatprep.subr.bf16.mxu0 0
        %1592 = vmatpush1.bf16.msra.mxu0 0
        %1593 = vmatprep.subr.bf16.mxu0 0
        %1594 = vmatpush1.bf16.msra.mxu0 0
        %1595 = vmatprep.subr.bf16.mxu0 0
        %1596 = vmatpush1.bf16.msra.mxu0 0
        %1597 = vmatprep.subr.bf16.mxu0 0
        %1598 = vmatpush1.bf16.msra.mxu0 0
        %1599 = vmatprep.mubr.bf16.mxu0 0
        %1600 = vmatmul.mubr.bf16.gmra.mrb[0].mxu0 %v1495
        %v1601 = vpop.f32.mrb[0].mxu0
        %v1602 = vadd.f32 %v1517, %v1601
        %v1603 = vpop.f32.mrb[0].mxu0
        %v1604 = vpop.f32.mrb[0].mxu0
        %v1605 = vpop.f32.mrb[0].mxu0
        %1606 = vdwg.mxu0
        %v1607 = vadd.f32 %v1602, %v1418
        %v1608 = vsel %vm572, %v1607, 0.0
        %1609 = vadd.xlane.f32.xlu0 %v1608
        %v1610 = vpop.xlane.xlu0 %1609
        %v1611 = vmul.f32 %v1610, %v576
        %v1612 = vsub.f32 %v1607, %v1611
        %v1613 = vmul.f32 %v1612, %v1612
        %v1614 = vsel %vm572, %v1613, 0.0
        %1615 = vadd.xlane.f32.xlu0 %v1614
        %v1616 = vpop.xlane.xlu0 %1615
        %v1617 = vmul.f32 %v1616, %v576
        %v1618 = vadd.f32 %v1617, 1e-12
        %v1619 = vrsqrt.pop %v1618
        %v1620 = vmul.f32 %v1612, %v1619
        %v1621 = vlaneseq
        %v1622 = vshrl.u32 %v1621, 7
        %v1623 = vsub.s32 2, %v1622
        %v1624 = vrot.slane %v1394, %v1623
        %v1625 = vmul.f32 %v1620, %v1624
        %v1626 = vlaneseq
        %v1627 = vshrl.u32 %v1626, 7
        %v1628 = vsub.s32 3, %v1627
        %v1629 = vrot.slane %v1394, %v1628
        %v1630 = vadd.f32 %v1625, %v1629
        %v1631 = vpack.c.bf16 %v1630, %v1630
        %s1632 = scalar_lea.vmem %s3, 64
        %v1633 = vld [vmem:[%s1632] sm:$0xf]
        %v1634 = vld [vmem:[%s1632 + $0x4] sm:$0xf]
        %v1635 = vld [vmem:[%s1632 + $0x8] sm:$0xf]
        %v1636 = vld [vmem:[%s1632 + $0xc] sm:$0xf]
        %v1637 = vld [vmem:[%s1632 + $0x10] sm:$0xf]
        %v1638 = vld [vmem:[%s1632 + $0x14] sm:$0xf]
        %v1639 = vld [vmem:[%s1632 + $0x18] sm:$0xf]
        %v1640 = vld [vmem:[%s1632 + $0x1c] sm:$0xf]
        %v1641 = vld [vmem:[%s1632 + $0x20] sm:$0xf]
        %v1642 = vld [vmem:[%s1632 + $0x24] sm:$0xf]
        %v1643 = vld [vmem:[%s1632 + $0x28] sm:$0xf]
        %v1644 = vld [vmem:[%s1632 + $0x2c] sm:$0xf]
        %v1645 = vld [vmem:[%s1632 + $0x30] sm:$0xf]
        %v1646 = vld [vmem:[%s1632 + $0x34] sm:$0xf]
        %v1647 = vld [vmem:[%s1632 + $0x38] sm:$0xf]
        %v1648 = vld [vmem:[%s1632 + $0x3c] sm:$0xf]
        %s1649 = scalar_lea.vmem %s4, 4
        %v1650 = vld [vmem:[%s1649] sm:$0x1]
        %v1651 = vld [vmem:[%s1649 + $0x1] sm:$0x1]
        %v1652 = vld [vmem:[%s1649 + $0x2] sm:$0x1]
        %v1653 = vld [vmem:[%s1649 + $0x3] sm:$0x1]
        %v1658 = vlaneseq
        %v1659 = vshrl.u32 %v1658, 7
        %v1660 = vsub.s32 0, %v1659
        %v1661 = vrot.slane %v1650, %v1660
        %v1662 = vlaneseq
        %v1663 = vshrl.u32 %v1662, 7
        %v1664 = vsub.s32 0, %v1663
        %v1665 = vrot.slane %v1651, %v1664
        %v1666 = vlaneseq
        %v1667 = vshrl.u32 %v1666, 7
        %v1668 = vsub.s32 0, %v1667
        %v1669 = vrot.slane %v1652, %v1668
        %v1670 = vlaneseq
        %v1671 = vshrl.u32 %v1670, 7
        %v1672 = vsub.s32 0, %v1671
        %v1673 = vrot.slane %v1653, %v1672
        %v1682 = vunpack.c.l.b16 %v1633
        %v1683 = vunpack.c.l.b16 %v1634
        %v1684 = vunpack.c.l.b16 %v1635
        %v1685 = vunpack.c.l.b16 %v1636
        %v1686 = vpack.c.b16 %v1683, %v1682
        %v1687 = vpack.c.b16 %v1685, %v1684
        %v1691 = vsel %vm572, %v1631, 0
        %1693 = vmatprep.subr.bf16.mxu0 0
        %1694 = vmatpush1.bf16.msra.mxu0 %v1686
        %1695 = vmatprep.subr.bf16.mxu0 0
        %1696 = vmatpush1.bf16.msra.mxu0 %v1687
        %1697 = vmatprep.subr.bf16.mxu0 0
        %1698 = vmatpush1.bf16.msra.mxu0 0
        %1699 = vmatprep.subr.bf16.mxu0 0
        %1700 = vmatpush1.bf16.msra.mxu0 0
        %1701 = vmatprep.subr.bf16.mxu0 0
        %1702 = vmatpush1.bf16.msra.mxu0 0
        %1703 = vmatprep.subr.bf16.mxu0 0
        %1704 = vmatpush1.bf16.msra.mxu0 0
        %1705 = vmatprep.subr.bf16.mxu0 0
        %1706 = vmatpush1.bf16.msra.mxu0 0
        %1707 = vmatprep.subr.bf16.mxu0 0
        %1708 = vmatpush1.bf16.msra.mxu0 0
        %1709 = vmatprep.subr.bf16.mxu0 0
        %1710 = vmatpush1.bf16.msra.mxu0 0
        %1711 = vmatprep.subr.bf16.mxu0 0
        %1712 = vmatpush1.bf16.msra.mxu0 0
        %1713 = vmatprep.subr.bf16.mxu0 0
        %1714 = vmatpush1.bf16.msra.mxu0 0
        %1715 = vmatprep.subr.bf16.mxu0 0
        %1716 = vmatpush1.bf16.msra.mxu0 0
        %1717 = vmatprep.subr.bf16.mxu0 0
        %1718 = vmatpush1.bf16.msra.mxu0 0
        %1719 = vmatprep.subr.bf16.mxu0 0
        %1720 = vmatpush1.bf16.msra.mxu0 0
        %1721 = vmatprep.subr.bf16.mxu0 0
        %1722 = vmatpush1.bf16.msra.mxu0 0
        %1723 = vmatprep.subr.bf16.mxu0 0
        %1724 = vmatpush1.bf16.msra.mxu0 0
        %1725 = vmatprep.mubr.bf16.mxu0 0
        %1726 = vmatmul.mubr.bf16.gmra.mrb[0].mxu0 %v1691
        %v1727 = vpop.f32.mrb[0].mxu0
        %v1728 = vadd.f32 %v1661, %v1727
        %v1729 = vpop.f32.mrb[0].mxu0
        %v1730 = vpop.f32.mrb[0].mxu0
        %v1731 = vpop.f32.mrb[0].mxu0
        %1732 = vdwg.mxu0
        %v1737 = vunpack.c.l.b16 %v1637
        %v1738 = vunpack.c.l.b16 %v1638
        %v1739 = vunpack.c.l.b16 %v1639
        %v1740 = vunpack.c.l.b16 %v1640
        %v1741 = vpack.c.b16 %v1738, %v1737
        %v1742 = vpack.c.b16 %v1740, %v1739
        %1745 = vmatprep.subr.bf16.mxu0 0
        %1746 = vmatpush1.bf16.msra.mxu0 %v1741
        %1747 = vmatprep.subr.bf16.mxu0 0
        %1748 = vmatpush1.bf16.msra.mxu0 %v1742
        %1749 = vmatprep.subr.bf16.mxu0 0
        %1750 = vmatpush1.bf16.msra.mxu0 0
        %1751 = vmatprep.subr.bf16.mxu0 0
        %1752 = vmatpush1.bf16.msra.mxu0 0
        %1753 = vmatprep.subr.bf16.mxu0 0
        %1754 = vmatpush1.bf16.msra.mxu0 0
        %1755 = vmatprep.subr.bf16.mxu0 0
        %1756 = vmatpush1.bf16.msra.mxu0 0
        %1757 = vmatprep.subr.bf16.mxu0 0
        %1758 = vmatpush1.bf16.msra.mxu0 0
        %1759 = vmatprep.subr.bf16.mxu0 0
        %1760 = vmatpush1.bf16.msra.mxu0 0
        %1761 = vmatprep.subr.bf16.mxu0 0
        %1762 = vmatpush1.bf16.msra.mxu0 0
        %1763 = vmatprep.subr.bf16.mxu0 0
        %1764 = vmatpush1.bf16.msra.mxu0 0
        %1765 = vmatprep.subr.bf16.mxu0 0
        %1766 = vmatpush1.bf16.msra.mxu0 0
        %1767 = vmatprep.subr.bf16.mxu0 0
        %1768 = vmatpush1.bf16.msra.mxu0 0
        %1769 = vmatprep.subr.bf16.mxu0 0
        %1770 = vmatpush1.bf16.msra.mxu0 0
        %1771 = vmatprep.subr.bf16.mxu0 0
        %1772 = vmatpush1.bf16.msra.mxu0 0
        %1773 = vmatprep.subr.bf16.mxu0 0
        %1774 = vmatpush1.bf16.msra.mxu0 0
        %1775 = vmatprep.subr.bf16.mxu0 0
        %1776 = vmatpush1.bf16.msra.mxu0 0
        %1777 = vmatprep.mubr.bf16.mxu0 0
        %1778 = vmatmul.mubr.bf16.gmra.mrb[0].mxu0 %v1691
        %v1779 = vpop.f32.mrb[0].mxu0
        %v1780 = vadd.f32 %v1665, %v1779
        %v1781 = vpop.f32.mrb[0].mxu0
        %v1782 = vpop.f32.mrb[0].mxu0
        %v1783 = vpop.f32.mrb[0].mxu0
        %1784 = vdwg.mxu0
        %v1789 = vunpack.c.l.b16 %v1641
        %v1790 = vunpack.c.l.b16 %v1642
        %v1791 = vunpack.c.l.b16 %v1643
        %v1792 = vunpack.c.l.b16 %v1644
        %v1793 = vpack.c.b16 %v1790, %v1789
        %v1794 = vpack.c.b16 %v1792, %v1791
        %1797 = vmatprep.subr.bf16.mxu0 0
        %1798 = vmatpush1.bf16.msra.mxu0 %v1793
        %1799 = vmatprep.subr.bf16.mxu0 0
        %1800 = vmatpush1.bf16.msra.mxu0 %v1794
        %1801 = vmatprep.subr.bf16.mxu0 0
        %1802 = vmatpush1.bf16.msra.mxu0 0
        %1803 = vmatprep.subr.bf16.mxu0 0
        %1804 = vmatpush1.bf16.msra.mxu0 0
        %1805 = vmatprep.subr.bf16.mxu0 0
        %1806 = vmatpush1.bf16.msra.mxu0 0
        %1807 = vmatprep.subr.bf16.mxu0 0
        %1808 = vmatpush1.bf16.msra.mxu0 0
        %1809 = vmatprep.subr.bf16.mxu0 0
        %1810 = vmatpush1.bf16.msra.mxu0 0
        %1811 = vmatprep.subr.bf16.mxu0 0
        %1812 = vmatpush1.bf16.msra.mxu0 0
        %1813 = vmatprep.subr.bf16.mxu0 0
        %1814 = vmatpush1.bf16.msra.mxu0 0
        %1815 = vmatprep.subr.bf16.mxu0 0
        %1816 = vmatpush1.bf16.msra.mxu0 0
        %1817 = vmatprep.subr.bf16.mxu0 0
        %1818 = vmatpush1.bf16.msra.mxu0 0
        %1819 = vmatprep.subr.bf16.mxu0 0
        %1820 = vmatpush1.bf16.msra.mxu0 0
        %1821 = vmatprep.subr.bf16.mxu0 0
        %1822 = vmatpush1.bf16.msra.mxu0 0
        %1823 = vmatprep.subr.bf16.mxu0 0
        %1824 = vmatpush1.bf16.msra.mxu0 0
        %1825 = vmatprep.subr.bf16.mxu0 0
        %1826 = vmatpush1.bf16.msra.mxu0 0
        %1827 = vmatprep.subr.bf16.mxu0 0
        %1828 = vmatpush1.bf16.msra.mxu0 0
        %1829 = vmatprep.mubr.bf16.mxu0 0
        %1830 = vmatmul.mubr.bf16.gmra.mrb[0].mxu0 %v1691
        %v1831 = vpop.f32.mrb[0].mxu0
        %v1832 = vadd.f32 %v1669, %v1831
        %v1833 = vpop.f32.mrb[0].mxu0
        %v1834 = vpop.f32.mrb[0].mxu0
        %v1835 = vpop.f32.mrb[0].mxu0
        %1836 = vdwg.mxu0
        %v1841 = vunpack.c.l.b16 %v1645
        %v1842 = vunpack.c.l.b16 %v1646
        %v1843 = vunpack.c.l.b16 %v1647
        %v1844 = vunpack.c.l.b16 %v1648
        %v1845 = vpack.c.b16 %v1842, %v1841
        %v1846 = vpack.c.b16 %v1844, %v1843
        %1849 = vmatprep.subr.bf16.mxu0 0
        %1850 = vmatpush1.bf16.msra.mxu0 %v1845
        %1851 = vmatprep.subr.bf16.mxu0 0
        %1852 = vmatpush1.bf16.msra.mxu0 %v1846
        %1853 = vmatprep.subr.bf16.mxu0 0
        %1854 = vmatpush1.bf16.msra.mxu0 0
        %1855 = vmatprep.subr.bf16.mxu0 0
        %1856 = vmatpush1.bf16.msra.mxu0 0
        %1857 = vmatprep.subr.bf16.mxu0 0
        %1858 = vmatpush1.bf16.msra.mxu0 0
        %1859 = vmatprep.subr.bf16.mxu0 0
        %1860 = vmatpush1.bf16.msra.mxu0 0
        %1861 = vmatprep.subr.bf16.mxu0 0
        %1862 = vmatpush1.bf16.msra.mxu0 0
        %1863 = vmatprep.subr.bf16.mxu0 0
        %1864 = vmatpush1.bf16.msra.mxu0 0
        %1865 = vmatprep.subr.bf16.mxu0 0
        %1866 = vmatpush1.bf16.msra.mxu0 0
        %1867 = vmatprep.subr.bf16.mxu0 0
        %1868 = vmatpush1.bf16.msra.mxu0 0
        %1869 = vmatprep.subr.bf16.mxu0 0
        %1870 = vmatpush1.bf16.msra.mxu0 0
        %1871 = vmatprep.subr.bf16.mxu0 0
        %1872 = vmatpush1.bf16.msra.mxu0 0
        %1873 = vmatprep.subr.bf16.mxu0 0
        %1874 = vmatpush1.bf16.msra.mxu0 0
        %1875 = vmatprep.subr.bf16.mxu0 0
        %1876 = vmatpush1.bf16.msra.mxu0 0
        %1877 = vmatprep.subr.bf16.mxu0 0
        %1878 = vmatpush1.bf16.msra.mxu0 0
        %1879 = vmatprep.subr.bf16.mxu0 0
        %1880 = vmatpush1.bf16.msra.mxu0 0
        %1881 = vmatprep.mubr.bf16.mxu0 0
        %1882 = vmatmul.mubr.bf16.gmra.mrb[0].mxu0 %v1691
        %v1883 = vpop.f32.mrb[0].mxu0
        %v1884 = vadd.f32 %v1673, %v1883
        %v1885 = vpop.f32.mrb[0].mxu0
        %v1886 = vpop.f32.mrb[0].mxu0
        %v1887 = vpop.f32.mrb[0].mxu0
        %1888 = vdwg.mxu0
        %v1889 = vpack.c.bf16 %v1728, %v1728
        %v1890 = vpack.c.bf16 %v1780, %v1780
        %v1891 = vpack.c.bf16 %v1832, %v1832
        %v1892 = vpack.c.bf16 %v1884, %v1884
        %1894 = vrot.lane.b32.xlu0 %v1889, 120
        %v1895 = vpop.permute.xlu0 %1894
        %v1897 = vsel %vm861, %v1889, 0
        %v1900 = vsel %vm861, %v1895, 0
        %1902 = vmatprep.subr.bf16.mxu0 0
        %1903 = vmatpush1.bf16.xpose.msra.mxu0 %v1900
        %1904 = vmatprep.subr.bf16.mxu0 0
        %1905 = vmatpush1.bf16.xpose.msra.mxu0 0
        %1906 = vmatprep.subr.bf16.mxu0 0
        %1907 = vmatpush1.bf16.xpose.msra.mxu0 0
        %1908 = vmatprep.subr.bf16.mxu0 0
        %1909 = vmatpush1.bf16.xpose.msra.mxu0 0
        %1910 = vmatprep.subr.bf16.mxu0 0
        %1911 = vmatpush1.bf16.xpose.msra.mxu0 0
        %1912 = vmatprep.subr.bf16.mxu0 0
        %1913 = vmatpush1.bf16.xpose.msra.mxu0 0
        %1914 = vmatprep.subr.bf16.mxu0 0
        %1915 = vmatpush1.bf16.xpose.msra.mxu0 0
        %1916 = vmatprep.subr.bf16.mxu0 0
        %1917 = vmatpush1.bf16.xpose.msra.mxu0 0
        %1918 = vmatprep.subr.bf16.mxu0 0
        %1919 = vmatpush1.bf16.xpose.msra.mxu0 0
        %1920 = vmatprep.subr.bf16.mxu0 0
        %1921 = vmatpush1.bf16.xpose.msra.mxu0 0
        %1922 = vmatprep.subr.bf16.mxu0 0
        %1923 = vmatpush1.bf16.xpose.msra.mxu0 0
        %1924 = vmatprep.subr.bf16.mxu0 0
        %1925 = vmatpush1.bf16.xpose.msra.mxu0 0
        %1926 = vmatprep.subr.bf16.mxu0 0
        %1927 = vmatpush1.bf16.xpose.msra.mxu0 0
        %1928 = vmatprep.subr.bf16.mxu0 0
        %1929 = vmatpush1.bf16.xpose.msra.mxu0 0
        %1930 = vmatprep.subr.bf16.mxu0 0
        %1931 = vmatpush1.bf16.xpose.msra.mxu0 0
        %1932 = vmatprep.subr.bf16.mxu0 0
        %1933 = vmatpush1.bf16.xpose.msra.mxu0 0
        %1934 = vmatprep.mubr.bf16.mxu0 0
        %1935 = vmatmul.mubr.bf16.gmra.mrb[0].mxu0 %v1897
        %v1936 = vpop.f32.mrb[0].mxu0
        %v1937 = vadd.f32 0.0, %v1936
        %v1938 = vpop.f32.mrb[0].mxu0
        %v1939 = vpop.f32.mrb[0].mxu0
        %v1940 = vpop.f32.mrb[0].mxu0
        %1941 = vdwg.mxu0
        %1943 = vrot.lane.b32.xlu0 %v1890, 120
        %v1944 = vpop.permute.xlu0 %1943
        %v1946 = vsel %vm861, %v1890, 0
        %v1949 = vsel %vm861, %v1944, 0
        %1951 = vmatprep.subr.bf16.mxu0 0
        %1952 = vmatpush1.bf16.xpose.msra.mxu0 %v1949
        %1953 = vmatprep.subr.bf16.mxu0 0
        %1954 = vmatpush1.bf16.xpose.msra.mxu0 0
        %1955 = vmatprep.subr.bf16.mxu0 0
        %1956 = vmatpush1.bf16.xpose.msra.mxu0 0
        %1957 = vmatprep.subr.bf16.mxu0 0
        %1958 = vmatpush1.bf16.xpose.msra.mxu0 0
        %1959 = vmatprep.subr.bf16.mxu0 0
        %1960 = vmatpush1.bf16.xpose.msra.mxu0 0
        %1961 = vmatprep.subr.bf16.mxu0 0
        %1962 = vmatpush1.bf16.xpose.msra.mxu0 0
        %1963 = vmatprep.subr.bf16.mxu0 0
        %1964 = vmatpush1.bf16.xpose.msra.mxu0 0
        %1965 = vmatprep.subr.bf16.mxu0 0
        %1966 = vmatpush1.bf16.xpose.msra.mxu0 0
        %1967 = vmatprep.subr.bf16.mxu0 0
        %1968 = vmatpush1.bf16.xpose.msra.mxu0 0
        %1969 = vmatprep.subr.bf16.mxu0 0
        %1970 = vmatpush1.bf16.xpose.msra.mxu0 0
        %1971 = vmatprep.subr.bf16.mxu0 0
        %1972 = vmatpush1.bf16.xpose.msra.mxu0 0
        %1973 = vmatprep.subr.bf16.mxu0 0
        %1974 = vmatpush1.bf16.xpose.msra.mxu0 0
        %1975 = vmatprep.subr.bf16.mxu0 0
        %1976 = vmatpush1.bf16.xpose.msra.mxu0 0
        %1977 = vmatprep.subr.bf16.mxu0 0
        %1978 = vmatpush1.bf16.xpose.msra.mxu0 0
        %1979 = vmatprep.subr.bf16.mxu0 0
        %1980 = vmatpush1.bf16.xpose.msra.mxu0 0
        %1981 = vmatprep.subr.bf16.mxu0 0
        %1982 = vmatpush1.bf16.xpose.msra.mxu0 0
        %1983 = vmatprep.mubr.bf16.mxu0 0
        %1984 = vmatmul.mubr.bf16.gmra.mrb[0].mxu0 %v1946
        %v1985 = vpop.f32.mrb[0].mxu0
        %v1986 = vadd.f32 0.0, %v1985
        %v1987 = vpop.f32.mrb[0].mxu0
        %v1988 = vpop.f32.mrb[0].mxu0
        %v1989 = vpop.f32.mrb[0].mxu0
        %1990 = vdwg.mxu0
        %1992 = vrot.lane.b32.xlu0 %v1891, 120
        %v1993 = vpop.permute.xlu0 %1992
        %v1995 = vsel %vm861, %v1891, 0
        %v1998 = vsel %vm861, %v1993, 0
        %2000 = vmatprep.subr.bf16.mxu0 0
        %2001 = vmatpush1.bf16.xpose.msra.mxu0 %v1998
        %2002 = vmatprep.subr.bf16.mxu0 0
        %2003 = vmatpush1.bf16.xpose.msra.mxu0 0
        %2004 = vmatprep.subr.bf16.mxu0 0
        %2005 = vmatpush1.bf16.xpose.msra.mxu0 0
        %2006 = vmatprep.subr.bf16.mxu0 0
        %2007 = vmatpush1.bf16.xpose.msra.mxu0 0
        %2008 = vmatprep.subr.bf16.mxu0 0
        %2009 = vmatpush1.bf16.xpose.msra.mxu0 0
        %2010 = vmatprep.subr.bf16.mxu0 0
        %2011 = vmatpush1.bf16.xpose.msra.mxu0 0
        %2012 = vmatprep.subr.bf16.mxu0 0
        %2013 = vmatpush1.bf16.xpose.msra.mxu0 0
        %2014 = vmatprep.subr.bf16.mxu0 0
        %2015 = vmatpush1.bf16.xpose.msra.mxu0 0
        %2016 = vmatprep.subr.bf16.mxu0 0
        %2017 = vmatpush1.bf16.xpose.msra.mxu0 0
        %2018 = vmatprep.subr.bf16.mxu0 0
        %2019 = vmatpush1.bf16.xpose.msra.mxu0 0
        %2020 = vmatprep.subr.bf16.mxu0 0
        %2021 = vmatpush1.bf16.xpose.msra.mxu0 0
        %2022 = vmatprep.subr.bf16.mxu0 0
        %2023 = vmatpush1.bf16.xpose.msra.mxu0 0
        %2024 = vmatprep.subr.bf16.mxu0 0
        %2025 = vmatpush1.bf16.xpose.msra.mxu0 0
        %2026 = vmatprep.subr.bf16.mxu0 0
        %2027 = vmatpush1.bf16.xpose.msra.mxu0 0
        %2028 = vmatprep.subr.bf16.mxu0 0
        %2029 = vmatpush1.bf16.xpose.msra.mxu0 0
        %2030 = vmatprep.subr.bf16.mxu0 0
        %2031 = vmatpush1.bf16.xpose.msra.mxu0 0
        %2032 = vmatprep.mubr.bf16.mxu0 0
        %2033 = vmatmul.mubr.bf16.gmra.mrb[0].mxu0 %v1995
        %v2034 = vpop.f32.mrb[0].mxu0
        %v2035 = vadd.f32 0.0, %v2034
        %v2036 = vpop.f32.mrb[0].mxu0
        %v2037 = vpop.f32.mrb[0].mxu0
        %v2038 = vpop.f32.mrb[0].mxu0
        %2039 = vdwg.mxu0
        %2041 = vrot.lane.b32.xlu0 %v1892, 120
        %v2042 = vpop.permute.xlu0 %2041
        %v2044 = vsel %vm861, %v1892, 0
        %v2047 = vsel %vm861, %v2042, 0
        %2049 = vmatprep.subr.bf16.mxu0 0
        %2050 = vmatpush1.bf16.xpose.msra.mxu0 %v2047
        %2051 = vmatprep.subr.bf16.mxu0 0
        %2052 = vmatpush1.bf16.xpose.msra.mxu0 0
        %2053 = vmatprep.subr.bf16.mxu0 0
        %2054 = vmatpush1.bf16.xpose.msra.mxu0 0
        %2055 = vmatprep.subr.bf16.mxu0 0
        %2056 = vmatpush1.bf16.xpose.msra.mxu0 0
        %2057 = vmatprep.subr.bf16.mxu0 0
        %2058 = vmatpush1.bf16.xpose.msra.mxu0 0
        %2059 = vmatprep.subr.bf16.mxu0 0
        %2060 = vmatpush1.bf16.xpose.msra.mxu0 0
        %2061 = vmatprep.subr.bf16.mxu0 0
        %2062 = vmatpush1.bf16.xpose.msra.mxu0 0
        %2063 = vmatprep.subr.bf16.mxu0 0
        %2064 = vmatpush1.bf16.xpose.msra.mxu0 0
        %2065 = vmatprep.subr.bf16.mxu0 0
        %2066 = vmatpush1.bf16.xpose.msra.mxu0 0
        %2067 = vmatprep.subr.bf16.mxu0 0
        %2068 = vmatpush1.bf16.xpose.msra.mxu0 0
        %2069 = vmatprep.subr.bf16.mxu0 0
        %2070 = vmatpush1.bf16.xpose.msra.mxu0 0
        %2071 = vmatprep.subr.bf16.mxu0 0
        %2072 = vmatpush1.bf16.xpose.msra.mxu0 0
        %2073 = vmatprep.subr.bf16.mxu0 0
        %2074 = vmatpush1.bf16.xpose.msra.mxu0 0
        %2075 = vmatprep.subr.bf16.mxu0 0
        %2076 = vmatpush1.bf16.xpose.msra.mxu0 0
        %2077 = vmatprep.subr.bf16.mxu0 0
        %2078 = vmatpush1.bf16.xpose.msra.mxu0 0
        %2079 = vmatprep.subr.bf16.mxu0 0
        %2080 = vmatpush1.bf16.xpose.msra.mxu0 0
        %2081 = vmatprep.mubr.bf16.mxu0 0
        %2082 = vmatmul.mubr.bf16.gmra.mrb[0].mxu0 %v2044
        %v2083 = vpop.f32.mrb[0].mxu0
        %v2084 = vadd.f32 0.0, %v2083
        %v2085 = vpop.f32.mrb[0].mxu0
        %v2086 = vpop.f32.mrb[0].mxu0
        %v2087 = vpop.f32.mrb[0].mxu0
        %2088 = vdwg.mxu0
        %v2089 = vmul.f32 %v1937, 0.35355338
        %v2090 = vmul.f32 %v1986, 0.35355338
        %v2091 = vmul.f32 %v2035, 0.35355338
        %v2092 = vmul.f32 %v2084, 0.35355338
        %v2093 = vadd.f32 %v2089, %v1063
        %v2094 = vadd.f32 %v2090, %v1063
        %v2095 = vadd.f32 %v2091, %v1063
        %v2096 = vadd.f32 %v2092, %v1063
        %v2097 = vsel %vm861, %v2093, -inf
        %2098 = vmax.xlane.f32.xlu0 %v2097
        %v2099 = vpop.xlane.xlu0 %2098
        %v2100 = vsel %vm861, %v2094, -inf
        %2101 = vmax.xlane.f32.xlu0 %v2100
        %v2102 = vpop.xlane.xlu0 %2101
        %v2103 = vsel %vm861, %v2095, -inf
        %2104 = vmax.xlane.f32.xlu0 %v2103
        %v2105 = vpop.xlane.xlu0 %2104
        %v2106 = vsel %vm861, %v2096, -inf
        %2107 = vmax.xlane.f32.xlu0 %v2106
        %v2108 = vpop.xlane.xlu0 %2107
        %v2109 = vsub.f32 %v2093, %v2099
        %v2110 = vsub.f32 %v2094, %v2102
        %v2111 = vsub.f32 %v2095, %v2105
        %v2112 = vsub.f32 %v2096, %v2108
        %v2113 = vmul.f32 %v2109, 1.442695
        %v2114 = vpow.pop %v2113
        %v2115 = vmul.f32 %v2110, 1.442695
        %v2116 = vpow.pop %v2115
        %v2117 = vmul.f32 %v2111, 1.442695
        %v2118 = vpow.pop %v2117
        %v2119 = vmul.f32 %v2112, 1.442695
        %v2120 = vpow.pop %v2119
        %v2121 = vsel %vm861, %v2114, 0.0
        %2122 = vadd.xlane.f32.xlu0 %v2121
        %v2123 = vpop.xlane.xlu0 %2122
        %v2124 = vsel %vm861, %v2116, 0.0
        %2125 = vadd.xlane.f32.xlu0 %v2124
        %v2126 = vpop.xlane.xlu0 %2125
        %v2127 = vsel %vm861, %v2118, 0.0
        %2128 = vadd.xlane.f32.xlu0 %v2127
        %v2129 = vpop.xlane.xlu0 %2128
        %v2130 = vsel %vm861, %v2120, 0.0
        %2131 = vadd.xlane.f32.xlu0 %v2130
        %v2132 = vpop.xlane.xlu0 %2131
        %v2133 = vrcp.pop %v2123
        %v2134 = vrcp.pop %v2126
        %v2135 = vrcp.pop %v2129
        %v2136 = vrcp.pop %v2132
        %v2137 = vmul.f32 %v2114, %v2133
        %v2138 = vmul.f32 %v2116, %v2134
        %v2139 = vmul.f32 %v2118, %v2135
        %v2140 = vmul.f32 %v2120, %v2136
        %v2141 = vpack.c.bf16 %v2137, %v2137
        %v2142 = vpack.c.bf16 %v2138, %v2138
        %v2143 = vpack.c.bf16 %v2139, %v2139
        %v2144 = vpack.c.bf16 %v2140, %v2140
        %2145 = vrot.lane.b32.xlu0 %v1889, 112
        %v2146 = vpop.permute.xlu0 %2145
        %v2148 = vsel %vm861, %v2141, 0
        %v2151 = vsel %vm1122, %v2146, 0
        %2153 = vmatprep.subr.bf16.mxu0 0
        %2154 = vmatpush1.bf16.msra.mxu0 %v2151
        %2155 = vmatprep.subr.bf16.mxu0 0
        %2156 = vmatpush1.bf16.msra.mxu0 0
        %2157 = vmatprep.subr.bf16.mxu0 0
        %2158 = vmatpush1.bf16.msra.mxu0 0
        %2159 = vmatprep.subr.bf16.mxu0 0
        %2160 = vmatpush1.bf16.msra.mxu0 0
        %2161 = vmatprep.subr.bf16.mxu0 0
        %2162 = vmatpush1.bf16.msra.mxu0 0
        %2163 = vmatprep.subr.bf16.mxu0 0
        %2164 = vmatpush1.bf16.msra.mxu0 0
        %2165 = vmatprep.subr.bf16.mxu0 0
        %2166 = vmatpush1.bf16.msra.mxu0 0
        %2167 = vmatprep.subr.bf16.mxu0 0
        %2168 = vmatpush1.bf16.msra.mxu0 0
        %2169 = vmatprep.subr.bf16.mxu0 0
        %2170 = vmatpush1.bf16.msra.mxu0 0
        %2171 = vmatprep.subr.bf16.mxu0 0
        %2172 = vmatpush1.bf16.msra.mxu0 0
        %2173 = vmatprep.subr.bf16.mxu0 0
        %2174 = vmatpush1.bf16.msra.mxu0 0
        %2175 = vmatprep.subr.bf16.mxu0 0
        %2176 = vmatpush1.bf16.msra.mxu0 0
        %2177 = vmatprep.subr.bf16.mxu0 0
        %2178 = vmatpush1.bf16.msra.mxu0 0
        %2179 = vmatprep.subr.bf16.mxu0 0
        %2180 = vmatpush1.bf16.msra.mxu0 0
        %2181 = vmatprep.subr.bf16.mxu0 0
        %2182 = vmatpush1.bf16.msra.mxu0 0
        %2183 = vmatprep.subr.bf16.mxu0 0
        %2184 = vmatpush1.bf16.msra.mxu0 0
        %2185 = vmatprep.mubr.bf16.mxu0 0
        %2186 = vmatmul.mubr.bf16.gmra.mrb[0].mxu0 %v2148
        %v2187 = vpop.f32.mrb[0].mxu0
        %v2188 = vadd.f32 0.0, %v2187
        %v2189 = vpop.f32.mrb[0].mxu0
        %v2190 = vpop.f32.mrb[0].mxu0
        %v2191 = vpop.f32.mrb[0].mxu0
        %2192 = vdwg.mxu0
        %2193 = vrot.lane.b32.xlu0 %v1890, 112
        %v2194 = vpop.permute.xlu0 %2193
        %v2196 = vsel %vm861, %v2142, 0
        %v2199 = vsel %vm1122, %v2194, 0
        %2201 = vmatprep.subr.bf16.mxu0 0
        %2202 = vmatpush1.bf16.msra.mxu0 %v2199
        %2203 = vmatprep.subr.bf16.mxu0 0
        %2204 = vmatpush1.bf16.msra.mxu0 0
        %2205 = vmatprep.subr.bf16.mxu0 0
        %2206 = vmatpush1.bf16.msra.mxu0 0
        %2207 = vmatprep.subr.bf16.mxu0 0
        %2208 = vmatpush1.bf16.msra.mxu0 0
        %2209 = vmatprep.subr.bf16.mxu0 0
        %2210 = vmatpush1.bf16.msra.mxu0 0
        %2211 = vmatprep.subr.bf16.mxu0 0
        %2212 = vmatpush1.bf16.msra.mxu0 0
        %2213 = vmatprep.subr.bf16.mxu0 0
        %2214 = vmatpush1.bf16.msra.mxu0 0
        %2215 = vmatprep.subr.bf16.mxu0 0
        %2216 = vmatpush1.bf16.msra.mxu0 0
        %2217 = vmatprep.subr.bf16.mxu0 0
        %2218 = vmatpush1.bf16.msra.mxu0 0
        %2219 = vmatprep.subr.bf16.mxu0 0
        %2220 = vmatpush1.bf16.msra.mxu0 0
        %2221 = vmatprep.subr.bf16.mxu0 0
        %2222 = vmatpush1.bf16.msra.mxu0 0
        %2223 = vmatprep.subr.bf16.mxu0 0
        %2224 = vmatpush1.bf16.msra.mxu0 0
        %2225 = vmatprep.subr.bf16.mxu0 0
        %2226 = vmatpush1.bf16.msra.mxu0 0
        %2227 = vmatprep.subr.bf16.mxu0 0
        %2228 = vmatpush1.bf16.msra.mxu0 0
        %2229 = vmatprep.subr.bf16.mxu0 0
        %2230 = vmatpush1.bf16.msra.mxu0 0
        %2231 = vmatprep.subr.bf16.mxu0 0
        %2232 = vmatpush1.bf16.msra.mxu0 0
        %2233 = vmatprep.mubr.bf16.mxu0 0
        %2234 = vmatmul.mubr.bf16.gmra.mrb[0].mxu0 %v2196
        %v2235 = vpop.f32.mrb[0].mxu0
        %v2236 = vadd.f32 0.0, %v2235
        %v2237 = vpop.f32.mrb[0].mxu0
        %v2238 = vpop.f32.mrb[0].mxu0
        %v2239 = vpop.f32.mrb[0].mxu0
        %2240 = vdwg.mxu0
        %2241 = vrot.lane.b32.xlu0 %v1891, 112
        %v2242 = vpop.permute.xlu0 %2241
        %v2244 = vsel %vm861, %v2143, 0
        %v2247 = vsel %vm1122, %v2242, 0
        %2249 = vmatprep.subr.bf16.mxu0 0
        %2250 = vmatpush1.bf16.msra.mxu0 %v2247
        %2251 = vmatprep.subr.bf16.mxu0 0
        %2252 = vmatpush1.bf16.msra.mxu0 0
        %2253 = vmatprep.subr.bf16.mxu0 0
        %2254 = vmatpush1.bf16.msra.mxu0 0
        %2255 = vmatprep.subr.bf16.mxu0 0
        %2256 = vmatpush1.bf16.msra.mxu0 0
        %2257 = vmatprep.subr.bf16.mxu0 0
        %2258 = vmatpush1.bf16.msra.mxu0 0
        %2259 = vmatprep.subr.bf16.mxu0 0
        %2260 = vmatpush1.bf16.msra.mxu0 0
        %2261 = vmatprep.subr.bf16.mxu0 0
        %2262 = vmatpush1.bf16.msra.mxu0 0
        %2263 = vmatprep.subr.bf16.mxu0 0
        %2264 = vmatpush1.bf16.msra.mxu0 0
        %2265 = vmatprep.subr.bf16.mxu0 0
        %2266 = vmatpush1.bf16.msra.mxu0 0
        %2267 = vmatprep.subr.bf16.mxu0 0
        %2268 = vmatpush1.bf16.msra.mxu0 0
        %2269 = vmatprep.subr.bf16.mxu0 0
        %2270 = vmatpush1.bf16.msra.mxu0 0
        %2271 = vmatprep.subr.bf16.mxu0 0
        %2272 = vmatpush1.bf16.msra.mxu0 0
        %2273 = vmatprep.subr.bf16.mxu0 0
        %2274 = vmatpush1.bf16.msra.mxu0 0
        %2275 = vmatprep.subr.bf16.mxu0 0
        %2276 = vmatpush1.bf16.msra.mxu0 0
        %2277 = vmatprep.subr.bf16.mxu0 0
        %2278 = vmatpush1.bf16.msra.mxu0 0
        %2279 = vmatprep.subr.bf16.mxu0 0
        %2280 = vmatpush1.bf16.msra.mxu0 0
        %2281 = vmatprep.mubr.bf16.mxu0 0
        %2282 = vmatmul.mubr.bf16.gmra.mrb[0].mxu0 %v2244
        %v2283 = vpop.f32.mrb[0].mxu0
        %v2284 = vadd.f32 0.0, %v2283
        %v2285 = vpop.f32.mrb[0].mxu0
        %v2286 = vpop.f32.mrb[0].mxu0
        %v2287 = vpop.f32.mrb[0].mxu0
        %2288 = vdwg.mxu0
        %2289 = vrot.lane.b32.xlu0 %v1892, 112
        %v2290 = vpop.permute.xlu0 %2289
        %v2292 = vsel %vm861, %v2144, 0
        %v2295 = vsel %vm1122, %v2290, 0
        %2297 = vmatprep.subr.bf16.mxu0 0
        %2298 = vmatpush1.bf16.msra.mxu0 %v2295
        %2299 = vmatprep.subr.bf16.mxu0 0
        %2300 = vmatpush1.bf16.msra.mxu0 0
        %2301 = vmatprep.subr.bf16.mxu0 0
        %2302 = vmatpush1.bf16.msra.mxu0 0
        %2303 = vmatprep.subr.bf16.mxu0 0
        %2304 = vmatpush1.bf16.msra.mxu0 0
        %2305 = vmatprep.subr.bf16.mxu0 0
        %2306 = vmatpush1.bf16.msra.mxu0 0
        %2307 = vmatprep.subr.bf16.mxu0 0
        %2308 = vmatpush1.bf16.msra.mxu0 0
        %2309 = vmatprep.subr.bf16.mxu0 0
        %2310 = vmatpush1.bf16.msra.mxu0 0
        %2311 = vmatprep.subr.bf16.mxu0 0
        %2312 = vmatpush1.bf16.msra.mxu0 0
        %2313 = vmatprep.subr.bf16.mxu0 0
        %2314 = vmatpush1.bf16.msra.mxu0 0
        %2315 = vmatprep.subr.bf16.mxu0 0
        %2316 = vmatpush1.bf16.msra.mxu0 0
        %2317 = vmatprep.subr.bf16.mxu0 0
        %2318 = vmatpush1.bf16.msra.mxu0 0
        %2319 = vmatprep.subr.bf16.mxu0 0
        %2320 = vmatpush1.bf16.msra.mxu0 0
        %2321 = vmatprep.subr.bf16.mxu0 0
        %2322 = vmatpush1.bf16.msra.mxu0 0
        %2323 = vmatprep.subr.bf16.mxu0 0
        %2324 = vmatpush1.bf16.msra.mxu0 0
        %2325 = vmatprep.subr.bf16.mxu0 0
        %2326 = vmatpush1.bf16.msra.mxu0 0
        %2327 = vmatprep.subr.bf16.mxu0 0
        %2328 = vmatpush1.bf16.msra.mxu0 0
        %2329 = vmatprep.mubr.bf16.mxu0 0
        %2330 = vmatmul.mubr.bf16.gmra.mrb[0].mxu0 %v2292
        %v2331 = vpop.f32.mrb[0].mxu0
        %v2332 = vadd.f32 0.0, %v2331
        %v2333 = vpop.f32.mrb[0].mxu0
        %v2334 = vpop.f32.mrb[0].mxu0
        %v2335 = vpop.f32.mrb[0].mxu0
        %2336 = vdwg.mxu0
        %2338 = vrot.lane.b32.xlu0 %v2236, 8
        %v2339 = vpop.permute.xlu0 %2338
        %2342 = vrot.lane.b32.xlu0 %v2284, 16
        %v2343 = vpop.permute.xlu0 %2342
        %2346 = vrot.lane.b32.xlu0 %v2332, 24
        %v2347 = vpop.permute.xlu0 %2346
        %v2349 = vsel %vm861, %v2188, %v2339
        %v2350 = vsel %vm1323, %v2349, %v2343
        %v2351 = vsel %vm1325, %v2350, %v2347
        %v2352 = vpack.c.bf16 %v2351, %v2351
        %s2353 = scalar_lea.vmem %s5, 16
        %v2354 = vld [vmem:[%s2353] sm:$0xf]
        %v2355 = vld [vmem:[%s2353 + $0x4] sm:$0xf]
        %v2356 = vld [vmem:[%s2353 + $0x8] sm:$0xf]
        %v2357 = vld [vmem:[%s2353 + $0xc] sm:$0xf]
        %s2358 = scalar_lea.vmem %s6, 1
        %v2359 = vld [vmem:[%s2358] sm:$0x1]
        %v2361 = vlaneseq
        %v2362 = vshrl.u32 %v2361, 7
        %v2363 = vsub.s32 0, %v2362
        %v2364 = vrot.slane %v2359, %v2363
        %v2370 = vunpack.c.l.b16 %v2354
        %v2371 = vunpack.c.l.b16 %v2355
        %v2372 = vunpack.c.l.b16 %v2356
        %v2373 = vunpack.c.l.b16 %v2357
        %v2374 = vpack.c.b16 %v2371, %v2370
        %v2375 = vpack.c.b16 %v2373, %v2372
        %v2379 = vsel %vm572, %v2352, 0
        %2381 = vmatprep.subr.bf16.mxu0 0
        %2382 = vmatpush1.bf16.msra.mxu0 %v2374
        %2383 = vmatprep.subr.bf16.mxu0 0
        %2384 = vmatpush1.bf16.msra.mxu0 %v2375
        %2385 = vmatprep.subr.bf16.mxu0 0
        %2386 = vmatpush1.bf16.msra.mxu0 0
        %2387 = vmatprep.subr.bf16.mxu0 0
        %2388 = vmatpush1.bf16.msra.mxu0 0
        %2389 = vmatprep.subr.bf16.mxu0 0
        %2390 = vmatpush1.bf16.msra.mxu0 0
        %2391 = vmatprep.subr.bf16.mxu0 0
        %2392 = vmatpush1.bf16.msra.mxu0 0
        %2393 = vmatprep.subr.bf16.mxu0 0
        %2394 = vmatpush1.bf16.msra.mxu0 0
        %2395 = vmatprep.subr.bf16.mxu0 0
        %2396 = vmatpush1.bf16.msra.mxu0 0
        %2397 = vmatprep.subr.bf16.mxu0 0
        %2398 = vmatpush1.bf16.msra.mxu0 0
        %2399 = vmatprep.subr.bf16.mxu0 0
        %2400 = vmatpush1.bf16.msra.mxu0 0
        %2401 = vmatprep.subr.bf16.mxu0 0
        %2402 = vmatpush1.bf16.msra.mxu0 0
        %2403 = vmatprep.subr.bf16.mxu0 0
        %2404 = vmatpush1.bf16.msra.mxu0 0
        %2405 = vmatprep.subr.bf16.mxu0 0
        %2406 = vmatpush1.bf16.msra.mxu0 0
        %2407 = vmatprep.subr.bf16.mxu0 0
        %2408 = vmatpush1.bf16.msra.mxu0 0
        %2409 = vmatprep.subr.bf16.mxu0 0
        %2410 = vmatpush1.bf16.msra.mxu0 0
        %2411 = vmatprep.subr.bf16.mxu0 0
        %2412 = vmatpush1.bf16.msra.mxu0 0
        %2413 = vmatprep.mubr.bf16.mxu0 0
        %2414 = vmatmul.mubr.bf16.gmra.mrb[0].mxu0 %v2379
        %v2415 = vpop.f32.mrb[0].mxu0
        %v2416 = vadd.f32 %v2364, %v2415
        %v2417 = vpop.f32.mrb[0].mxu0
        %v2418 = vpop.f32.mrb[0].mxu0
        %v2419 = vpop.f32.mrb[0].mxu0
        %2420 = vdwg.mxu0
        %s2421 = scalar_lea.vmem %s11, 4
        %v2422 = vld [vmem:[%s2421] sm:$0xf]
        %v2423 = vadd.f32 %v2416, %v1630
        %v2424 = vsel %vm572, %v2423, 0.0
        %2425 = vadd.xlane.f32.xlu0 %v2424
        %v2426 = vpop.xlane.xlu0 %2425
        %v2427 = vmul.f32 %v2426, %v576
        %v2428 = vsub.f32 %v2423, %v2427
        %v2429 = vmul.f32 %v2428, %v2428
        %v2430 = vsel %vm572, %v2429, 0.0
        %2431 = vadd.xlane.f32.xlu0 %v2430
        %v2432 = vpop.xlane.xlu0 %2431
        %v2433 = vmul.f32 %v2432, %v576
        %v2434 = vadd.f32 %v2433, 1e-12
        %v2435 = vrsqrt.pop %v2434
        %v2436 = vmul.f32 %v2428, %v2435
        %v2437 = vlaneseq
        %v2438 = vshrl.u32 %v2437, 7
        %v2439 = vsub.s32 0, %v2438
        %v2440 = vrot.slane %v2422, %v2439
        %v2441 = vmul.f32 %v2436, %v2440
        %v2442 = vlaneseq
        %v2443 = vshrl.u32 %v2442, 7
        %v2444 = vsub.s32 1, %v2443
        %v2445 = vrot.slane %v2422, %v2444
        %v2446 = vadd.f32 %v2441, %v2445
        %v2447 = vpack.c.bf16 %v2446, %v2446
        %s2448 = scalar_lea.vmem %s7, 16
        %v2449 = vld [vmem:[%s2448] sm:$0xf]
        %v2450 = vld [vmem:[%s2448 + $0x4] sm:$0xf]
        %v2451 = vld [vmem:[%s2448 + $0x8] sm:$0xf]
        %v2452 = vld [vmem:[%s2448 + $0xc] sm:$0xf]
        %s2453 = scalar_lea.vmem %s8, 1
        %v2454 = vld [vmem:[%s2453] sm:$0x1]
        %v2456 = vlaneseq
        %v2457 = vshrl.u32 %v2456, 7
        %v2458 = vsub.s32 0, %v2457
        %v2459 = vrot.slane %v2454, %v2458
        %v2465 = vunpack.c.l.b16 %v2449
        %v2466 = vunpack.c.l.b16 %v2450
        %v2467 = vunpack.c.l.b16 %v2451
        %v2468 = vunpack.c.l.b16 %v2452
        %v2469 = vpack.c.b16 %v2466, %v2465
        %v2470 = vpack.c.b16 %v2468, %v2467
        %v2474 = vsel %vm572, %v2447, 0
        %2476 = vmatprep.subr.bf16.mxu0 0
        %2477 = vmatpush1.bf16.msra.mxu0 %v2469
        %2478 = vmatprep.subr.bf16.mxu0 0
        %2479 = vmatpush1.bf16.msra.mxu0 %v2470
        %2480 = vmatprep.subr.bf16.mxu0 0
        %2481 = vmatpush1.bf16.msra.mxu0 0
        %2482 = vmatprep.subr.bf16.mxu0 0
        %2483 = vmatpush1.bf16.msra.mxu0 0
        %2484 = vmatprep.subr.bf16.mxu0 0
        %2485 = vmatpush1.bf16.msra.mxu0 0
        %2486 = vmatprep.subr.bf16.mxu0 0
        %2487 = vmatpush1.bf16.msra.mxu0 0
        %2488 = vmatprep.subr.bf16.mxu0 0
        %2489 = vmatpush1.bf16.msra.mxu0 0
        %2490 = vmatprep.subr.bf16.mxu0 0
        %2491 = vmatpush1.bf16.msra.mxu0 0
        %2492 = vmatprep.subr.bf16.mxu0 0
        %2493 = vmatpush1.bf16.msra.mxu0 0
        %2494 = vmatprep.subr.bf16.mxu0 0
        %2495 = vmatpush1.bf16.msra.mxu0 0
        %2496 = vmatprep.subr.bf16.mxu0 0
        %2497 = vmatpush1.bf16.msra.mxu0 0
        %2498 = vmatprep.subr.bf16.mxu0 0
        %2499 = vmatpush1.bf16.msra.mxu0 0
        %2500 = vmatprep.subr.bf16.mxu0 0
        %2501 = vmatpush1.bf16.msra.mxu0 0
        %2502 = vmatprep.subr.bf16.mxu0 0
        %2503 = vmatpush1.bf16.msra.mxu0 0
        %2504 = vmatprep.subr.bf16.mxu0 0
        %2505 = vmatpush1.bf16.msra.mxu0 0
        %2506 = vmatprep.subr.bf16.mxu0 0
        %2507 = vmatpush1.bf16.msra.mxu0 0
        %2508 = vmatprep.mubr.bf16.mxu0 0
        %2509 = vmatmul.mubr.bf16.gmra.mrb[0].mxu0 %v2474
        %v2510 = vpop.f32.mrb[0].mxu0
        %v2511 = vadd.f32 %v2459, %v2510
        %v2512 = vpop.f32.mrb[0].mxu0
        %v2513 = vpop.f32.mrb[0].mxu0
        %v2514 = vpop.f32.mrb[0].mxu0
        %2515 = vdwg.mxu0
        %v2516 = vmul.f32 %v2511, 0.5
        %v2517 = vmul.f32 %v2511, 0.044715
        %v2518 = vmul.f32 %v2517, %v2511
        %v2519 = vmul.f32 %v2518, %v2511
        %v2520 = vadd.f32 %v2511, %v2519
        %v2521 = vmul.f32 %v2520, 0.7978846
        %v2522 = vtanh.pop %v2521
        %v2523 = vadd.f32 %v2522, 1.0
        %v2524 = vmul.f32 %v2516, %v2523
        %v2525 = vpack.c.bf16 %v2524, %v2524
        %s2526 = scalar_lea.vmem %s9, 64
        %v2527 = vld [vmem:[%s2526] sm:$0xf]
        %v2528 = vld [vmem:[%s2526 + $0x4] sm:$0xf]
        %v2529 = vld [vmem:[%s2526 + $0x8] sm:$0xf]
        %v2530 = vld [vmem:[%s2526 + $0xc] sm:$0xf]
        %v2531 = vld [vmem:[%s2526 + $0x10] sm:$0xf]
        %v2532 = vld [vmem:[%s2526 + $0x14] sm:$0xf]
        %v2533 = vld [vmem:[%s2526 + $0x18] sm:$0xf]
        %v2534 = vld [vmem:[%s2526 + $0x1c] sm:$0xf]
        %v2535 = vld [vmem:[%s2526 + $0x20] sm:$0xf]
        %v2536 = vld [vmem:[%s2526 + $0x24] sm:$0xf]
        %v2537 = vld [vmem:[%s2526 + $0x28] sm:$0xf]
        %v2538 = vld [vmem:[%s2526 + $0x2c] sm:$0xf]
        %v2539 = vld [vmem:[%s2526 + $0x30] sm:$0xf]
        %v2540 = vld [vmem:[%s2526 + $0x34] sm:$0xf]
        %v2541 = vld [vmem:[%s2526 + $0x38] sm:$0xf]
        %v2542 = vld [vmem:[%s2526 + $0x3c] sm:$0xf]
        %s2543 = scalar_lea.vmem %s10, 1
        %v2544 = vld [vmem:[%s2543] sm:$0x1]
        %v2546 = vlaneseq
        %v2547 = vshrl.u32 %v2546, 7
        %v2548 = vsub.s32 0, %v2547
        %v2549 = vrot.slane %v2544, %v2548
        %v2567 = vunpack.c.l.b16 %v2527
        %v2568 = vunpack.c.l.b16 %v2528
        %v2569 = vunpack.c.l.b16 %v2529
        %v2570 = vunpack.c.l.b16 %v2530
        %v2571 = vunpack.c.l.b16 %v2531
        %v2572 = vunpack.c.l.b16 %v2532
        %v2573 = vunpack.c.l.b16 %v2533
        %v2574 = vunpack.c.l.b16 %v2534
        %v2575 = vunpack.c.l.b16 %v2535
        %v2576 = vunpack.c.l.b16 %v2536
        %v2577 = vunpack.c.l.b16 %v2537
        %v2578 = vunpack.c.l.b16 %v2538
        %v2579 = vunpack.c.l.b16 %v2539
        %v2580 = vunpack.c.l.b16 %v2540
        %v2581 = vunpack.c.l.b16 %v2541
        %v2582 = vunpack.c.l.b16 %v2542
        %v2583 = vpack.c.b16 %v2568, %v2567
        %v2584 = vpack.c.b16 %v2570, %v2569
        %v2585 = vpack.c.b16 %v2572, %v2571
        %v2586 = vpack.c.b16 %v2574, %v2573
        %v2587 = vpack.c.b16 %v2576, %v2575
        %v2588 = vpack.c.b16 %v2578, %v2577
        %v2589 = vpack.c.b16 %v2580, %v2579
        %v2590 = vpack.c.b16 %v2582, %v2581
        %2599 = vmatprep.subr.bf16.mxu0 0
        %2600 = vmatpush1.bf16.msra.mxu0 %v2583
        %2601 = vmatprep.subr.bf16.mxu0 0
        %2602 = vmatpush1.bf16.msra.mxu0 %v2584
        %2603 = vmatprep.subr.bf16.mxu0 0
        %2604 = vmatpush1.bf16.msra.mxu0 %v2585
        %2605 = vmatprep.subr.bf16.mxu0 0
        %2606 = vmatpush1.bf16.msra.mxu0 %v2586
        %2607 = vmatprep.subr.bf16.mxu0 0
        %2608 = vmatpush1.bf16.msra.mxu0 %v2587
        %2609 = vmatprep.subr.bf16.mxu0 0
        %2610 = vmatpush1.bf16.msra.mxu0 %v2588
        %2611 = vmatprep.subr.bf16.mxu0 0
        %2612 = vmatpush1.bf16.msra.mxu0 %v2589
        %2613 = vmatprep.subr.bf16.mxu0 0
        %2614 = vmatpush1.bf16.msra.mxu0 %v2590
        %2615 = vmatprep.subr.bf16.mxu0 0
        %2616 = vmatpush1.bf16.msra.mxu0 0
        %2617 = vmatprep.subr.bf16.mxu0 0
        %2618 = vmatpush1.bf16.msra.mxu0 0
        %2619 = vmatprep.subr.bf16.mxu0 0
        %2620 = vmatpush1.bf16.msra.mxu0 0
        %2621 = vmatprep.subr.bf16.mxu0 0
        %2622 = vmatpush1.bf16.msra.mxu0 0
        %2623 = vmatprep.subr.bf16.mxu0 0
        %2624 = vmatpush1.bf16.msra.mxu0 0
        %2625 = vmatprep.subr.bf16.mxu0 0
        %2626 = vmatpush1.bf16.msra.mxu0 0
        %2627 = vmatprep.subr.bf16.mxu0 0
        %2628 = vmatpush1.bf16.msra.mxu0 0
        %2629 = vmatprep.subr.bf16.mxu0 0
        %2630 = vmatpush1.bf16.msra.mxu0 0
        %2631 = vmatprep.mubr.bf16.mxu0 0
        %2632 = vmatmul.mubr.bf16.gmra.mrb[0].mxu0 %v2525
        %v2633 = vpop.f32.mrb[0].mxu0
        %v2634 = vadd.f32 %v2549, %v2633
        %v2635 = vpop.f32.mrb[0].mxu0
        %v2636 = vpop.f32.mrb[0].mxu0
        %v2637 = vpop.f32.mrb[0].mxu0
        %2638 = vdwg.mxu0
        %v2639 = vadd.f32 %v2634, %v2446
        %v2640 = vsel %vm572, %v2639, 0.0
        %2641 = vadd.xlane.f32.xlu0 %v2640
        %v2642 = vpop.xlane.xlu0 %2641
        %v2643 = vmul.f32 %v2642, %v576
        %v2644 = vsub.f32 %v2639, %v2643
        %v2645 = vmul.f32 %v2644, %v2644
        %v2646 = vsel %vm572, %v2645, 0.0
        %2647 = vadd.xlane.f32.xlu0 %v2646
        %v2648 = vpop.xlane.xlu0 %2647
        %v2649 = vmul.f32 %v2648, %v576
        %v2650 = vadd.f32 %v2649, 1e-12
        %v2651 = vrsqrt.pop %v2650
        %v2652 = vmul.f32 %v2644, %v2651
        %v2653 = vlaneseq
        %v2654 = vshrl.u32 %v2653, 7
        %v2655 = vsub.s32 2, %v2654
        %v2656 = vrot.slane %v2422, %v2655
        %v2657 = vmul.f32 %v2652, %v2656
        %v2658 = vlaneseq
        %v2659 = vshrl.u32 %v2658, 7
        %v2660 = vsub.s32 3, %v2659
        %v2661 = vrot.slane %v2422, %v2660
        %v2662 = vadd.f32 %v2657, %v2661
        %v2663 = vld [vmem:[%s12] sm:$0xff]
        %v2664 = vld [vmem:[%s12 + $0x8] sm:$0xff]
        %v2665 = vld [vmem:[%s12 + $0x10] sm:$0xff]
        %v2666 = vld [vmem:[%s12 + $0x18] sm:$0xff]
        %v2667 = vld [vmem:[%s13] sm:$0x1]
        %v2669 = vsel %vm572, %v2662, 0
        %2671 = vmatprep.subr.mxu0 0.0
        %2672 = vmatpush1.msra.mxu0 %v2663
        %2673 = vmatprep.subr.mxu0 0.0
        %2674 = vmatpush1.msra.mxu0 %v2664
        %2675 = vmatprep.subr.mxu0 0.0
        %2676 = vmatpush1.msra.mxu0 %v2665
        %2677 = vmatprep.subr.mxu0 0.0
        %2678 = vmatpush1.msra.mxu0 %v2666
        %2679 = vmatprep.subr.mxu0 0.0
        %2680 = vmatpush1.msra.mxu0 0.0
        %2681 = vmatprep.subr.mxu0 0.0
        %2682 = vmatpush1.msra.mxu0 0.0
        %2683 = vmatprep.subr.mxu0 0.0
        %2684 = vmatpush1.msra.mxu0 0.0
        %2685 = vmatprep.subr.mxu0 0.0
        %2686 = vmatpush1.msra.mxu0 0.0
        %2687 = vmatprep.subr.mxu0 0.0
        %2688 = vmatpush1.msra.mxu0 0.0
        %2689 = vmatprep.subr.mxu0 0.0
        %2690 = vmatpush1.msra.mxu0 0.0
        %2691 = vmatprep.subr.mxu0 0.0
        %2692 = vmatpush1.msra.mxu0 0.0
        %2693 = vmatprep.subr.mxu0 0.0
        %2694 = vmatpush1.msra.mxu0 0.0
        %2695 = vmatprep.subr.mxu0 0.0
        %2696 = vmatpush1.msra.mxu0 0.0
        %2697 = vmatprep.subr.mxu0 0.0
        %2698 = vmatpush1.msra.mxu0 0.0
        %2699 = vmatprep.subr.mxu0 0.0
        %2700 = vmatpush1.msra.mxu0 0.0
        %2701 = vmatprep.subr.mxu0 0.0
        %2702 = vmatpush1.msra.mxu0 0.0
        %2703 = vmatprep.subr.mxu0 0.0
        %2704 = vmatpush1.msra.mxu0 0.0
        %2705 = vmatprep.subr.mxu0 0.0
        %2706 = vmatpush1.msra.mxu0 0.0
        %2707 = vmatprep.subr.mxu0 0.0
        %2708 = vmatpush1.msra.mxu0 0.0
        %2709 = vmatprep.subr.mxu0 0.0
        %2710 = vmatpush1.msra.mxu0 0.0
        %2711 = vmatprep.subr.mxu0 0.0
        %2712 = vmatpush1.msra.mxu0 0.0
        %2713 = vmatprep.subr.mxu0 0.0
        %2714 = vmatpush1.msra.mxu0 0.0
        %2715 = vmatprep.subr.mxu0 0.0
        %2716 = vmatpush1.msra.mxu0 0.0
        %2717 = vmatprep.subr.mxu0 0.0
        %2718 = vmatpush1.msra.mxu0 0.0
        %2719 = vmatprep.subr.mxu0 0.0
        %2720 = vmatpush1.msra.mxu0 0.0
        %2721 = vmatprep.subr.mxu0 0.0
        %2722 = vmatpush1.msra.mxu0 0.0
        %2723 = vmatprep.subr.mxu0 0.0
        %2724 = vmatpush1.msra.mxu0 0.0
        %2725 = vmatprep.subr.mxu0 0.0
        %2726 = vmatpush1.msra.mxu0 0.0
        %2727 = vmatprep.subr.mxu0 0.0
        %2728 = vmatpush1.msra.mxu0 0.0
        %2729 = vmatprep.subr.mxu0 0.0
        %2730 = vmatpush1.msra.mxu0 0.0
        %2731 = vmatprep.subr.mxu0 0.0
        %2732 = vmatpush1.msra.mxu0 0.0
        %2733 = vmatprep.subr.mxu0 0.0
        %2734 = vmatpush1.msra.mxu0 0.0
        %2735 = vmatprep.mubr.f32.mxu0 0.0
        %2736 = vmatmul.mubr.f32.gmra.mrb[0].mxu0 %v2669
        %v2737 = vpop.f32.mrb[0].mxu0
        %v2738 = vadd.f32 %v2667, %v2737
        %v2739 = vpop.f32.mrb[0].mxu0
        %2740 = vdwg.mxu0
        %v2741 = vtanh.pop %v2738
        %v2742 = vld [vmem:[%s14] sm:$0x1]
        %v2743 = vmul.f32 %v2741, %v2742
        %vm2744 = vcmask 253952
        %v2745 = vsel %vm2744, %v2743, 0.0
        %2746 = vadd.xlane.f32.xlu0 %v2745
        %v2747 = vpop.xlane.xlu0 %2746
        %v2748 = vld [vmem:[#allocation2] sm:$0x1]
        %v2749 = vadd.f32 %v2747, %v2748
        %v2750 = vsub.f32 0.0, %v2749
        %v2751 = vmul.f32 %v2750, 1.442695
        %v2752 = vpow.pop %v2751
        %v2753 = vadd.f32 %v2752, 1.0
        %v2754 = vrcp.pop %v2753
        %v2755 = vmul.f32 1.0, %v2754
        %2756 = vst.msk [vmem:[%s557] sm:$0x1] %vm2744, %v2741
        %2758 = vset.pattern.permute.xlu0 0
        %2759 = vperm.xlu0 %2758, %v2755
        %v2760 = vpop.permute.xlu0 %2759
        %2762 = vst.msk [vmem:[%s567] sm:$0x1] %vm2744, %v2760
        %p2763 = scmp.lt.s32.totalorder %s34, 1
        %s2764 = scalar_select %p2763, %s34, 1
        %s2765 = scalar_lea.vmem %s16, %s2764
        %s2766 = sand.u32 %s414, 1
        %s2767 = scalar_lea.sflag [#allocation4], %s2766
        %s2768 = sand.u32 %s414, 1
        %s2769 = scalar_lea.vmem [#allocation3], %s2768
        // Predicated region
        $region85: #{bert_binary_classifier_forward.1} parent=83 // pred_check
          %p2770 = pneg %p398
        $region86: #{bert_binary_classifier_forward.1} parent=83 // pred_check_branch
          %2772 = sbr.rel (%p2770) target = $region88
        $region87: #{bert_binary_classifier_forward.1} parent=83 // pred_region
          _
        $region88: #{bert_binary_classifier_forward.1} parent=83 // pred_fallthru
          _
        // Predicated region
        $region89: #{bert_binary_classifier_forward.1} parent=83 // pred_check
          %p2773 = pneg %p424
        $region90: #{bert_binary_classifier_forward.1} parent=83 // pred_check_branch
          %2775 = sbr.rel (%p2773) target = $region92
        $region91: #{bert_binary_classifier_forward.1} parent=83 // pred_region
          %s2777 = ssub.s32 16, 16
          %2778 = vsyncadd %s2767, %s2777
          %s2779 = smul.addr %s34, 16
          %s2780 = scalar_lea.hbm %s17, %s2779
          %s2782 = sshll.u32 %s2769, 4
          %s2783 = int_to_ptr.vmem [resolvable:$true] %s2782
          %2785 = dma.vmem_to_hbm [thread:$0]  %s2783, 16, %s2780, %s2767
        $region92: #{bert_binary_classifier_forward.1} parent=83 // pred_fallthru
          _
      $region84: #{bert_binary_classifier_forward.1} parent=5 // pred_fallthru
        _
      %p2786 = scmp.le.s32.totalorder 2, %s29
      // Predicated region
      $region93: #{bert_binary_classifier_forward.1} parent=5 // pred_check
        %p2787 = pneg %p2786
      $region94: #{bert_binary_classifier_forward.1} parent=5 // pred_check_branch
        %2789 = sbr.rel (%p2787) target = $region96
      $region95: #{bert_binary_classifier_forward.1} parent=5 // pred_region
        %s2790 = ssub.s32 %s29, 2
        // Predicated region
        $region97: #{bert_binary_classifier_forward.1} parent=95 // pred_check
          %p2791 = pneg %p404
        $region98: #{bert_binary_classifier_forward.1} parent=95 // pred_check_branch
          %2793 = sbr.rel (%p2791) target = $region100
        $region99: #{bert_binary_classifier_forward.1} parent=95 // pred_region
          %p2794 = scmp.lt.s32.totalorder %s35, 1
          %s2795 = scalar_select %p2794, %s35, 1
          %s2796 = scalar_lea.vmem %s16, %s2795
        $region100: #{bert_binary_classifier_forward.1} parent=95 // pred_fallthru
          _
        // Predicated region
        $region101: #{bert_binary_classifier_forward.1} parent=95 // pred_check
          %p2797 = pneg %p430
        $region102: #{bert_binary_classifier_forward.1} parent=95 // pred_check_branch
          %2799 = sbr.rel (%p2797) target = $region104
        $region103: #{bert_binary_classifier_forward.1} parent=95 // pred_region
          %s2800 = sand.u32 %s415, 1
          %s2801 = scalar_lea.sflag [#allocation4], %s2800
          %s2802 = sand.u32 %s415, 1
          %s2803 = scalar_lea.vmem [#allocation3], %s2802
          %2804 = dma.done %s2801, 16
        $region104: #{bert_binary_classifier_forward.1} parent=95 // pred_fallthru
          _
      $region96: #{bert_binary_classifier_forward.1} parent=5 // pred_fallthru
        _
    $region6: #{bert_binary_classifier_forward.1} parent=1 // loop_footer
      %s33 = sadd.s32 1, %s29
    $region7: #{bert_binary_classifier_forward.1} parent=1 // loop_footer_branch
      %28 = sbr.rel target = $region3
    $region8: #{bert_binary_classifier_forward.1} parent=1 // loop_exit
      _
    %2805 = vsyncpa [#allocation4], 1
    %s2806 = scalar_lea.sflag [#allocation4], 1
    %2807 = vsyncpa %s2806, 1

</llo_original>
